<compile_context>
chip_gen: v7x
topology: tpu7x:2x2x1
jax: 0.10.0
libtpu: 0.0.40
codegen_flags: <defaults>
</compile_context>

<pallas_src>
import functools
import math

import jax
import jax.numpy as jnp
import numpy as np
from jax.experimental import pallas as pl
from jax.experimental.pallas import tpu as pltpu

_TQ_CAP = 256    # q-tile (lane width of the accumulator / output blocks)
_TK_CAP = 1024   # kv-tile; when padded T <= this, k/v are fully VMEM-resident


def _plan_tiles(T):
    """Pick (padded_T, tq, tk).

    Lane-axis block dims must be a multiple of 128 or span the whole (padded)
    axis, so short sequences use one full-extent tile and longer ones are
    padded up to a multiple of 256.  Never falls back to a full-T tile for
    large T (keeps VMEM bounded; v7x has only 64 MiB).
    """
    if T <= _TQ_CAP:
        return T, T, T
    Tp = -(-T // _TQ_CAP) * _TQ_CAP          # round up to a multiple of 256
    tq = _TQ_CAP
    if Tp <= _TK_CAP:
        tk = Tp
    else:
        tk = next(c for c in (1024, 512, 256) if Tp % c == 0)
    return Tp, tq, tk


def _plan_group(B, Tp, tq, tk):
    """Batch-heads fused per grid step (>1 only when one tile spans all of T)."""
    if tq != Tp or tk != Tp:
        return 1
    target = max(1, 512 // max(Tp, 1))
    for g in range(min(B, target), 0, -1):
        if B % g == 0:
            return g
    return 1


def _attn_kernel(scale_sq, valid_len, q_ref, k_ref, v_ref, o_ref,
                 m_sc, l_sc, acc_sc):
    """One (batch-head group, q-tile, kv-tile) step of online-softmax attention.

    Block layouts (head dim C on sublanes, sequence positions on lanes):
      q_ref : (G, C, tq)    k_ref / v_ref : (G, C, tk)    o_ref : (G, C, tq)
    Scratch (persists across the innermost "arbitrary" kv axis):
      m_sc / l_sc : (G, 1, tq) running max / denominator (lane vectors)
      acc_sc      : (G, C, tq) f32 output accumulator (lane-dense stores)
    """
    kv = pl.program_id(2)
    n_groups = q_ref.shape[0]
    tk = k_ref.shape[2]

    @pl.when(kv == 0)
    def _init():
        m_sc[...] = jnp.full_like(m_sc, -jnp.inf)
        l_sc[...] = jnp.zeros_like(l_sc)
        acc_sc[...] = jnp.zeros_like(acc_sc)

    if valid_len is not None:
        kv_pos = jax.lax.broadcasted_iota(jnp.int32, (tk, 1), 0) + kv * tk
        kv_mask = kv_pos < valid_len                       # (tk, 1)

    for g in range(n_groups):                 # static unroll; dots stay 2-D
        qs = q_ref[g] * scale_sq                           # (C, tq), input dtype
        # s[k, q] = sum_c k[c, k] * q[c, q]  — transposed-LHS MXU matmul.
        s = jax.lax.dot_general(k_ref[g], qs, (((0,), (0,)), ((), ())),
                                preferred_element_type=jnp.float32)   # (tk, tq)
        if valid_len is not None:
            s = jnp.where(kv_mask, s, -1e30)               # mask padded kv rows

        m_prev = m_sc[g]                                   # (1, tq)
        m_new = jnp.maximum(m_prev, s.max(axis=0, keepdims=True))
        alpha = jnp.exp(m_prev - m_new)
        p = jnp.exp(s - m_new)                             # (tk, tq)
        l_sc[g] = alpha * l_sc[g] + p.sum(axis=0, keepdims=True)
        # acc[c, q] += sum_k v[c, k] * p[k, q] — canonical MXU matmul, output
        # lane-dense in q (N = tq columns).
        acc_sc[g] = alpha * acc_sc[g] + jax.lax.dot_general(
            v_ref[g], p.astype(v_ref.dtype), (((1,), (0,)), ((), ())),
            preferred_element_type=jnp.float32)
        m_sc[g] = m_new

    @pl.when(kv == pl.num_programs(2) - 1)
    def _finalize():
        o_ref[...] = (acc_sc[...] *
                      pl.reciprocal(l_sc[...], approx=True)).astype(o_ref.dtype)


def qkv_attention_legacy(qkv, n_heads):
    """Pallas forward of QKVAttentionLegacy.

    :param qkv: (N, H*3*C, T) array of concatenated Qs, Ks, Vs (f32 or bf16).
    :return:    (N, H*C, T) array after attention.
    """
    bs, width, length = qkv.shape
    assert width % (3 * n_heads) == 0
    ch = width // (3 * n_heads)
    # TODO(synk): pad the head dim when ch is not a multiple of 8 (16 for bf16);
    # guided_diffusion uses ch in {32, 64, ...} so this is not hit in practice.
    assert ch % 8 == 0, "head dim must be a multiple of 8"
    B = bs * n_heads

    Tp, tq, tk = _plan_tiles(length)
    G = _plan_group(B, Tp, tq, tk)
    assert Tp % tq == 0 and Tp % tk == 0 and B % G == 0

    qkv_r = qkv.reshape(B, 3 * ch, length)       # free reshape (no data movement)
    if Tp != length:
        qkv_r = jnp.pad(qkv_r, ((0, 0), (0, 0), (0, Tp - length)))

    scale_sq = 1.0 / math.sqrt(ch)               # (1/ch**0.25)**2 folded onto q
    valid_len = length if Tp != length else None
    kernel = functools.partial(_attn_kernel, scale_sq, valid_len)

    out = pl.pallas_call(
        kernel,
        out_shape=jax.ShapeDtypeStruct((B, ch, Tp), qkv.dtype),
        grid_spec=pltpu.PrefetchScalarGridSpec(
            num_scalar_prefetch=0,
            grid=(B // G, Tp // tq, Tp // tk),
            in_specs=[
                pl.BlockSpec((G, ch, tq), lambda b, qi, ki: (b, 0, qi)),  # q
                pl.BlockSpec((G, ch, tk), lambda b, qi, ki: (b, 1, ki)),  # k
                pl.BlockSpec((G, ch, tk), lambda b, qi, ki: (b, 2, ki)),  # v
            ],
            out_specs=pl.BlockSpec((G, ch, tq), lambda b, qi, ki: (b, 0, qi)),
            scratch_shapes=[
                pltpu.VMEM((G, 1, tq), jnp.float32),    # running max
                pltpu.VMEM((G, 1, tq), jnp.float32),    # running denominator
                pltpu.VMEM((G, ch, tq), jnp.float32),   # output accumulator
            ],
        ),
        compiler_params=pltpu.CompilerParams(
            dimension_semantics=("parallel", "parallel", "arbitrary")),
    )(qkv_r, qkv_r, qkv_r)                       # same array, three block views

    if Tp != length:
        out = out[:, :, :length]
    return out.reshape(bs, n_heads * ch, length)


def ref_qkv_attention(qkv, n_heads):
    """Pure-JAX reference mirroring the PyTorch module (correctness check)."""
    bs, width, length = qkv.shape
    ch = width // (3 * n_heads)
    q, k, v = jnp.split(qkv.reshape(bs * n_heads, 3 * ch, length), 3, axis=1)
    scale = 1.0 / math.sqrt(math.sqrt(ch))
    w = jnp.einsum('bct,bcs->bts', q * scale, k * scale)
    w = jax.nn.softmax(w.astype(jnp.float32), axis=-1).astype(w.dtype)
    a = jnp.einsum('bts,bcs->bct', w, v)
    return a.reshape(bs, -1, length)


if __name__ == "__main__":
    key = jax.random.PRNGKey(0)
    bs, n_heads, ch, T = 2, 4, 32, 16
    width = n_heads * 3 * ch                     # = 384
    qkv = jax.random.normal(key, (bs, width, T), jnp.float32)

    # f32 path (tolerance allows the EUP approximate reciprocal in finalize).
    out = jax.block_until_ready(qkv_attention_legacy(qkv, n_heads))
    ref = ref_qkv_attention(qkv, n_heads)
    np.testing.assert_allclose(np.asarray(out), np.asarray(ref),
                               rtol=1e-2, atol=1e-2)

    # bf16 path: MXU dots run natively in bf16 with f32 accumulation.
    qkv_bf = qkv.astype(jnp.bfloat16)
    out_bf = jax.block_until_ready(qkv_attention_legacy(qkv_bf, n_heads))
    ref_bf = ref_qkv_attention(qkv_bf, n_heads)
    np.testing.assert_allclose(np.asarray(out_bf.astype(jnp.float32)),
                               np.asarray(ref_bf.astype(jnp.float32)),
                               rtol=3e-2, atol=3e-2)

    # Ragged length (T=300 > 256, not tile-friendly) exercising pad + mask.
    qkv2 = jax.random.normal(jax.random.PRNGKey(1), (1, 2 * 3 * 32, 300),
                             jnp.float32)
    out2 = jax.block_until_ready(qkv_attention_legacy(qkv2, 2))
    ref2 = ref_qkv_attention(qkv2, 2)
    np.testing.assert_allclose(np.asarray(out2), np.asarray(ref2),
                               rtol=1e-2, atol=1e-2)

    print("KERNEL_OK")
</pallas_src>

<mosaic_0001>
module attributes {stable_mosaic.version = 11 : i64} {
  func.func @_attn_kernel(%arg0: i32, %arg1: i32, %arg2: i32, %arg3: memref<8x32x16xf32, #tpu.memory_space<vmem>>, %arg4: memref<8x32x16xf32, #tpu.memory_space<vmem>>, %arg5: memref<8x32x16xf32, #tpu.memory_space<vmem>>, %arg6: memref<8x32x16xf32, #tpu.memory_space<vmem>>, %arg7: memref<8x1x16xf32, #tpu.memory_space<vmem>>, %arg8: memref<8x1x16xf32, #tpu.memory_space<vmem>>, %arg9: memref<8x32x16xf32, #tpu.memory_space<vmem>>) attributes {dimension_semantics = [#tpu.dimension_semantics<parallel>, #tpu.dimension_semantics<parallel>, #tpu.dimension_semantics<arbitrary>], iteration_bounds = array<i64: 1, 1, 1>, scalar_prefetch = 0 : i64, scratch_operands = 3 : i64, tpu.core_type = #tpu.core_type<tc>, window_params = [{transform_indices = @transform_0, window_bounds = array<i64: 8, 32, 16>}, {transform_indices = @transform_1, window_bounds = array<i64: 8, 32, 16>}, {transform_indices = @transform_2, window_bounds = array<i64: 8, 32, 16>}, {transform_indices = @transform_3, window_bounds = array<i64: 8, 32, 16>}]} {
    %c0_i32 = arith.constant 0 : i32
    %0 = arith.cmpi eq, %arg2, %c0_i32 : i32
    %1 = arith.extui %0 : i1 to i32
    %c0_i32_0 = arith.constant 0 : i32
    %2 = arith.cmpi ne, %1, %c0_i32_0 : i32
    scf.if %2 {
      %cst_250 = arith.constant 0xFF800000 : f32
      %326 = vector.broadcast %cst_250 : f32 to vector<8x1x16xf32>
      %c0_251 = arith.constant 0 : index
      %c0_252 = arith.constant 0 : index
      %c0_253 = arith.constant 0 : index
      %327 = vector.load %arg7[%c0_251, %c0_252, %c0_253] : memref<8x1x16xf32, #tpu.memory_space<vmem>>, vector<8x1x16xf32>
      tpu.vector_store %arg7[%c0_251, %c0_252, %c0_253], %326 {strides = array<i32>} : memref<8x1x16xf32, #tpu.memory_space<vmem>>, vector<8x1x16xf32>,
      %cst_254 = arith.constant 0.000000e+00 : f32
      %328 = vector.broadcast %cst_254 : f32 to vector<8x1x16xf32>
      %c0_255 = arith.constant 0 : index
      %c0_256 = arith.constant 0 : index
      %c0_257 = arith.constant 0 : index
      %329 = vector.load %arg8[%c0_255, %c0_256, %c0_257] : memref<8x1x16xf32, #tpu.memory_space<vmem>>, vector<8x1x16xf32>
      tpu.vector_store %arg8[%c0_255, %c0_256, %c0_257], %328 {strides = array<i32>} : memref<8x1x16xf32, #tpu.memory_space<vmem>>, vector<8x1x16xf32>,
      %cst_258 = arith.constant 0.000000e+00 : f32
      %330 = vector.broadcast %cst_258 : f32 to vector<8x32x16xf32>
      %c0_259 = arith.constant 0 : index
      %c0_260 = arith.constant 0 : index
      %c0_261 = arith.constant 0 : index
      %331 = vector.load %arg9[%c0_259, %c0_260, %c0_261] : memref<8x32x16xf32, #tpu.memory_space<vmem>>, vector<8x32x16xf32>
      tpu.vector_store %arg9[%c0_259, %c0_260, %c0_261], %330 {strides = array<i32>} : memref<8x32x16xf32, #tpu.memory_space<vmem>>, vector<8x32x16xf32>,
    } else {
    }
    %c0 = arith.constant 0 : index
    %c0_1 = arith.constant 0 : index
    %c0_2 = arith.constant 0 : index
    %3 = vector.load %arg3[%c0, %c0_1, %c0_2] : memref<8x32x16xf32, #tpu.memory_space<vmem>>, vector<1x32x16xf32>
    %4 = vector.shape_cast %3 : vector<1x32x16xf32> to vector<32x16xf32>
    %cst = arith.constant 0.176776692 : f32
    %5 = vector.broadcast %cst : f32 to vector<32x16xf32>
    %6 = arith.mulf %4, %5 : vector<32x16xf32>
    %c0_3 = arith.constant 0 : index
    %c0_4 = arith.constant 0 : index
    %c0_5 = arith.constant 0 : index
    %7 = vector.load %arg4[%c0_3, %c0_4, %c0_5] : memref<8x32x16xf32, #tpu.memory_space<vmem>>, vector<1x32x16xf32>
    %8 = vector.shape_cast %7 : vector<1x32x16xf32> to vector<32x16xf32>
    %cst_6 = arith.constant dense<0.000000e+00> : vector<16x16xf32>
    %9 = tpu.matmul %8, %6, %cst_6 {dimension_numbers = #tpu.dot_dimension_numbers<[0], [0], [1], [1], [0, 1, 1, 1], [], []>} : vector<32x16xf32>, vector<32x16xf32>, vector<16x16xf32> -> vector<16x16xf32>
    %c0_7 = arith.constant 0 : index
    %c0_8 = arith.constant 0 : index
    %c0_9 = arith.constant 0 : index
    %10 = vector.load %arg7[%c0_7, %c0_8, %c0_9] : memref<8x1x16xf32, #tpu.memory_space<vmem>>, vector<1x1x16xf32>
    %11 = vector.shape_cast %10 : vector<1x1x16xf32> to vector<1x16xf32>
    %cst_10 = arith.constant dense<0xFF800000> : vector<16xf32>
    %12 = vector.multi_reduction <maximumf>, %9, %cst_10 [0] : vector<16x16xf32> to vector<16xf32>
    %13 = vector.shape_cast %12 : vector<16xf32> to vector<1x16xf32>
    %14 = arith.maximumf %11, %13 : vector<1x16xf32>
    %15 = arith.subf %11, %14 : vector<1x16xf32>
    %16 = math.exp %15 : vector<1x16xf32>
    %17 = vector.broadcast %14 : vector<1x16xf32> to vector<16x16xf32>
    %18 = arith.subf %9, %17 : vector<16x16xf32>
    %19 = math.exp %18 : vector<16x16xf32>
    %c0_11 = arith.constant 0 : index
    %c0_12 = arith.constant 0 : index
    %c0_13 = arith.constant 0 : index
    %20 = vector.load %arg8[%c0_11, %c0_12, %c0_13] : memref<8x1x16xf32, #tpu.memory_space<vmem>>, vector<1x1x16xf32>
    %21 = vector.shape_cast %20 : vector<1x1x16xf32> to vector<1x16xf32>
    %22 = arith.mulf %16, %21 : vector<1x16xf32>
    %cst_14 = arith.constant dense<0.000000e+00> : vector<16xf32>
    %23 = vector.multi_reduction <add>, %19, %cst_14 [0] : vector<16x16xf32> to vector<16xf32>
    %24 = vector.shape_cast %23 : vector<16xf32> to vector<1x16xf32>
    %25 = arith.addf %22, %24 : vector<1x16xf32>
    %c0_15 = arith.constant 0 : index
    %c0_16 = arith.constant 0 : index
    %c0_17 = arith.constant 0 : index
    %26 = vector.load %arg8[%c0_15, %c0_16, %c0_17] : memref<8x1x16xf32, #tpu.memory_space<vmem>>, vector<1x1x16xf32>
    %27 = vector.shape_cast %26 : vector<1x1x16xf32> to vector<1x16xf32>
    %28 = vector.shape_cast %25 : vector<1x16xf32> to vector<1x1x16xf32>
    tpu.vector_store %arg8[%c0_15, %c0_16, %c0_17], %28 {strides = array<i32>} : memref<8x1x16xf32, #tpu.memory_space<vmem>>, vector<1x1x16xf32>,
    %c0_18 = arith.constant 0 : index
    %c0_19 = arith.constant 0 : index
    %c0_20 = arith.constant 0 : index
    %29 = vector.load %arg9[%c0_18, %c0_19, %c0_20] : memref<8x32x16xf32, #tpu.memory_space<vmem>>, vector<1x32x16xf32>
    %30 = vector.shape_cast %29 : vector<1x32x16xf32> to vector<32x16xf32>
    %31 = vector.broadcast %16 : vector<1x16xf32> to vector<32x16xf32>
    %32 = arith.mulf %31, %30 : vector<32x16xf32>
    %c0_21 = arith.constant 0 : index
    %c0_22 = arith.constant 0 : index
    %c0_23 = arith.constant 0 : index
    %33 = vector.load %arg5[%c0_21, %c0_22, %c0_23] : memref<8x32x16xf32, #tpu.memory_space<vmem>>, vector<1x32x16xf32>
    %34 = vector.shape_cast %33 : vector<1x32x16xf32> to vector<32x16xf32>
    %cst_24 = arith.constant dense<0.000000e+00> : vector<32x16xf32>
    %35 = tpu.matmul %34, %19, %cst_24 {dimension_numbers = #tpu.dot_dimension_numbers<[1], [0], [0], [1], [0, 0, 1, 1], [], []>} : vector<32x16xf32>, vector<16x16xf32>, vector<32x16xf32> -> vector<32x16xf32>
    %36 = arith.addf %32, %35 : vector<32x16xf32>
    %c0_25 = arith.constant 0 : index
    %c0_26 = arith.constant 0 : index
    %c0_27 = arith.constant 0 : index
    %37 = vector.load %arg9[%c0_25, %c0_26, %c0_27] : memref<8x32x16xf32, #tpu.memory_space<vmem>>, vector<1x32x16xf32>
    %38 = vector.shape_cast %37 : vector<1x32x16xf32> to vector<32x16xf32>
    %39 = vector.shape_cast %36 : vector<32x16xf32> to vector<1x32x16xf32>
    tpu.vector_store %arg9[%c0_25, %c0_26, %c0_27], %39 {strides = array<i32>} : memref<8x32x16xf32, #tpu.memory_space<vmem>>, vector<1x32x16xf32>,
    %c0_28 = arith.constant 0 : index
    %c0_29 = arith.constant 0 : index
    %c0_30 = arith.constant 0 : index
    %40 = vector.load %arg7[%c0_28, %c0_29, %c0_30] : memref<8x1x16xf32, #tpu.memory_space<vmem>>, vector<1x1x16xf32>
    %41 = vector.shape_cast %40 : vector<1x1x16xf32> to vector<1x16xf32>
    %42 = vector.shape_cast %14 : vector<1x16xf32> to vector<1x1x16xf32>
    tpu.vector_store %arg7[%c0_28, %c0_29, %c0_30], %42 {strides = array<i32>} : memref<8x1x16xf32, #tpu.memory_space<vmem>>, vector<1x1x16xf32>,
    %c1 = arith.constant 1 : index
    %c0_31 = arith.constant 0 : index
    %c0_32 = arith.constant 0 : index
    %43 = vector.load %arg3[%c1, %c0_31, %c0_32] : memref<8x32x16xf32, #tpu.memory_space<vmem>>, vector<1x32x16xf32>
    %44 = vector.shape_cast %43 : vector<1x32x16xf32> to vector<32x16xf32>
    %cst_33 = arith.constant 0.176776692 : f32
    %45 = vector.broadcast %cst_33 : f32 to vector<32x16xf32>
    %46 = arith.mulf %44, %45 : vector<32x16xf32>
    %c1_34 = arith.constant 1 : index
    %c0_35 = arith.constant 0 : index
    %c0_36 = arith.constant 0 : index
    %47 = vector.load %arg4[%c1_34, %c0_35, %c0_36] : memref<8x32x16xf32, #tpu.memory_space<vmem>>, vector<1x32x16xf32>
    %48 = vector.shape_cast %47 : vector<1x32x16xf32> to vector<32x16xf32>
    %cst_37 = arith.constant dense<0.000000e+00> : vector<16x16xf32>
    %49 = tpu.matmul %48, %46, %cst_37 {dimension_numbers = #tpu.dot_dimension_numbers<[0], [0], [1], [1], [0, 1, 1, 1], [], []>} : vector<32x16xf32>, vector<32x16xf32>, vector<16x16xf32> -> vector<16x16xf32>
    %c1_38 = arith.constant 1 : index
    %c0_39 = arith.constant 0 : index
    %c0_40 = arith.constant 0 : index
    %50 = vector.load %arg7[%c1_38, %c0_39, %c0_40] : memref<8x1x16xf32, #tpu.memory_space<vmem>>, vector<1x1x16xf32>
    %51 = vector.shape_cast %50 : vector<1x1x16xf32> to vector<1x16xf32>
    %cst_41 = arith.constant dense<0xFF800000> : vector<16xf32>
    %52 = vector.multi_reduction <maximumf>, %49, %cst_41 [0] : vector<16x16xf32> to vector<16xf32>
    %53 = vector.shape_cast %52 : vector<16xf32> to vector<1x16xf32>
    %54 = arith.maximumf %51, %53 : vector<1x16xf32>
    %55 = arith.subf %51, %54 : vector<1x16xf32>
    %56 = math.exp %55 : vector<1x16xf32>
    %57 = vector.broadcast %54 : vector<1x16xf32> to vector<16x16xf32>
    %58 = arith.subf %49, %57 : vector<16x16xf32>
    %59 = math.exp %58 : vector<16x16xf32>
    %c1_42 = arith.constant 1 : index
    %c0_43 = arith.constant 0 : index
    %c0_44 = arith.constant 0 : index
    %60 = vector.load %arg8[%c1_42, %c0_43, %c0_44] : memref<8x1x16xf32, #tpu.memory_space<vmem>>, vector<1x1x16xf32>
    %61 = vector.shape_cast %60 : vector<1x1x16xf32> to vector<1x16xf32>
    %62 = arith.mulf %56, %61 : vector<1x16xf32>
    %cst_45 = arith.constant dense<0.000000e+00> : vector<16xf32>
    %63 = vector.multi_reduction <add>, %59, %cst_45 [0] : vector<16x16xf32> to vector<16xf32>
    %64 = vector.shape_cast %63 : vector<16xf32> to vector<1x16xf32>
    %65 = arith.addf %62, %64 : vector<1x16xf32>
    %c1_46 = arith.constant 1 : index
    %c0_47 = arith.constant 0 : index
    %c0_48 = arith.constant 0 : index
    %66 = vector.load %arg8[%c1_46, %c0_47, %c0_48] : memref<8x1x16xf32, #tpu.memory_space<vmem>>, vector<1x1x16xf32>
    %67 = vector.shape_cast %66 : vector<1x1x16xf32> to vector<1x16xf32>
    %68 = vector.shape_cast %65 : vector<1x16xf32> to vector<1x1x16xf32>
    tpu.vector_store %arg8[%c1_46, %c0_47, %c0_48], %68 {strides = array<i32>} : memref<8x1x16xf32, #tpu.memory_space<vmem>>, vector<1x1x16xf32>,
    %c1_49 = arith.constant 1 : index
    %c0_50 = arith.constant 0 : index
    %c0_51 = arith.constant 0 : index
    %69 = vector.load %arg9[%c1_49, %c0_50, %c0_51] : memref<8x32x16xf32, #tpu.memory_space<vmem>>, vector<1x32x16xf32>
    %70 = vector.shape_cast %69 : vector<1x32x16xf32> to vector<32x16xf32>
    %71 = vector.broadcast %56 : vector<1x16xf32> to vector<32x16xf32>
    %72 = arith.mulf %71, %70 : vector<32x16xf32>
    %c1_52 = arith.constant 1 : index
    %c0_53 = arith.constant 0 : index
    %c0_54 = arith.constant 0 : index
    %73 = vector.load %arg5[%c1_52, %c0_53, %c0_54] : memref<8x32x16xf32, #tpu.memory_space<vmem>>, vector<1x32x16xf32>
    %74 = vector.shape_cast %73 : vector<1x32x16xf32> to vector<32x16xf32>
    %cst_55 = arith.constant dense<0.000000e+00> : vector<32x16xf32>
    %75 = tpu.matmul %74, %59, %cst_55 {dimension_numbers = #tpu.dot_dimension_numbers<[1], [0], [0], [1], [0, 0, 1, 1], [], []>} : vector<32x16xf32>, vector<16x16xf32>, vector<32x16xf32> -> vector<32x16xf32>
    %76 = arith.addf %72, %75 : vector<32x16xf32>
    %c1_56 = arith.constant 1 : index
    %c0_57 = arith.constant 0 : index
    %c0_58 = arith.constant 0 : index
    %77 = vector.load %arg9[%c1_56, %c0_57, %c0_58] : memref<8x32x16xf32, #tpu.memory_space<vmem>>, vector<1x32x16xf32>
    %78 = vector.shape_cast %77 : vector<1x32x16xf32> to vector<32x16xf32>
    %79 = vector.shape_cast %76 : vector<32x16xf32> to vector<1x32x16xf32>
    tpu.vector_store %arg9[%c1_56, %c0_57, %c0_58], %79 {strides = array<i32>} : memref<8x32x16xf32, #tpu.memory_space<vmem>>, vector<1x32x16xf32>,
    %c1_59 = arith.constant 1 : index
    %c0_60 = arith.constant 0 : index
    %c0_61 = arith.constant 0 : index
    %80 = vector.load %arg7[%c1_59, %c0_60, %c0_61] : memref<8x1x16xf32, #tpu.memory_space<vmem>>, vector<1x1x16xf32>
    %81 = vector.shape_cast %80 : vector<1x1x16xf32> to vector<1x16xf32>
    %82 = vector.shape_cast %54 : vector<1x16xf32> to vector<1x1x16xf32>
    tpu.vector_store %arg7[%c1_59, %c0_60, %c0_61], %82 {strides = array<i32>} : memref<8x1x16xf32, #tpu.memory_space<vmem>>, vector<1x1x16xf32>,
    %c2 = arith.constant 2 : index
    %c0_62 = arith.constant 0 : index
    %c0_63 = arith.constant 0 : index
    %83 = vector.load %arg3[%c2, %c0_62, %c0_63] : memref<8x32x16xf32, #tpu.memory_space<vmem>>, vector<1x32x16xf32>
    %84 = vector.shape_cast %83 : vector<1x32x16xf32> to vector<32x16xf32>
    %cst_64 = arith.constant 0.176776692 : f32
    %85 = vector.broadcast %cst_64 : f32 to vector<32x16xf32>
    %86 = arith.mulf %84, %85 : vector<32x16xf32>
    %c2_65 = arith.constant 2 : index
    %c0_66 = arith.constant 0 : index
    %c0_67 = arith.constant 0 : index
    %87 = vector.load %arg4[%c2_65, %c0_66, %c0_67] : memref<8x32x16xf32, #tpu.memory_space<vmem>>, vector<1x32x16xf32>
    %88 = vector.shape_cast %87 : vector<1x32x16xf32> to vector<32x16xf32>
    %cst_68 = arith.constant dense<0.000000e+00> : vector<16x16xf32>
    %89 = tpu.matmul %88, %86, %cst_68 {dimension_numbers = #tpu.dot_dimension_numbers<[0], [0], [1], [1], [0, 1, 1, 1], [], []>} : vector<32x16xf32>, vector<32x16xf32>, vector<16x16xf32> -> vector<16x16xf32>
    %c2_69 = arith.constant 2 : index
    %c0_70 = arith.constant 0 : index
    %c0_71 = arith.constant 0 : index
    %90 = vector.load %arg7[%c2_69, %c0_70, %c0_71] : memref<8x1x16xf32, #tpu.memory_space<vmem>>, vector<1x1x16xf32>
    %91 = vector.shape_cast %90 : vector<1x1x16xf32> to vector<1x16xf32>
    %cst_72 = arith.constant dense<0xFF800000> : vector<16xf32>
    %92 = vector.multi_reduction <maximumf>, %89, %cst_72 [0] : vector<16x16xf32> to vector<16xf32>
    %93 = vector.shape_cast %92 : vector<16xf32> to vector<1x16xf32>
    %94 = arith.maximumf %91, %93 : vector<1x16xf32>
    %95 = arith.subf %91, %94 : vector<1x16xf32>
    %96 = math.exp %95 : vector<1x16xf32>
    %97 = vector.broadcast %94 : vector<1x16xf32> to vector<16x16xf32>
    %98 = arith.subf %89, %97 : vector<16x16xf32>
    %99 = math.exp %98 : vector<16x16xf32>
    %c2_73 = arith.constant 2 : index
    %c0_74 = arith.constant 0 : index
    %c0_75 = arith.constant 0 : index
    %100 = vector.load %arg8[%c2_73, %c0_74, %c0_75] : memref<8x1x16xf32, #tpu.memory_space<vmem>>, vector<1x1x16xf32>
    %101 = vector.shape_cast %100 : vector<1x1x16xf32> to vector<1x16xf32>
    %102 = arith.mulf %96, %101 : vector<1x16xf32>
    %cst_76 = arith.constant dense<0.000000e+00> : vector<16xf32>
    %103 = vector.multi_reduction <add>, %99, %cst_76 [0] : vector<16x16xf32> to vector<16xf32>
    %104 = vector.shape_cast %103 : vector<16xf32> to vector<1x16xf32>
    %105 = arith.addf %102, %104 : vector<1x16xf32>
    %c2_77 = arith.constant 2 : index
    %c0_78 = arith.constant 0 : index
    %c0_79 = arith.constant 0 : index
    %106 = vector.load %arg8[%c2_77, %c0_78, %c0_79] : memref<8x1x16xf32, #tpu.memory_space<vmem>>, vector<1x1x16xf32>
    %107 = vector.shape_cast %106 : vector<1x1x16xf32> to vector<1x16xf32>
    %108 = vector.shape_cast %105 : vector<1x16xf32> to vector<1x1x16xf32>
    tpu.vector_store %arg8[%c2_77, %c0_78, %c0_79], %108 {strides = array<i32>} : memref<8x1x16xf32, #tpu.memory_space<vmem>>, vector<1x1x16xf32>,
    %c2_80 = arith.constant 2 : index
    %c0_81 = arith.constant 0 : index
    %c0_82 = arith.constant 0 : index
    %109 = vector.load %arg9[%c2_80, %c0_81, %c0_82] : memref<8x32x16xf32, #tpu.memory_space<vmem>>, vector<1x32x16xf32>
    %110 = vector.shape_cast %109 : vector<1x32x16xf32> to vector<32x16xf32>
    %111 = vector.broadcast %96 : vector<1x16xf32> to vector<32x16xf32>
    %112 = arith.mulf %111, %110 : vector<32x16xf32>
    %c2_83 = arith.constant 2 : index
    %c0_84 = arith.constant 0 : index
    %c0_85 = arith.constant 0 : index
    %113 = vector.load %arg5[%c2_83, %c0_84, %c0_85] : memref<8x32x16xf32, #tpu.memory_space<vmem>>, vector<1x32x16xf32>
    %114 = vector.shape_cast %113 : vector<1x32x16xf32> to vector<32x16xf32>
    %cst_86 = arith.constant dense<0.000000e+00> : vector<32x16xf32>
    %115 = tpu.matmul %114, %99, %cst_86 {dimension_numbers = #tpu.dot_dimension_numbers<[1], [0], [0], [1], [0, 0, 1, 1], [], []>} : vector<32x16xf32>, vector<16x16xf32>, vector<32x16xf32> -> vector<32x16xf32>
    %116 = arith.addf %112, %115 : vector<32x16xf32>
    %c2_87 = arith.constant 2 : index
    %c0_88 = arith.constant 0 : index
    %c0_89 = arith.constant 0 : index
    %117 = vector.load %arg9[%c2_87, %c0_88, %c0_89] : memref<8x32x16xf32, #tpu.memory_space<vmem>>, vector<1x32x16xf32>
    %118 = vector.shape_cast %117 : vector<1x32x16xf32> to vector<32x16xf32>
    %119 = vector.shape_cast %116 : vector<32x16xf32> to vector<1x32x16xf32>
    tpu.vector_store %arg9[%c2_87, %c0_88, %c0_89], %119 {strides = array<i32>} : memref<8x32x16xf32, #tpu.memory_space<vmem>>, vector<1x32x16xf32>,
    %c2_90 = arith.constant 2 : index
    %c0_91 = arith.constant 0 : index
    %c0_92 = arith.constant 0 : index
    %120 = vector.load %arg7[%c2_90, %c0_91, %c0_92] : memref<8x1x16xf32, #tpu.memory_space<vmem>>, vector<1x1x16xf32>
    %121 = vector.shape_cast %120 : vector<1x1x16xf32> to vector<1x16xf32>
    %122 = vector.shape_cast %94 : vector<1x16xf32> to vector<1x1x16xf32>
    tpu.vector_store %arg7[%c2_90, %c0_91, %c0_92], %122 {strides = array<i32>} : memref<8x1x16xf32, #tpu.memory_space<vmem>>, vector<1x1x16xf32>,
    %c3 = arith.constant 3 : index
    %c0_93 = arith.constant 0 : index
    %c0_94 = arith.constant 0 : index
    %123 = vector.load %arg3[%c3, %c0_93, %c0_94] : memref<8x32x16xf32, #tpu.memory_space<vmem>>, vector<1x32x16xf32>
    %124 = vector.shape_cast %123 : vector<1x32x16xf32> to vector<32x16xf32>
    %cst_95 = arith.constant 0.176776692 : f32
    %125 = vector.broadcast %cst_95 : f32 to vector<32x16xf32>
    %126 = arith.mulf %124, %125 : vector<32x16xf32>
    %c3_96 = arith.constant 3 : index
    %c0_97 = arith.constant 0 : index
    %c0_98 = arith.constant 0 : index
    %127 = vector.load %arg4[%c3_96, %c0_97, %c0_98] : memref<8x32x16xf32, #tpu.memory_space<vmem>>, vector<1x32x16xf32>
    %128 = vector.shape_cast %127 : vector<1x32x16xf32> to vector<32x16xf32>
    %cst_99 = arith.constant dense<0.000000e+00> : vector<16x16xf32>
    %129 = tpu.matmul %128, %126, %cst_99 {dimension_numbers = #tpu.dot_dimension_numbers<[0], [0], [1], [1], [0, 1, 1, 1], [], []>} : vector<32x16xf32>, vector<32x16xf32>, vector<16x16xf32> -> vector<16x16xf32>
    %c3_100 = arith.constant 3 : index
    %c0_101 = arith.constant 0 : index
    %c0_102 = arith.constant 0 : index
    %130 = vector.load %arg7[%c3_100, %c0_101, %c0_102] : memref<8x1x16xf32, #tpu.memory_space<vmem>>, vector<1x1x16xf32>
    %131 = vector.shape_cast %130 : vector<1x1x16xf32> to vector<1x16xf32>
    %cst_103 = arith.constant dense<0xFF800000> : vector<16xf32>
    %132 = vector.multi_reduction <maximumf>, %129, %cst_103 [0] : vector<16x16xf32> to vector<16xf32>
    %133 = vector.shape_cast %132 : vector<16xf32> to vector<1x16xf32>
    %134 = arith.maximumf %131, %133 : vector<1x16xf32>
    %135 = arith.subf %131, %134 : vector<1x16xf32>
    %136 = math.exp %135 : vector<1x16xf32>
    %137 = vector.broadcast %134 : vector<1x16xf32> to vector<16x16xf32>
    %138 = arith.subf %129, %137 : vector<16x16xf32>
    %139 = math.exp %138 : vector<16x16xf32>
    %c3_104 = arith.constant 3 : index
    %c0_105 = arith.constant 0 : index
    %c0_106 = arith.constant 0 : index
    %140 = vector.load %arg8[%c3_104, %c0_105, %c0_106] : memref<8x1x16xf32, #tpu.memory_space<vmem>>, vector<1x1x16xf32>
    %141 = vector.shape_cast %140 : vector<1x1x16xf32> to vector<1x16xf32>
    %142 = arith.mulf %136, %141 : vector<1x16xf32>
    %cst_107 = arith.constant dense<0.000000e+00> : vector<16xf32>
    %143 = vector.multi_reduction <add>, %139, %cst_107 [0] : vector<16x16xf32> to vector<16xf32>
    %144 = vector.shape_cast %143 : vector<16xf32> to vector<1x16xf32>
    %145 = arith.addf %142, %144 : vector<1x16xf32>
    %c3_108 = arith.constant 3 : index
    %c0_109 = arith.constant 0 : index
    %c0_110 = arith.constant 0 : index
    %146 = vector.load %arg8[%c3_108, %c0_109, %c0_110] : memref<8x1x16xf32, #tpu.memory_space<vmem>>, vector<1x1x16xf32>
    %147 = vector.shape_cast %146 : vector<1x1x16xf32> to vector<1x16xf32>
    %148 = vector.shape_cast %145 : vector<1x16xf32> to vector<1x1x16xf32>
    tpu.vector_store %arg8[%c3_108, %c0_109, %c0_110], %148 {strides = array<i32>} : memref<8x1x16xf32, #tpu.memory_space<vmem>>, vector<1x1x16xf32>,
    %c3_111 = arith.constant 3 : index
    %c0_112 = arith.constant 0 : index
    %c0_113 = arith.constant 0 : index
    %149 = vector.load %arg9[%c3_111, %c0_112, %c0_113] : memref<8x32x16xf32, #tpu.memory_space<vmem>>, vector<1x32x16xf32>
    %150 = vector.shape_cast %149 : vector<1x32x16xf32> to vector<32x16xf32>
    %151 = vector.broadcast %136 : vector<1x16xf32> to vector<32x16xf32>
    %152 = arith.mulf %151, %150 : vector<32x16xf32>
    %c3_114 = arith.constant 3 : index
    %c0_115 = arith.constant 0 : index
    %c0_116 = arith.constant 0 : index
    %153 = vector.load %arg5[%c3_114, %c0_115, %c0_116] : memref<8x32x16xf32, #tpu.memory_space<vmem>>, vector<1x32x16xf32>
    %154 = vector.shape_cast %153 : vector<1x32x16xf32> to vector<32x16xf32>
    %cst_117 = arith.constant dense<0.000000e+00> : vector<32x16xf32>
    %155 = tpu.matmul %154, %139, %cst_117 {dimension_numbers = #tpu.dot_dimension_numbers<[1], [0], [0], [1], [0, 0, 1, 1], [], []>} : vector<32x16xf32>, vector<16x16xf32>, vector<32x16xf32> -> vector<32x16xf32>
    %156 = arith.addf %152, %155 : vector<32x16xf32>
    %c3_118 = arith.constant 3 : index
    %c0_119 = arith.constant 0 : index
    %c0_120 = arith.constant 0 : index
    %157 = vector.load %arg9[%c3_118, %c0_119, %c0_120] : memref<8x32x16xf32, #tpu.memory_space<vmem>>, vector<1x32x16xf32>
    %158 = vector.shape_cast %157 : vector<1x32x16xf32> to vector<32x16xf32>
    %159 = vector.shape_cast %156 : vector<32x16xf32> to vector<1x32x16xf32>
    tpu.vector_store %arg9[%c3_118, %c0_119, %c0_120], %159 {strides = array<i32>} : memref<8x32x16xf32, #tpu.memory_space<vmem>>, vector<1x32x16xf32>,
    %c3_121 = arith.constant 3 : index
    %c0_122 = arith.constant 0 : index
    %c0_123 = arith.constant 0 : index
    %160 = vector.load %arg7[%c3_121, %c0_122, %c0_123] : memref<8x1x16xf32, #tpu.memory_space<vmem>>, vector<1x1x16xf32>
    %161 = vector.shape_cast %160 : vector<1x1x16xf32> to vector<1x16xf32>
    %162 = vector.shape_cast %134 : vector<1x16xf32> to vector<1x1x16xf32>
    tpu.vector_store %arg7[%c3_121, %c0_122, %c0_123], %162 {strides = array<i32>} : memref<8x1x16xf32, #tpu.memory_space<vmem>>, vector<1x1x16xf32>,
    %c4 = arith.constant 4 : index
    %c0_124 = arith.constant 0 : index
    %c0_125 = arith.constant 0 : index
    %163 = vector.load %arg3[%c4, %c0_124, %c0_125] : memref<8x32x16xf32, #tpu.memory_space<vmem>>, vector<1x32x16xf32>
    %164 = vector.shape_cast %163 : vector<1x32x16xf32> to vector<32x16xf32>
    %cst_126 = arith.constant 0.176776692 : f32
    %165 = vector.broadcast %cst_126 : f32 to vector<32x16xf32>
    %166 = arith.mulf %164, %165 : vector<32x16xf32>
    %c4_127 = arith.constant 4 : index
    %c0_128 = arith.constant 0 : index
    %c0_129 = arith.constant 0 : index
    %167 = vector.load %arg4[%c4_127, %c0_128, %c0_129] : memref<8x32x16xf32, #tpu.memory_space<vmem>>, vector<1x32x16xf32>
    %168 = vector.shape_cast %167 : vector<1x32x16xf32> to vector<32x16xf32>
    %cst_130 = arith.constant dense<0.000000e+00> : vector<16x16xf32>
    %169 = tpu.matmul %168, %166, %cst_130 {dimension_numbers = #tpu.dot_dimension_numbers<[0], [0], [1], [1], [0, 1, 1, 1], [], []>} : vector<32x16xf32>, vector<32x16xf32>, vector<16x16xf32> -> vector<16x16xf32>
    %c4_131 = arith.constant 4 : index
    %c0_132 = arith.constant 0 : index
    %c0_133 = arith.constant 0 : index
    %170 = vector.load %arg7[%c4_131, %c0_132, %c0_133] : memref<8x1x16xf32, #tpu.memory_space<vmem>>, vector<1x1x16xf32>
    %171 = vector.shape_cast %170 : vector<1x1x16xf32> to vector<1x16xf32>
    %cst_134 = arith.constant dense<0xFF800000> : vector<16xf32>
    %172 = vector.multi_reduction <maximumf>, %169, %cst_134 [0] : vector<16x16xf32> to vector<16xf32>
    %173 = vector.shape_cast %172 : vector<16xf32> to vector<1x16xf32>
    %174 = arith.maximumf %171, %173 : vector<1x16xf32>
    %175 = arith.subf %171, %174 : vector<1x16xf32>
    %176 = math.exp %175 : vector<1x16xf32>
    %177 = vector.broadcast %174 : vector<1x16xf32> to vector<16x16xf32>
    %178 = arith.subf %169, %177 : vector<16x16xf32>
    %179 = math.exp %178 : vector<16x16xf32>
    %c4_135 = arith.constant 4 : index
    %c0_136 = arith.constant 0 : index
    %c0_137 = arith.constant 0 : index
    %180 = vector.load %arg8[%c4_135, %c0_136, %c0_137] : memref<8x1x16xf32, #tpu.memory_space<vmem>>, vector<1x1x16xf32>
    %181 = vector.shape_cast %180 : vector<1x1x16xf32> to vector<1x16xf32>
    %182 = arith.mulf %176, %181 : vector<1x16xf32>
    %cst_138 = arith.constant dense<0.000000e+00> : vector<16xf32>
    %183 = vector.multi_reduction <add>, %179, %cst_138 [0] : vector<16x16xf32> to vector<16xf32>
    %184 = vector.shape_cast %183 : vector<16xf32> to vector<1x16xf32>
    %185 = arith.addf %182, %184 : vector<1x16xf32>
    %c4_139 = arith.constant 4 : index
    %c0_140 = arith.constant 0 : index
    %c0_141 = arith.constant 0 : index
    %186 = vector.load %arg8[%c4_139, %c0_140, %c0_141] : memref<8x1x16xf32, #tpu.memory_space<vmem>>, vector<1x1x16xf32>
    %187 = vector.shape_cast %186 : vector<1x1x16xf32> to vector<1x16xf32>
    %188 = vector.shape_cast %185 : vector<1x16xf32> to vector<1x1x16xf32>
    tpu.vector_store %arg8[%c4_139, %c0_140, %c0_141], %188 {strides = array<i32>} : memref<8x1x16xf32, #tpu.memory_space<vmem>>, vector<1x1x16xf32>,
    %c4_142 = arith.constant 4 : index
    %c0_143 = arith.constant 0 : index
    %c0_144 = arith.constant 0 : index
    %189 = vector.load %arg9[%c4_142, %c0_143, %c0_144] : memref<8x32x16xf32, #tpu.memory_space<vmem>>, vector<1x32x16xf32>
    %190 = vector.shape_cast %189 : vector<1x32x16xf32> to vector<32x16xf32>
    %191 = vector.broadcast %176 : vector<1x16xf32> to vector<32x16xf32>
    %192 = arith.mulf %191, %190 : vector<32x16xf32>
    %c4_145 = arith.constant 4 : index
    %c0_146 = arith.constant 0 : index
    %c0_147 = arith.constant 0 : index
    %193 = vector.load %arg5[%c4_145, %c0_146, %c0_147] : memref<8x32x16xf32, #tpu.memory_space<vmem>>, vector<1x32x16xf32>
    %194 = vector.shape_cast %193 : vector<1x32x16xf32> to vector<32x16xf32>
    %cst_148 = arith.constant dense<0.000000e+00> : vector<32x16xf32>
    %195 = tpu.matmul %194, %179, %cst_148 {dimension_numbers = #tpu.dot_dimension_numbers<[1], [0], [0], [1], [0, 0, 1, 1], [], []>} : vector<32x16xf32>, vector<16x16xf32>, vector<32x16xf32> -> vector<32x16xf32>
    %196 = arith.addf %192, %195 : vector<32x16xf32>
    %c4_149 = arith.constant 4 : index
    %c0_150 = arith.constant 0 : index
    %c0_151 = arith.constant 0 : index
    %197 = vector.load %arg9[%c4_149, %c0_150, %c0_151] : memref<8x32x16xf32, #tpu.memory_space<vmem>>, vector<1x32x16xf32>
    %198 = vector.shape_cast %197 : vector<1x32x16xf32> to vector<32x16xf32>
    %199 = vector.shape_cast %196 : vector<32x16xf32> to vector<1x32x16xf32>
    tpu.vector_store %arg9[%c4_149, %c0_150, %c0_151], %199 {strides = array<i32>} : memref<8x32x16xf32, #tpu.memory_space<vmem>>, vector<1x32x16xf32>,
    %c4_152 = arith.constant 4 : index
    %c0_153 = arith.constant 0 : index
    %c0_154 = arith.constant 0 : index
    %200 = vector.load %arg7[%c4_152, %c0_153, %c0_154] : memref<8x1x16xf32, #tpu.memory_space<vmem>>, vector<1x1x16xf32>
    %201 = vector.shape_cast %200 : vector<1x1x16xf32> to vector<1x16xf32>
    %202 = vector.shape_cast %174 : vector<1x16xf32> to vector<1x1x16xf32>
    tpu.vector_store %arg7[%c4_152, %c0_153, %c0_154], %202 {strides = array<i32>} : memref<8x1x16xf32, #tpu.memory_space<vmem>>, vector<1x1x16xf32>,
    %c5 = arith.constant 5 : index
    %c0_155 = arith.constant 0 : index
    %c0_156 = arith.constant 0 : index
    %203 = vector.load %arg3[%c5, %c0_155, %c0_156] : memref<8x32x16xf32, #tpu.memory_space<vmem>>, vector<1x32x16xf32>
    %204 = vector.shape_cast %203 : vector<1x32x16xf32> to vector<32x16xf32>
    %cst_157 = arith.constant 0.176776692 : f32
    %205 = vector.broadcast %cst_157 : f32 to vector<32x16xf32>
    %206 = arith.mulf %204, %205 : vector<32x16xf32>
    %c5_158 = arith.constant 5 : index
    %c0_159 = arith.constant 0 : index
    %c0_160 = arith.constant 0 : index
    %207 = vector.load %arg4[%c5_158, %c0_159, %c0_160] : memref<8x32x16xf32, #tpu.memory_space<vmem>>, vector<1x32x16xf32>
    %208 = vector.shape_cast %207 : vector<1x32x16xf32> to vector<32x16xf32>
    %cst_161 = arith.constant dense<0.000000e+00> : vector<16x16xf32>
    %209 = tpu.matmul %208, %206, %cst_161 {dimension_numbers = #tpu.dot_dimension_numbers<[0], [0], [1], [1], [0, 1, 1, 1], [], []>} : vector<32x16xf32>, vector<32x16xf32>, vector<16x16xf32> -> vector<16x16xf32>
    %c5_162 = arith.constant 5 : index
    %c0_163 = arith.constant 0 : index
    %c0_164 = arith.constant 0 : index
    %210 = vector.load %arg7[%c5_162, %c0_163, %c0_164] : memref<8x1x16xf32, #tpu.memory_space<vmem>>, vector<1x1x16xf32>
    %211 = vector.shape_cast %210 : vector<1x1x16xf32> to vector<1x16xf32>
    %cst_165 = arith.constant dense<0xFF800000> : vector<16xf32>
    %212 = vector.multi_reduction <maximumf>, %209, %cst_165 [0] : vector<16x16xf32> to vector<16xf32>
    %213 = vector.shape_cast %212 : vector<16xf32> to vector<1x16xf32>
    %214 = arith.maximumf %211, %213 : vector<1x16xf32>
    %215 = arith.subf %211, %214 : vector<1x16xf32>
    %216 = math.exp %215 : vector<1x16xf32>
    %217 = vector.broadcast %214 : vector<1x16xf32> to vector<16x16xf32>
    %218 = arith.subf %209, %217 : vector<16x16xf32>
    %219 = math.exp %218 : vector<16x16xf32>
    %c5_166 = arith.constant 5 : index
    %c0_167 = arith.constant 0 : index
    %c0_168 = arith.constant 0 : index
    %220 = vector.load %arg8[%c5_166, %c0_167, %c0_168] : memref<8x1x16xf32, #tpu.memory_space<vmem>>, vector<1x1x16xf32>
    %221 = vector.shape_cast %220 : vector<1x1x16xf32> to vector<1x16xf32>
    %222 = arith.mulf %216, %221 : vector<1x16xf32>
    %cst_169 = arith.constant dense<0.000000e+00> : vector<16xf32>
    %223 = vector.multi_reduction <add>, %219, %cst_169 [0] : vector<16x16xf32> to vector<16xf32>
    %224 = vector.shape_cast %223 : vector<16xf32> to vector<1x16xf32>
    %225 = arith.addf %222, %224 : vector<1x16xf32>
    %c5_170 = arith.constant 5 : index
    %c0_171 = arith.constant 0 : index
    %c0_172 = arith.constant 0 : index
    %226 = vector.load %arg8[%c5_170, %c0_171, %c0_172] : memref<8x1x16xf32, #tpu.memory_space<vmem>>, vector<1x1x16xf32>
    %227 = vector.shape_cast %226 : vector<1x1x16xf32> to vector<1x16xf32>
    %228 = vector.shape_cast %225 : vector<1x16xf32> to vector<1x1x16xf32>
    tpu.vector_store %arg8[%c5_170, %c0_171, %c0_172], %228 {strides = array<i32>} : memref<8x1x16xf32, #tpu.memory_space<vmem>>, vector<1x1x16xf32>,
    %c5_173 = arith.constant 5 : index
    %c0_174 = arith.constant 0 : index
    %c0_175 = arith.constant 0 : index
    %229 = vector.load %arg9[%c5_173, %c0_174, %c0_175] : memref<8x32x16xf32, #tpu.memory_space<vmem>>, vector<1x32x16xf32>
    %230 = vector.shape_cast %229 : vector<1x32x16xf32> to vector<32x16xf32>
    %231 = vector.broadcast %216 : vector<1x16xf32> to vector<32x16xf32>
    %232 = arith.mulf %231, %230 : vector<32x16xf32>
    %c5_176 = arith.constant 5 : index
    %c0_177 = arith.constant 0 : index
    %c0_178 = arith.constant 0 : index
    %233 = vector.load %arg5[%c5_176, %c0_177, %c0_178] : memref<8x32x16xf32, #tpu.memory_space<vmem>>, vector<1x32x16xf32>
    %234 = vector.shape_cast %233 : vector<1x32x16xf32> to vector<32x16xf32>
    %cst_179 = arith.constant dense<0.000000e+00> : vector<32x16xf32>
    %235 = tpu.matmul %234, %219, %cst_179 {dimension_numbers = #tpu.dot_dimension_numbers<[1], [0], [0], [1], [0, 0, 1, 1], [], []>} : vector<32x16xf32>, vector<16x16xf32>, vector<32x16xf32> -> vector<32x16xf32>
    %236 = arith.addf %232, %235 : vector<32x16xf32>
    %c5_180 = arith.constant 5 : index
    %c0_181 = arith.constant 0 : index
    %c0_182 = arith.constant 0 : index
    %237 = vector.load %arg9[%c5_180, %c0_181, %c0_182] : memref<8x32x16xf32, #tpu.memory_space<vmem>>, vector<1x32x16xf32>
    %238 = vector.shape_cast %237 : vector<1x32x16xf32> to vector<32x16xf32>
    %239 = vector.shape_cast %236 : vector<32x16xf32> to vector<1x32x16xf32>
    tpu.vector_store %arg9[%c5_180, %c0_181, %c0_182], %239 {strides = array<i32>} : memref<8x32x16xf32, #tpu.memory_space<vmem>>, vector<1x32x16xf32>,
    %c5_183 = arith.constant 5 : index
    %c0_184 = arith.constant 0 : index
    %c0_185 = arith.constant 0 : index
    %240 = vector.load %arg7[%c5_183, %c0_184, %c0_185] : memref<8x1x16xf32, #tpu.memory_space<vmem>>, vector<1x1x16xf32>
    %241 = vector.shape_cast %240 : vector<1x1x16xf32> to vector<1x16xf32>
    %242 = vector.shape_cast %214 : vector<1x16xf32> to vector<1x1x16xf32>
    tpu.vector_store %arg7[%c5_183, %c0_184, %c0_185], %242 {strides = array<i32>} : memref<8x1x16xf32, #tpu.memory_space<vmem>>, vector<1x1x16xf32>,
    %c6 = arith.constant 6 : index
    %c0_186 = arith.constant 0 : index
    %c0_187 = arith.constant 0 : index
    %243 = vector.load %arg3[%c6, %c0_186, %c0_187] : memref<8x32x16xf32, #tpu.memory_space<vmem>>, vector<1x32x16xf32>
    %244 = vector.shape_cast %243 : vector<1x32x16xf32> to vector<32x16xf32>
    %cst_188 = arith.constant 0.176776692 : f32
    %245 = vector.broadcast %cst_188 : f32 to vector<32x16xf32>
    %246 = arith.mulf %244, %245 : vector<32x16xf32>
    %c6_189 = arith.constant 6 : index
    %c0_190 = arith.constant 0 : index
    %c0_191 = arith.constant 0 : index
    %247 = vector.load %arg4[%c6_189, %c0_190, %c0_191] : memref<8x32x16xf32, #tpu.memory_space<vmem>>, vector<1x32x16xf32>
    %248 = vector.shape_cast %247 : vector<1x32x16xf32> to vector<32x16xf32>
    %cst_192 = arith.constant dense<0.000000e+00> : vector<16x16xf32>
    %249 = tpu.matmul %248, %246, %cst_192 {dimension_numbers = #tpu.dot_dimension_numbers<[0], [0], [1], [1], [0, 1, 1, 1], [], []>} : vector<32x16xf32>, vector<32x16xf32>, vector<16x16xf32> -> vector<16x16xf32>
    %c6_193 = arith.constant 6 : index
    %c0_194 = arith.constant 0 : index
    %c0_195 = arith.constant 0 : index
    %250 = vector.load %arg7[%c6_193, %c0_194, %c0_195] : memref<8x1x16xf32, #tpu.memory_space<vmem>>, vector<1x1x16xf32>
    %251 = vector.shape_cast %250 : vector<1x1x16xf32> to vector<1x16xf32>
    %cst_196 = arith.constant dense<0xFF800000> : vector<16xf32>
    %252 = vector.multi_reduction <maximumf>, %249, %cst_196 [0] : vector<16x16xf32> to vector<16xf32>
    %253 = vector.shape_cast %252 : vector<16xf32> to vector<1x16xf32>
    %254 = arith.maximumf %251, %253 : vector<1x16xf32>
    %255 = arith.subf %251, %254 : vector<1x16xf32>
    %256 = math.exp %255 : vector<1x16xf32>
    %257 = vector.broadcast %254 : vector<1x16xf32> to vector<16x16xf32>
    %258 = arith.subf %249, %257 : vector<16x16xf32>
    %259 = math.exp %258 : vector<16x16xf32>
    %c6_197 = arith.constant 6 : index
    %c0_198 = arith.constant 0 : index
    %c0_199 = arith.constant 0 : index
    %260 = vector.load %arg8[%c6_197, %c0_198, %c0_199] : memref<8x1x16xf32, #tpu.memory_space<vmem>>, vector<1x1x16xf32>
    %261 = vector.shape_cast %260 : vector<1x1x16xf32> to vector<1x16xf32>
    %262 = arith.mulf %256, %261 : vector<1x16xf32>
    %cst_200 = arith.constant dense<0.000000e+00> : vector<16xf32>
    %263 = vector.multi_reduction <add>, %259, %cst_200 [0] : vector<16x16xf32> to vector<16xf32>
    %264 = vector.shape_cast %263 : vector<16xf32> to vector<1x16xf32>
    %265 = arith.addf %262, %264 : vector<1x16xf32>
    %c6_201 = arith.constant 6 : index
    %c0_202 = arith.constant 0 : index
    %c0_203 = arith.constant 0 : index
    %266 = vector.load %arg8[%c6_201, %c0_202, %c0_203] : memref<8x1x16xf32, #tpu.memory_space<vmem>>, vector<1x1x16xf32>
    %267 = vector.shape_cast %266 : vector<1x1x16xf32> to vector<1x16xf32>
    %268 = vector.shape_cast %265 : vector<1x16xf32> to vector<1x1x16xf32>
    tpu.vector_store %arg8[%c6_201, %c0_202, %c0_203], %268 {strides = array<i32>} : memref<8x1x16xf32, #tpu.memory_space<vmem>>, vector<1x1x16xf32>,
    %c6_204 = arith.constant 6 : index
    %c0_205 = arith.constant 0 : index
    %c0_206 = arith.constant 0 : index
    %269 = vector.load %arg9[%c6_204, %c0_205, %c0_206] : memref<8x32x16xf32, #tpu.memory_space<vmem>>, vector<1x32x16xf32>
    %270 = vector.shape_cast %269 : vector<1x32x16xf32> to vector<32x16xf32>
    %271 = vector.broadcast %256 : vector<1x16xf32> to vector<32x16xf32>
    %272 = arith.mulf %271, %270 : vector<32x16xf32>
    %c6_207 = arith.constant 6 : index
    %c0_208 = arith.constant 0 : index
    %c0_209 = arith.constant 0 : index
    %273 = vector.load %arg5[%c6_207, %c0_208, %c0_209] : memref<8x32x16xf32, #tpu.memory_space<vmem>>, vector<1x32x16xf32>
    %274 = vector.shape_cast %273 : vector<1x32x16xf32> to vector<32x16xf32>
    %cst_210 = arith.constant dense<0.000000e+00> : vector<32x16xf32>
    %275 = tpu.matmul %274, %259, %cst_210 {dimension_numbers = #tpu.dot_dimension_numbers<[1], [0], [0], [1], [0, 0, 1, 1], [], []>} : vector<32x16xf32>, vector<16x16xf32>, vector<32x16xf32> -> vector<32x16xf32>
    %276 = arith.addf %272, %275 : vector<32x16xf32>
    %c6_211 = arith.constant 6 : index
    %c0_212 = arith.constant 0 : index
    %c0_213 = arith.constant 0 : index
    %277 = vector.load %arg9[%c6_211, %c0_212, %c0_213] : memref<8x32x16xf32, #tpu.memory_space<vmem>>, vector<1x32x16xf32>
    %278 = vector.shape_cast %277 : vector<1x32x16xf32> to vector<32x16xf32>
    %279 = vector.shape_cast %276 : vector<32x16xf32> to vector<1x32x16xf32>
    tpu.vector_store %arg9[%c6_211, %c0_212, %c0_213], %279 {strides = array<i32>} : memref<8x32x16xf32, #tpu.memory_space<vmem>>, vector<1x32x16xf32>,
    %c6_214 = arith.constant 6 : index
    %c0_215 = arith.constant 0 : index
    %c0_216 = arith.constant 0 : index
    %280 = vector.load %arg7[%c6_214, %c0_215, %c0_216] : memref<8x1x16xf32, #tpu.memory_space<vmem>>, vector<1x1x16xf32>
    %281 = vector.shape_cast %280 : vector<1x1x16xf32> to vector<1x16xf32>
    %282 = vector.shape_cast %254 : vector<1x16xf32> to vector<1x1x16xf32>
    tpu.vector_store %arg7[%c6_214, %c0_215, %c0_216], %282 {strides = array<i32>} : memref<8x1x16xf32, #tpu.memory_space<vmem>>, vector<1x1x16xf32>,
    %c7 = arith.constant 7 : index
    %c0_217 = arith.constant 0 : index
    %c0_218 = arith.constant 0 : index
    %283 = vector.load %arg3[%c7, %c0_217, %c0_218] : memref<8x32x16xf32, #tpu.memory_space<vmem>>, vector<1x32x16xf32>
    %284 = vector.shape_cast %283 : vector<1x32x16xf32> to vector<32x16xf32>
    %cst_219 = arith.constant 0.176776692 : f32
    %285 = vector.broadcast %cst_219 : f32 to vector<32x16xf32>
    %286 = arith.mulf %284, %285 : vector<32x16xf32>
    %c7_220 = arith.constant 7 : index
    %c0_221 = arith.constant 0 : index
    %c0_222 = arith.constant 0 : index
    %287 = vector.load %arg4[%c7_220, %c0_221, %c0_222] : memref<8x32x16xf32, #tpu.memory_space<vmem>>, vector<1x32x16xf32>
    %288 = vector.shape_cast %287 : vector<1x32x16xf32> to vector<32x16xf32>
    %cst_223 = arith.constant dense<0.000000e+00> : vector<16x16xf32>
    %289 = tpu.matmul %288, %286, %cst_223 {dimension_numbers = #tpu.dot_dimension_numbers<[0], [0], [1], [1], [0, 1, 1, 1], [], []>} : vector<32x16xf32>, vector<32x16xf32>, vector<16x16xf32> -> vector<16x16xf32>
    %c7_224 = arith.constant 7 : index
    %c0_225 = arith.constant 0 : index
    %c0_226 = arith.constant 0 : index
    %290 = vector.load %arg7[%c7_224, %c0_225, %c0_226] : memref<8x1x16xf32, #tpu.memory_space<vmem>>, vector<1x1x16xf32>
    %291 = vector.shape_cast %290 : vector<1x1x16xf32> to vector<1x16xf32>
    %cst_227 = arith.constant dense<0xFF800000> : vector<16xf32>
    %292 = vector.multi_reduction <maximumf>, %289, %cst_227 [0] : vector<16x16xf32> to vector<16xf32>
    %293 = vector.shape_cast %292 : vector<16xf32> to vector<1x16xf32>
    %294 = arith.maximumf %291, %293 : vector<1x16xf32>
    %295 = arith.subf %291, %294 : vector<1x16xf32>
    %296 = math.exp %295 : vector<1x16xf32>
    %297 = vector.broadcast %294 : vector<1x16xf32> to vector<16x16xf32>
    %298 = arith.subf %289, %297 : vector<16x16xf32>
    %299 = math.exp %298 : vector<16x16xf32>
    %c7_228 = arith.constant 7 : index
    %c0_229 = arith.constant 0 : index
    %c0_230 = arith.constant 0 : index
    %300 = vector.load %arg8[%c7_228, %c0_229, %c0_230] : memref<8x1x16xf32, #tpu.memory_space<vmem>>, vector<1x1x16xf32>
    %301 = vector.shape_cast %300 : vector<1x1x16xf32> to vector<1x16xf32>
    %302 = arith.mulf %296, %301 : vector<1x16xf32>
    %cst_231 = arith.constant dense<0.000000e+00> : vector<16xf32>
    %303 = vector.multi_reduction <add>, %299, %cst_231 [0] : vector<16x16xf32> to vector<16xf32>
    %304 = vector.shape_cast %303 : vector<16xf32> to vector<1x16xf32>
    %305 = arith.addf %302, %304 : vector<1x16xf32>
    %c7_232 = arith.constant 7 : index
    %c0_233 = arith.constant 0 : index
    %c0_234 = arith.constant 0 : index
    %306 = vector.load %arg8[%c7_232, %c0_233, %c0_234] : memref<8x1x16xf32, #tpu.memory_space<vmem>>, vector<1x1x16xf32>
    %307 = vector.shape_cast %306 : vector<1x1x16xf32> to vector<1x16xf32>
    %308 = vector.shape_cast %305 : vector<1x16xf32> to vector<1x1x16xf32>
    tpu.vector_store %arg8[%c7_232, %c0_233, %c0_234], %308 {strides = array<i32>} : memref<8x1x16xf32, #tpu.memory_space<vmem>>, vector<1x1x16xf32>,
    %c7_235 = arith.constant 7 : index
    %c0_236 = arith.constant 0 : index
    %c0_237 = arith.constant 0 : index
    %309 = vector.load %arg9[%c7_235, %c0_236, %c0_237] : memref<8x32x16xf32, #tpu.memory_space<vmem>>, vector<1x32x16xf32>
    %310 = vector.shape_cast %309 : vector<1x32x16xf32> to vector<32x16xf32>
    %311 = vector.broadcast %296 : vector<1x16xf32> to vector<32x16xf32>
    %312 = arith.mulf %311, %310 : vector<32x16xf32>
    %c7_238 = arith.constant 7 : index
    %c0_239 = arith.constant 0 : index
    %c0_240 = arith.constant 0 : index
    %313 = vector.load %arg5[%c7_238, %c0_239, %c0_240] : memref<8x32x16xf32, #tpu.memory_space<vmem>>, vector<1x32x16xf32>
    %314 = vector.shape_cast %313 : vector<1x32x16xf32> to vector<32x16xf32>
    %cst_241 = arith.constant dense<0.000000e+00> : vector<32x16xf32>
    %315 = tpu.matmul %314, %299, %cst_241 {dimension_numbers = #tpu.dot_dimension_numbers<[1], [0], [0], [1], [0, 0, 1, 1], [], []>} : vector<32x16xf32>, vector<16x16xf32>, vector<32x16xf32> -> vector<32x16xf32>
    %316 = arith.addf %312, %315 : vector<32x16xf32>
    %c7_242 = arith.constant 7 : index
    %c0_243 = arith.constant 0 : index
    %c0_244 = arith.constant 0 : index
    %317 = vector.load %arg9[%c7_242, %c0_243, %c0_244] : memref<8x32x16xf32, #tpu.memory_space<vmem>>, vector<1x32x16xf32>
    %318 = vector.shape_cast %317 : vector<1x32x16xf32> to vector<32x16xf32>
    %319 = vector.shape_cast %316 : vector<32x16xf32> to vector<1x32x16xf32>
    tpu.vector_store %arg9[%c7_242, %c0_243, %c0_244], %319 {strides = array<i32>} : memref<8x32x16xf32, #tpu.memory_space<vmem>>, vector<1x32x16xf32>,
    %c7_245 = arith.constant 7 : index
    %c0_246 = arith.constant 0 : index
    %c0_247 = arith.constant 0 : index
    %320 = vector.load %arg7[%c7_245, %c0_246, %c0_247] : memref<8x1x16xf32, #tpu.memory_space<vmem>>, vector<1x1x16xf32>
    %321 = vector.shape_cast %320 : vector<1x1x16xf32> to vector<1x16xf32>
    %322 = vector.shape_cast %294 : vector<1x16xf32> to vector<1x1x16xf32>
    tpu.vector_store %arg7[%c7_245, %c0_246, %c0_247], %322 {strides = array<i32>} : memref<8x1x16xf32, #tpu.memory_space<vmem>>, vector<1x1x16xf32>,
    %c0_i32_248 = arith.constant 0 : i32
    %323 = arith.cmpi eq, %arg2, %c0_i32_248 : i32
    %324 = arith.extui %323 : i1 to i32
    %c0_i32_249 = arith.constant 0 : i32
    %325 = arith.cmpi ne, %324, %c0_i32_249 : i32
    scf.if %325 {
      %c0_250 = arith.constant 0 : index
      %c0_251 = arith.constant 0 : index
      %c0_252 = arith.constant 0 : index
      %326 = vector.load %arg9[%c0_250, %c0_251, %c0_252] : memref<8x32x16xf32, #tpu.memory_space<vmem>>, vector<8x32x16xf32>
      %c0_253 = arith.constant 0 : index
      %c0_254 = arith.constant 0 : index
      %c0_255 = arith.constant 0 : index
      %327 = vector.load %arg8[%c0_253, %c0_254, %c0_255] : memref<8x1x16xf32, #tpu.memory_space<vmem>>, vector<8x1x16xf32>
      %328 = tpu.reciprocal %327 {approx = true} : vector<8x1x16xf32> -> vector<8x1x16xf32>
      %329 = vector.broadcast %328 : vector<8x1x16xf32> to vector<8x32x16xf32>
      %330 = arith.mulf %326, %329 : vector<8x32x16xf32>
      %c0_256 = arith.constant 0 : index
      %c0_257 = arith.constant 0 : index
      %c0_258 = arith.constant 0 : index
      %331 = vector.load %arg6[%c0_256, %c0_257, %c0_258] : memref<8x32x16xf32, #tpu.memory_space<vmem>>, vector<8x32x16xf32>
      tpu.vector_store %arg6[%c0_256, %c0_257, %c0_258], %330 {strides = array<i32>} : memref<8x32x16xf32, #tpu.memory_space<vmem>>, vector<8x32x16xf32>,
    } else {
    }
    return
  }
  func.func @transform_0(%arg0: i32, %arg1: i32, %arg2: i32) -> (i32, i32, i32) {
    %c0_i32 = arith.constant 0 : i32
    %c0_i32_0 = arith.constant 0 : i32
    return %arg0, %c0_i32, %arg1 : i32, i32, i32
  }
  func.func @transform_1(%arg0: i32, %arg1: i32, %arg2: i32) -> (i32, i32, i32) {
    %c1_i32 = arith.constant 1 : i32
    %c0_i32 = arith.constant 0 : i32
    return %arg0, %c1_i32, %arg2 : i32, i32, i32
  }
  func.func @transform_2(%arg0: i32, %arg1: i32, %arg2: i32) -> (i32, i32, i32) {
    %c2_i32 = arith.constant 2 : i32
    %c0_i32 = arith.constant 0 : i32
    return %arg0, %c2_i32, %arg2 : i32, i32, i32
  }
  func.func @transform_3(%arg0: i32, %arg1: i32, %arg2: i32) -> (i32, i32, i32) {
    %c0_i32 = arith.constant 0 : i32
    %c0_i32_0 = arith.constant 0 : i32
    return %arg0, %c0_i32, %arg1 : i32, i32, i32
  }
}

</mosaic_0001>

<llo_original>
// kernel: tpu_custom_call.1
$region0: #{tpu_custom_call.1}
  #allocation0 [shape = 'u32[]', space=smem, size = 0x4, offset = 0x4, fixed_abs, tag = 'smem constant byte address 0x4 - core index']
  #allocation1 [shape = 'u32[144,128]{1,0:T(1,128)}', space=vmem, size = 0x12000, scoped, tag = 'internal scratch']
  #allocation2 [shape = 'f32[8,1,16]{2,1,0:T(1,128)}', space=vmem, size = 0x1000, scoped, tag = 'scratch operand']
  #allocation3 [shape = 'f32[8,1,16]{2,1,0:T(1,128)}', space=vmem, size = 0x1000, scoped, tag = 'scratch operand']
  #allocation4 [shape = 'f32[8,32,16]{2,1,0:T(8,128)}', space=vmem, size = 0x20000, scoped, tag = 'scratch operand']
  %s0 = inlined_call_operand.vmem [shape: f32[8,96,16], index: 0, kind: input, shape index: {}]
  %s1 = inlined_call_operand.vmem [shape: f32[8,96,16], index: 1, kind: input, shape index: {}]
  %s2 = inlined_call_operand.vmem [shape: f32[8,96,16], index: 2, kind: input, shape index: {}]
  %s3 = inlined_call_operand.vmem [shape: f32[8,32,16], index: 3, kind: output, shape index: {}]
  %s4 = sld [smem:[#allocation0]]
  $region144: #{tpu_custom_call.1} parent=0
    _
  %s6 = ssub.s32 1, %s4
  %s7 = scalar_select 0, %s6, %s4
  $region1: #{tpu_custom_call.1} parent=0
    #allocation5 [shape = 'u8[131072]{0}', space=vmem, size = 0x20000, scoped, tag = 'input window, operand 0, single buffered']
    #allocation6 [shape = 'u8[131072]{0}', space=vmem, size = 0x20000, scoped, tag = 'input window, operand 1, single buffered']
    #allocation7 [shape = 'u8[131072]{0}', space=vmem, size = 0x20000, scoped, tag = 'input window, operand 2, single buffered']
    // Predicated region
    $region2: #{tpu_custom_call.1} parent=1 // pred_check
      _
    $region3: #{tpu_custom_call.1} parent=1 // pred_check_branch
      %9 = sbr.rel (0) target = $region5
    $region4: #{tpu_custom_call.1} parent=1 // pred_region
      // Predicated region
      $region6: #{tpu_custom_call.1} parent=4 // pred_check
        _
      $region7: #{tpu_custom_call.1} parent=4 // pred_check_branch
        %11 = sbr.rel (0) target = $region9
      $region8: #{tpu_custom_call.1} parent=4 // pred_region
        // Predicated region
        $region10: #{tpu_custom_call.1} parent=8 // pred_check
          _
        $region11: #{tpu_custom_call.1} parent=8 // pred_check_branch
          %13 = sbr.rel (0) target = $region13
        $region12: #{tpu_custom_call.1} parent=8 // pred_region
          // Predicated region
          $region25: #{tpu_custom_call.1} parent=12 // pred_check
            _
          $region26: #{tpu_custom_call.1} parent=12 // pred_check_branch
            %90 = sbr.rel (0) target = $region28
          $region27: #{tpu_custom_call.1} parent=12 // pred_region
            loop: start=0, step=1, limit=1
            $region29: #{tpu_custom_call.1} parent=27 // loop_pre_header
              _
            $region30: #{tpu_custom_call.1} parent=27 // loop_header
              %s92 = sphi 0, %s96
              %p93 = scmp.ge.s32.totalorder %s92, 1
              %s97 = sphi %s0, %s0
              %s98 = sphi [#allocation5], [#allocation5]
            $region31: #{tpu_custom_call.1} parent=27 // loop_header_branch
              %95 = sbr.rel (%p93) target = $region35
            $region32: #{tpu_custom_call.1} parent=27 // loop_body
              %v99 = vld [vmem:[%s97] sm:$0xff]
              %100 = vst [vmem:[%s98] sm:$0xff] %v99
              %v101 = vld [vmem:[%s97 + $0x8] sm:$0xff]
              %102 = vst [vmem:[%s98 + $0x8] sm:$0xff] %v101
              %v103 = vld [vmem:[%s97 + $0x10] sm:$0xff]
              %104 = vst [vmem:[%s98 + $0x10] sm:$0xff] %v103
              %v105 = vld [vmem:[%s97 + $0x18] sm:$0xff]
              %106 = vst [vmem:[%s98 + $0x18] sm:$0xff] %v105
              %v107 = vld [vmem:[%s97 + $0x60] sm:$0xff]
              %108 = vst [vmem:[%s98 + $0x20] sm:$0xff] %v107
              %v109 = vld [vmem:[%s97 + $0x68] sm:$0xff]
              %110 = vst [vmem:[%s98 + $0x28] sm:$0xff] %v109
              %v111 = vld [vmem:[%s97 + $0x70] sm:$0xff]
              %112 = vst [vmem:[%s98 + $0x30] sm:$0xff] %v111
              %v113 = vld [vmem:[%s97 + $0x78] sm:$0xff]
              %114 = vst [vmem:[%s98 + $0x38] sm:$0xff] %v113
              %v115 = vld [vmem:[%s97 + $0xc0] sm:$0xff]
              %116 = vst [vmem:[%s98 + $0x40] sm:$0xff] %v115
              %v117 = vld [vmem:[%s97 + $0xc8] sm:$0xff]
              %118 = vst [vmem:[%s98 + $0x48] sm:$0xff] %v117
              %v119 = vld [vmem:[%s97 + $0xd0] sm:$0xff]
              %120 = vst [vmem:[%s98 + $0x50] sm:$0xff] %v119
              %v121 = vld [vmem:[%s97 + $0xd8] sm:$0xff]
              %122 = vst [vmem:[%s98 + $0x58] sm:$0xff] %v121
              %v123 = vld [vmem:[%s97 + $0x120] sm:$0xff]
              %124 = vst [vmem:[%s98 + $0x60] sm:$0xff] %v123
              %v125 = vld [vmem:[%s97 + $0x128] sm:$0xff]
              %126 = vst [vmem:[%s98 + $0x68] sm:$0xff] %v125
              %v127 = vld [vmem:[%s97 + $0x130] sm:$0xff]
              %128 = vst [vmem:[%s98 + $0x70] sm:$0xff] %v127
              %v129 = vld [vmem:[%s97 + $0x138] sm:$0xff]
              %130 = vst [vmem:[%s98 + $0x78] sm:$0xff] %v129
              %v131 = vld [vmem:[%s97 + $0x180] sm:$0xff]
              %132 = vst [vmem:[%s98 + $0x80] sm:$0xff] %v131
              %v133 = vld [vmem:[%s97 + $0x188] sm:$0xff]
              %134 = vst [vmem:[%s98 + $0x88] sm:$0xff] %v133
              %v135 = vld [vmem:[%s97 + $0x190] sm:$0xff]
              %136 = vst [vmem:[%s98 + $0x90] sm:$0xff] %v135
              %v137 = vld [vmem:[%s97 + $0x198] sm:$0xff]
              %138 = vst [vmem:[%s98 + $0x98] sm:$0xff] %v137
              %v139 = vld [vmem:[%s97 + $0x1e0] sm:$0xff]
              %140 = vst [vmem:[%s98 + $0xa0] sm:$0xff] %v139
              %v141 = vld [vmem:[%s97 + $0x1e8] sm:$0xff]
              %142 = vst [vmem:[%s98 + $0xa8] sm:$0xff] %v141
              %v143 = vld [vmem:[%s97 + $0x1f0] sm:$0xff]
              %144 = vst [vmem:[%s98 + $0xb0] sm:$0xff] %v143
              %v145 = vld [vmem:[%s97 + $0x1f8] sm:$0xff]
              %146 = vst [vmem:[%s98 + $0xb8] sm:$0xff] %v145
              %v147 = vld [vmem:[%s97 + $0x240] sm:$0xff]
              %148 = vst [vmem:[%s98 + $0xc0] sm:$0xff] %v147
              %v149 = vld [vmem:[%s97 + $0x248] sm:$0xff]
              %150 = vst [vmem:[%s98 + $0xc8] sm:$0xff] %v149
              %v151 = vld [vmem:[%s97 + $0x250] sm:$0xff]
              %152 = vst [vmem:[%s98 + $0xd0] sm:$0xff] %v151
              %v153 = vld [vmem:[%s97 + $0x258] sm:$0xff]
              %154 = vst [vmem:[%s98 + $0xd8] sm:$0xff] %v153
              %v155 = vld [vmem:[%s97 + $0x2a0] sm:$0xff]
              %156 = vst [vmem:[%s98 + $0xe0] sm:$0xff] %v155
              %v157 = vld [vmem:[%s97 + $0x2a8] sm:$0xff]
              %158 = vst [vmem:[%s98 + $0xe8] sm:$0xff] %v157
              %v159 = vld [vmem:[%s97 + $0x2b0] sm:$0xff]
              %160 = vst [vmem:[%s98 + $0xf0] sm:$0xff] %v159
              %v161 = vld [vmem:[%s97 + $0x2b8] sm:$0xff]
              %162 = vst [vmem:[%s98 + $0xf8] sm:$0xff] %v161
            $region33: #{tpu_custom_call.1} parent=27 // loop_footer
              %s96 = sadd.s32 1, %s92
            $region34: #{tpu_custom_call.1} parent=27 // loop_footer_branch
              %91 = sbr.rel target = $region30
            $region35: #{tpu_custom_call.1} parent=27 // loop_exit
              _
          $region28: #{tpu_custom_call.1} parent=12 // pred_fallthru
            _
          // Predicated region
          $region36: #{tpu_custom_call.1} parent=12 // pred_check
            _
          $region37: #{tpu_custom_call.1} parent=12 // pred_check_branch
            %164 = sbr.rel target = $region39
          $region38: #{tpu_custom_call.1} parent=12 // pred_region
            _
          $region39: #{tpu_custom_call.1} parent=12 // pred_fallthru
            _
        $region13: #{tpu_custom_call.1} parent=8 // pred_fallthru
          _
        // Predicated region
        $region14: #{tpu_custom_call.1} parent=8 // pred_check
          _
        $region15: #{tpu_custom_call.1} parent=8 // pred_check_branch
          %15 = sbr.rel target = $region17
        $region16: #{tpu_custom_call.1} parent=8 // pred_region
          loop: start=0, step=1, limit=1
          $region18: #{tpu_custom_call.1} parent=16 // loop_pre_header
            _
          $region19: #{tpu_custom_call.1} parent=16 // loop_header
            %s18 = sphi 0, %s22
            %p19 = scmp.ge.s32.totalorder %s18, 1
            %s23 = sphi %s0, %s0
            %s24 = sphi [#allocation5], [#allocation5]
          $region20: #{tpu_custom_call.1} parent=16 // loop_header_branch
            %21 = sbr.rel (%p19) target = $region24
          $region21: #{tpu_custom_call.1} parent=16 // loop_body
            %v25 = vld [vmem:[%s23] sm:$0xff]
            %26 = vst [vmem:[%s24] sm:$0xff] %v25
            %v27 = vld [vmem:[%s23 + $0x8] sm:$0xff]
            %28 = vst [vmem:[%s24 + $0x8] sm:$0xff] %v27
            %v29 = vld [vmem:[%s23 + $0x10] sm:$0xff]
            %30 = vst [vmem:[%s24 + $0x10] sm:$0xff] %v29
            %v31 = vld [vmem:[%s23 + $0x18] sm:$0xff]
            %32 = vst [vmem:[%s24 + $0x18] sm:$0xff] %v31
            %v33 = vld [vmem:[%s23 + $0x60] sm:$0xff]
            %34 = vst [vmem:[%s24 + $0x20] sm:$0xff] %v33
            %v35 = vld [vmem:[%s23 + $0x68] sm:$0xff]
            %36 = vst [vmem:[%s24 + $0x28] sm:$0xff] %v35
            %v37 = vld [vmem:[%s23 + $0x70] sm:$0xff]
            %38 = vst [vmem:[%s24 + $0x30] sm:$0xff] %v37
            %v39 = vld [vmem:[%s23 + $0x78] sm:$0xff]
            %40 = vst [vmem:[%s24 + $0x38] sm:$0xff] %v39
            %v41 = vld [vmem:[%s23 + $0xc0] sm:$0xff]
            %42 = vst [vmem:[%s24 + $0x40] sm:$0xff] %v41
            %v43 = vld [vmem:[%s23 + $0xc8] sm:$0xff]
            %44 = vst [vmem:[%s24 + $0x48] sm:$0xff] %v43
            %v45 = vld [vmem:[%s23 + $0xd0] sm:$0xff]
            %46 = vst [vmem:[%s24 + $0x50] sm:$0xff] %v45
            %v47 = vld [vmem:[%s23 + $0xd8] sm:$0xff]
            %48 = vst [vmem:[%s24 + $0x58] sm:$0xff] %v47
            %v49 = vld [vmem:[%s23 + $0x120] sm:$0xff]
            %50 = vst [vmem:[%s24 + $0x60] sm:$0xff] %v49
            %v51 = vld [vmem:[%s23 + $0x128] sm:$0xff]
            %52 = vst [vmem:[%s24 + $0x68] sm:$0xff] %v51
            %v53 = vld [vmem:[%s23 + $0x130] sm:$0xff]
            %54 = vst [vmem:[%s24 + $0x70] sm:$0xff] %v53
            %v55 = vld [vmem:[%s23 + $0x138] sm:$0xff]
            %56 = vst [vmem:[%s24 + $0x78] sm:$0xff] %v55
            %v57 = vld [vmem:[%s23 + $0x180] sm:$0xff]
            %58 = vst [vmem:[%s24 + $0x80] sm:$0xff] %v57
            %v59 = vld [vmem:[%s23 + $0x188] sm:$0xff]
            %60 = vst [vmem:[%s24 + $0x88] sm:$0xff] %v59
            %v61 = vld [vmem:[%s23 + $0x190] sm:$0xff]
            %62 = vst [vmem:[%s24 + $0x90] sm:$0xff] %v61
            %v63 = vld [vmem:[%s23 + $0x198] sm:$0xff]
            %64 = vst [vmem:[%s24 + $0x98] sm:$0xff] %v63
            %v65 = vld [vmem:[%s23 + $0x1e0] sm:$0xff]
            %66 = vst [vmem:[%s24 + $0xa0] sm:$0xff] %v65
            %v67 = vld [vmem:[%s23 + $0x1e8] sm:$0xff]
            %68 = vst [vmem:[%s24 + $0xa8] sm:$0xff] %v67
            %v69 = vld [vmem:[%s23 + $0x1f0] sm:$0xff]
            %70 = vst [vmem:[%s24 + $0xb0] sm:$0xff] %v69
            %v71 = vld [vmem:[%s23 + $0x1f8] sm:$0xff]
            %72 = vst [vmem:[%s24 + $0xb8] sm:$0xff] %v71
            %v73 = vld [vmem:[%s23 + $0x240] sm:$0xff]
            %74 = vst [vmem:[%s24 + $0xc0] sm:$0xff] %v73
            %v75 = vld [vmem:[%s23 + $0x248] sm:$0xff]
            %76 = vst [vmem:[%s24 + $0xc8] sm:$0xff] %v75
            %v77 = vld [vmem:[%s23 + $0x250] sm:$0xff]
            %78 = vst [vmem:[%s24 + $0xd0] sm:$0xff] %v77
            %v79 = vld [vmem:[%s23 + $0x258] sm:$0xff]
            %80 = vst [vmem:[%s24 + $0xd8] sm:$0xff] %v79
            %v81 = vld [vmem:[%s23 + $0x2a0] sm:$0xff]
            %82 = vst [vmem:[%s24 + $0xe0] sm:$0xff] %v81
            %v83 = vld [vmem:[%s23 + $0x2a8] sm:$0xff]
            %84 = vst [vmem:[%s24 + $0xe8] sm:$0xff] %v83
            %v85 = vld [vmem:[%s23 + $0x2b0] sm:$0xff]
            %86 = vst [vmem:[%s24 + $0xf0] sm:$0xff] %v85
            %v87 = vld [vmem:[%s23 + $0x2b8] sm:$0xff]
            %88 = vst [vmem:[%s24 + $0xf8] sm:$0xff] %v87
          $region22: #{tpu_custom_call.1} parent=16 // loop_footer
            %s22 = sadd.s32 1, %s18
          $region23: #{tpu_custom_call.1} parent=16 // loop_footer_branch
            %17 = sbr.rel target = $region19
          $region24: #{tpu_custom_call.1} parent=16 // loop_exit
            _
        $region17: #{tpu_custom_call.1} parent=8 // pred_fallthru
          _
      $region9: #{tpu_custom_call.1} parent=4 // pred_fallthru
        _
      %165 = vnop
    $region5: #{tpu_custom_call.1} parent=1 // pred_fallthru
      _
    // Predicated region
    $region40: #{tpu_custom_call.1} parent=1 // pred_check
      _
    $region41: #{tpu_custom_call.1} parent=1 // pred_check_branch
      %167 = sbr.rel (0) target = $region43
    $region42: #{tpu_custom_call.1} parent=1 // pred_region
      %s168 = scalar_lea.vmem %s1, 32
      // Predicated region
      $region44: #{tpu_custom_call.1} parent=42 // pred_check
        _
      $region45: #{tpu_custom_call.1} parent=42 // pred_check_branch
        %170 = sbr.rel (0) target = $region47
      $region46: #{tpu_custom_call.1} parent=42 // pred_region
        // Predicated region
        $region48: #{tpu_custom_call.1} parent=46 // pred_check
          _
        $region49: #{tpu_custom_call.1} parent=46 // pred_check_branch
          %172 = sbr.rel (0) target = $region51
        $region50: #{tpu_custom_call.1} parent=46 // pred_region
          // Predicated region
          $region63: #{tpu_custom_call.1} parent=50 // pred_check
            _
          $region64: #{tpu_custom_call.1} parent=50 // pred_check_branch
            %249 = sbr.rel (0) target = $region66
          $region65: #{tpu_custom_call.1} parent=50 // pred_region
            loop: start=0, step=1, limit=1
            $region67: #{tpu_custom_call.1} parent=65 // loop_pre_header
              _
            $region68: #{tpu_custom_call.1} parent=65 // loop_header
              %s251 = sphi 0, %s255
              %p252 = scmp.ge.s32.totalorder %s251, 1
              %s256 = sphi %s168, %s168
              %s257 = sphi [#allocation6], [#allocation6]
            $region69: #{tpu_custom_call.1} parent=65 // loop_header_branch
              %254 = sbr.rel (%p252) target = $region73
            $region70: #{tpu_custom_call.1} parent=65 // loop_body
              %v258 = vld [vmem:[%s256] sm:$0xff]
              %259 = vst [vmem:[%s257] sm:$0xff] %v258
              %v260 = vld [vmem:[%s256 + $0x8] sm:$0xff]
              %261 = vst [vmem:[%s257 + $0x8] sm:$0xff] %v260
              %v262 = vld [vmem:[%s256 + $0x10] sm:$0xff]
              %263 = vst [vmem:[%s257 + $0x10] sm:$0xff] %v262
              %v264 = vld [vmem:[%s256 + $0x18] sm:$0xff]
              %265 = vst [vmem:[%s257 + $0x18] sm:$0xff] %v264
              %v266 = vld [vmem:[%s256 + $0x60] sm:$0xff]
              %267 = vst [vmem:[%s257 + $0x20] sm:$0xff] %v266
              %v268 = vld [vmem:[%s256 + $0x68] sm:$0xff]
              %269 = vst [vmem:[%s257 + $0x28] sm:$0xff] %v268
              %v270 = vld [vmem:[%s256 + $0x70] sm:$0xff]
              %271 = vst [vmem:[%s257 + $0x30] sm:$0xff] %v270
              %v272 = vld [vmem:[%s256 + $0x78] sm:$0xff]
              %273 = vst [vmem:[%s257 + $0x38] sm:$0xff] %v272
              %v274 = vld [vmem:[%s256 + $0xc0] sm:$0xff]
              %275 = vst [vmem:[%s257 + $0x40] sm:$0xff] %v274
              %v276 = vld [vmem:[%s256 + $0xc8] sm:$0xff]
              %277 = vst [vmem:[%s257 + $0x48] sm:$0xff] %v276
              %v278 = vld [vmem:[%s256 + $0xd0] sm:$0xff]
              %279 = vst [vmem:[%s257 + $0x50] sm:$0xff] %v278
              %v280 = vld [vmem:[%s256 + $0xd8] sm:$0xff]
              %281 = vst [vmem:[%s257 + $0x58] sm:$0xff] %v280
              %v282 = vld [vmem:[%s256 + $0x120] sm:$0xff]
              %283 = vst [vmem:[%s257 + $0x60] sm:$0xff] %v282
              %v284 = vld [vmem:[%s256 + $0x128] sm:$0xff]
              %285 = vst [vmem:[%s257 + $0x68] sm:$0xff] %v284
              %v286 = vld [vmem:[%s256 + $0x130] sm:$0xff]
              %287 = vst [vmem:[%s257 + $0x70] sm:$0xff] %v286
              %v288 = vld [vmem:[%s256 + $0x138] sm:$0xff]
              %289 = vst [vmem:[%s257 + $0x78] sm:$0xff] %v288
              %v290 = vld [vmem:[%s256 + $0x180] sm:$0xff]
              %291 = vst [vmem:[%s257 + $0x80] sm:$0xff] %v290
              %v292 = vld [vmem:[%s256 + $0x188] sm:$0xff]
              %293 = vst [vmem:[%s257 + $0x88] sm:$0xff] %v292
              %v294 = vld [vmem:[%s256 + $0x190] sm:$0xff]
              %295 = vst [vmem:[%s257 + $0x90] sm:$0xff] %v294
              %v296 = vld [vmem:[%s256 + $0x198] sm:$0xff]
              %297 = vst [vmem:[%s257 + $0x98] sm:$0xff] %v296
              %v298 = vld [vmem:[%s256 + $0x1e0] sm:$0xff]
              %299 = vst [vmem:[%s257 + $0xa0] sm:$0xff] %v298
              %v300 = vld [vmem:[%s256 + $0x1e8] sm:$0xff]
              %301 = vst [vmem:[%s257 + $0xa8] sm:$0xff] %v300
              %v302 = vld [vmem:[%s256 + $0x1f0] sm:$0xff]
              %303 = vst [vmem:[%s257 + $0xb0] sm:$0xff] %v302
              %v304 = vld [vmem:[%s256 + $0x1f8] sm:$0xff]
              %305 = vst [vmem:[%s257 + $0xb8] sm:$0xff] %v304
              %v306 = vld [vmem:[%s256 + $0x240] sm:$0xff]
              %307 = vst [vmem:[%s257 + $0xc0] sm:$0xff] %v306
              %v308 = vld [vmem:[%s256 + $0x248] sm:$0xff]
              %309 = vst [vmem:[%s257 + $0xc8] sm:$0xff] %v308
              %v310 = vld [vmem:[%s256 + $0x250] sm:$0xff]
              %311 = vst [vmem:[%s257 + $0xd0] sm:$0xff] %v310
              %v312 = vld [vmem:[%s256 + $0x258] sm:$0xff]
              %313 = vst [vmem:[%s257 + $0xd8] sm:$0xff] %v312
              %v314 = vld [vmem:[%s256 + $0x2a0] sm:$0xff]
              %315 = vst [vmem:[%s257 + $0xe0] sm:$0xff] %v314
              %v316 = vld [vmem:[%s256 + $0x2a8] sm:$0xff]
              %317 = vst [vmem:[%s257 + $0xe8] sm:$0xff] %v316
              %v318 = vld [vmem:[%s256 + $0x2b0] sm:$0xff]
              %319 = vst [vmem:[%s257 + $0xf0] sm:$0xff] %v318
              %v320 = vld [vmem:[%s256 + $0x2b8] sm:$0xff]
              %321 = vst [vmem:[%s257 + $0xf8] sm:$0xff] %v320
            $region71: #{tpu_custom_call.1} parent=65 // loop_footer
              %s255 = sadd.s32 1, %s251
            $region72: #{tpu_custom_call.1} parent=65 // loop_footer_branch
              %250 = sbr.rel target = $region68
            $region73: #{tpu_custom_call.1} parent=65 // loop_exit
              _
          $region66: #{tpu_custom_call.1} parent=50 // pred_fallthru
            _
          // Predicated region
          $region74: #{tpu_custom_call.1} parent=50 // pred_check
            _
          $region75: #{tpu_custom_call.1} parent=50 // pred_check_branch
            %323 = sbr.rel target = $region77
          $region76: #{tpu_custom_call.1} parent=50 // pred_region
            _
          $region77: #{tpu_custom_call.1} parent=50 // pred_fallthru
            _
        $region51: #{tpu_custom_call.1} parent=46 // pred_fallthru
          _
        // Predicated region
        $region52: #{tpu_custom_call.1} parent=46 // pred_check
          _
        $region53: #{tpu_custom_call.1} parent=46 // pred_check_branch
          %174 = sbr.rel target = $region55
        $region54: #{tpu_custom_call.1} parent=46 // pred_region
          loop: start=0, step=1, limit=1
          $region56: #{tpu_custom_call.1} parent=54 // loop_pre_header
            _
          $region57: #{tpu_custom_call.1} parent=54 // loop_header
            %s177 = sphi 0, %s181
            %p178 = scmp.ge.s32.totalorder %s177, 1
            %s182 = sphi %s168, %s168
            %s183 = sphi [#allocation6], [#allocation6]
          $region58: #{tpu_custom_call.1} parent=54 // loop_header_branch
            %180 = sbr.rel (%p178) target = $region62
          $region59: #{tpu_custom_call.1} parent=54 // loop_body
            %v184 = vld [vmem:[%s182] sm:$0xff]
            %185 = vst [vmem:[%s183] sm:$0xff] %v184
            %v186 = vld [vmem:[%s182 + $0x8] sm:$0xff]
            %187 = vst [vmem:[%s183 + $0x8] sm:$0xff] %v186
            %v188 = vld [vmem:[%s182 + $0x10] sm:$0xff]
            %189 = vst [vmem:[%s183 + $0x10] sm:$0xff] %v188
            %v190 = vld [vmem:[%s182 + $0x18] sm:$0xff]
            %191 = vst [vmem:[%s183 + $0x18] sm:$0xff] %v190
            %v192 = vld [vmem:[%s182 + $0x60] sm:$0xff]
            %193 = vst [vmem:[%s183 + $0x20] sm:$0xff] %v192
            %v194 = vld [vmem:[%s182 + $0x68] sm:$0xff]
            %195 = vst [vmem:[%s183 + $0x28] sm:$0xff] %v194
            %v196 = vld [vmem:[%s182 + $0x70] sm:$0xff]
            %197 = vst [vmem:[%s183 + $0x30] sm:$0xff] %v196
            %v198 = vld [vmem:[%s182 + $0x78] sm:$0xff]
            %199 = vst [vmem:[%s183 + $0x38] sm:$0xff] %v198
            %v200 = vld [vmem:[%s182 + $0xc0] sm:$0xff]
            %201 = vst [vmem:[%s183 + $0x40] sm:$0xff] %v200
            %v202 = vld [vmem:[%s182 + $0xc8] sm:$0xff]
            %203 = vst [vmem:[%s183 + $0x48] sm:$0xff] %v202
            %v204 = vld [vmem:[%s182 + $0xd0] sm:$0xff]
            %205 = vst [vmem:[%s183 + $0x50] sm:$0xff] %v204
            %v206 = vld [vmem:[%s182 + $0xd8] sm:$0xff]
            %207 = vst [vmem:[%s183 + $0x58] sm:$0xff] %v206
            %v208 = vld [vmem:[%s182 + $0x120] sm:$0xff]
            %209 = vst [vmem:[%s183 + $0x60] sm:$0xff] %v208
            %v210 = vld [vmem:[%s182 + $0x128] sm:$0xff]
            %211 = vst [vmem:[%s183 + $0x68] sm:$0xff] %v210
            %v212 = vld [vmem:[%s182 + $0x130] sm:$0xff]
            %213 = vst [vmem:[%s183 + $0x70] sm:$0xff] %v212
            %v214 = vld [vmem:[%s182 + $0x138] sm:$0xff]
            %215 = vst [vmem:[%s183 + $0x78] sm:$0xff] %v214
            %v216 = vld [vmem:[%s182 + $0x180] sm:$0xff]
            %217 = vst [vmem:[%s183 + $0x80] sm:$0xff] %v216
            %v218 = vld [vmem:[%s182 + $0x188] sm:$0xff]
            %219 = vst [vmem:[%s183 + $0x88] sm:$0xff] %v218
            %v220 = vld [vmem:[%s182 + $0x190] sm:$0xff]
            %221 = vst [vmem:[%s183 + $0x90] sm:$0xff] %v220
            %v222 = vld [vmem:[%s182 + $0x198] sm:$0xff]
            %223 = vst [vmem:[%s183 + $0x98] sm:$0xff] %v222
            %v224 = vld [vmem:[%s182 + $0x1e0] sm:$0xff]
            %225 = vst [vmem:[%s183 + $0xa0] sm:$0xff] %v224
            %v226 = vld [vmem:[%s182 + $0x1e8] sm:$0xff]
            %227 = vst [vmem:[%s183 + $0xa8] sm:$0xff] %v226
            %v228 = vld [vmem:[%s182 + $0x1f0] sm:$0xff]
            %229 = vst [vmem:[%s183 + $0xb0] sm:$0xff] %v228
            %v230 = vld [vmem:[%s182 + $0x1f8] sm:$0xff]
            %231 = vst [vmem:[%s183 + $0xb8] sm:$0xff] %v230
            %v232 = vld [vmem:[%s182 + $0x240] sm:$0xff]
            %233 = vst [vmem:[%s183 + $0xc0] sm:$0xff] %v232
            %v234 = vld [vmem:[%s182 + $0x248] sm:$0xff]
            %235 = vst [vmem:[%s183 + $0xc8] sm:$0xff] %v234
            %v236 = vld [vmem:[%s182 + $0x250] sm:$0xff]
            %237 = vst [vmem:[%s183 + $0xd0] sm:$0xff] %v236
            %v238 = vld [vmem:[%s182 + $0x258] sm:$0xff]
            %239 = vst [vmem:[%s183 + $0xd8] sm:$0xff] %v238
            %v240 = vld [vmem:[%s182 + $0x2a0] sm:$0xff]
            %241 = vst [vmem:[%s183 + $0xe0] sm:$0xff] %v240
            %v242 = vld [vmem:[%s182 + $0x2a8] sm:$0xff]
            %243 = vst [vmem:[%s183 + $0xe8] sm:$0xff] %v242
            %v244 = vld [vmem:[%s182 + $0x2b0] sm:$0xff]
            %245 = vst [vmem:[%s183 + $0xf0] sm:$0xff] %v244
            %v246 = vld [vmem:[%s182 + $0x2b8] sm:$0xff]
            %247 = vst [vmem:[%s183 + $0xf8] sm:$0xff] %v246
          $region60: #{tpu_custom_call.1} parent=54 // loop_footer
            %s181 = sadd.s32 1, %s177
          $region61: #{tpu_custom_call.1} parent=54 // loop_footer_branch
            %176 = sbr.rel target = $region57
          $region62: #{tpu_custom_call.1} parent=54 // loop_exit
            _
        $region55: #{tpu_custom_call.1} parent=46 // pred_fallthru
          _
      $region47: #{tpu_custom_call.1} parent=42 // pred_fallthru
        _
      %324 = vnop
    $region43: #{tpu_custom_call.1} parent=1 // pred_fallthru
      _
    // Predicated region
    $region78: #{tpu_custom_call.1} parent=1 // pred_check
      _
    $region79: #{tpu_custom_call.1} parent=1 // pred_check_branch
      %326 = sbr.rel (0) target = $region81
    $region80: #{tpu_custom_call.1} parent=1 // pred_region
      %s327 = scalar_lea.vmem %s2, 64
      // Predicated region
      $region82: #{tpu_custom_call.1} parent=80 // pred_check
        _
      $region83: #{tpu_custom_call.1} parent=80 // pred_check_branch
        %329 = sbr.rel (0) target = $region85
      $region84: #{tpu_custom_call.1} parent=80 // pred_region
        // Predicated region
        $region86: #{tpu_custom_call.1} parent=84 // pred_check
          _
        $region87: #{tpu_custom_call.1} parent=84 // pred_check_branch
          %331 = sbr.rel (0) target = $region89
        $region88: #{tpu_custom_call.1} parent=84 // pred_region
          // Predicated region
          $region101: #{tpu_custom_call.1} parent=88 // pred_check
            _
          $region102: #{tpu_custom_call.1} parent=88 // pred_check_branch
            %408 = sbr.rel (0) target = $region104
          $region103: #{tpu_custom_call.1} parent=88 // pred_region
            loop: start=0, step=1, limit=1
            $region105: #{tpu_custom_call.1} parent=103 // loop_pre_header
              _
            $region106: #{tpu_custom_call.1} parent=103 // loop_header
              %s410 = sphi 0, %s414
              %p411 = scmp.ge.s32.totalorder %s410, 1
              %s415 = sphi %s327, %s327
              %s416 = sphi [#allocation7], [#allocation7]
            $region107: #{tpu_custom_call.1} parent=103 // loop_header_branch
              %413 = sbr.rel (%p411) target = $region111
            $region108: #{tpu_custom_call.1} parent=103 // loop_body
              %v417 = vld [vmem:[%s415] sm:$0xff]
              %418 = vst [vmem:[%s416] sm:$0xff] %v417
              %v419 = vld [vmem:[%s415 + $0x8] sm:$0xff]
              %420 = vst [vmem:[%s416 + $0x8] sm:$0xff] %v419
              %v421 = vld [vmem:[%s415 + $0x10] sm:$0xff]
              %422 = vst [vmem:[%s416 + $0x10] sm:$0xff] %v421
              %v423 = vld [vmem:[%s415 + $0x18] sm:$0xff]
              %424 = vst [vmem:[%s416 + $0x18] sm:$0xff] %v423
              %v425 = vld [vmem:[%s415 + $0x60] sm:$0xff]
              %426 = vst [vmem:[%s416 + $0x20] sm:$0xff] %v425
              %v427 = vld [vmem:[%s415 + $0x68] sm:$0xff]
              %428 = vst [vmem:[%s416 + $0x28] sm:$0xff] %v427
              %v429 = vld [vmem:[%s415 + $0x70] sm:$0xff]
              %430 = vst [vmem:[%s416 + $0x30] sm:$0xff] %v429
              %v431 = vld [vmem:[%s415 + $0x78] sm:$0xff]
              %432 = vst [vmem:[%s416 + $0x38] sm:$0xff] %v431
              %v433 = vld [vmem:[%s415 + $0xc0] sm:$0xff]
              %434 = vst [vmem:[%s416 + $0x40] sm:$0xff] %v433
              %v435 = vld [vmem:[%s415 + $0xc8] sm:$0xff]
              %436 = vst [vmem:[%s416 + $0x48] sm:$0xff] %v435
              %v437 = vld [vmem:[%s415 + $0xd0] sm:$0xff]
              %438 = vst [vmem:[%s416 + $0x50] sm:$0xff] %v437
              %v439 = vld [vmem:[%s415 + $0xd8] sm:$0xff]
              %440 = vst [vmem:[%s416 + $0x58] sm:$0xff] %v439
              %v441 = vld [vmem:[%s415 + $0x120] sm:$0xff]
              %442 = vst [vmem:[%s416 + $0x60] sm:$0xff] %v441
              %v443 = vld [vmem:[%s415 + $0x128] sm:$0xff]
              %444 = vst [vmem:[%s416 + $0x68] sm:$0xff] %v443
              %v445 = vld [vmem:[%s415 + $0x130] sm:$0xff]
              %446 = vst [vmem:[%s416 + $0x70] sm:$0xff] %v445
              %v447 = vld [vmem:[%s415 + $0x138] sm:$0xff]
              %448 = vst [vmem:[%s416 + $0x78] sm:$0xff] %v447
              %v449 = vld [vmem:[%s415 + $0x180] sm:$0xff]
              %450 = vst [vmem:[%s416 + $0x80] sm:$0xff] %v449
              %v451 = vld [vmem:[%s415 + $0x188] sm:$0xff]
              %452 = vst [vmem:[%s416 + $0x88] sm:$0xff] %v451
              %v453 = vld [vmem:[%s415 + $0x190] sm:$0xff]
              %454 = vst [vmem:[%s416 + $0x90] sm:$0xff] %v453
              %v455 = vld [vmem:[%s415 + $0x198] sm:$0xff]
              %456 = vst [vmem:[%s416 + $0x98] sm:$0xff] %v455
              %v457 = vld [vmem:[%s415 + $0x1e0] sm:$0xff]
              %458 = vst [vmem:[%s416 + $0xa0] sm:$0xff] %v457
              %v459 = vld [vmem:[%s415 + $0x1e8] sm:$0xff]
              %460 = vst [vmem:[%s416 + $0xa8] sm:$0xff] %v459
              %v461 = vld [vmem:[%s415 + $0x1f0] sm:$0xff]
              %462 = vst [vmem:[%s416 + $0xb0] sm:$0xff] %v461
              %v463 = vld [vmem:[%s415 + $0x1f8] sm:$0xff]
              %464 = vst [vmem:[%s416 + $0xb8] sm:$0xff] %v463
              %v465 = vld [vmem:[%s415 + $0x240] sm:$0xff]
              %466 = vst [vmem:[%s416 + $0xc0] sm:$0xff] %v465
              %v467 = vld [vmem:[%s415 + $0x248] sm:$0xff]
              %468 = vst [vmem:[%s416 + $0xc8] sm:$0xff] %v467
              %v469 = vld [vmem:[%s415 + $0x250] sm:$0xff]
              %470 = vst [vmem:[%s416 + $0xd0] sm:$0xff] %v469
              %v471 = vld [vmem:[%s415 + $0x258] sm:$0xff]
              %472 = vst [vmem:[%s416 + $0xd8] sm:$0xff] %v471
              %v473 = vld [vmem:[%s415 + $0x2a0] sm:$0xff]
              %474 = vst [vmem:[%s416 + $0xe0] sm:$0xff] %v473
              %v475 = vld [vmem:[%s415 + $0x2a8] sm:$0xff]
              %476 = vst [vmem:[%s416 + $0xe8] sm:$0xff] %v475
              %v477 = vld [vmem:[%s415 + $0x2b0] sm:$0xff]
              %478 = vst [vmem:[%s416 + $0xf0] sm:$0xff] %v477
              %v479 = vld [vmem:[%s415 + $0x2b8] sm:$0xff]
              %480 = vst [vmem:[%s416 + $0xf8] sm:$0xff] %v479
            $region109: #{tpu_custom_call.1} parent=103 // loop_footer
              %s414 = sadd.s32 1, %s410
            $region110: #{tpu_custom_call.1} parent=103 // loop_footer_branch
              %409 = sbr.rel target = $region106
            $region111: #{tpu_custom_call.1} parent=103 // loop_exit
              _
          $region104: #{tpu_custom_call.1} parent=88 // pred_fallthru
            _
          // Predicated region
          $region112: #{tpu_custom_call.1} parent=88 // pred_check
            _
          $region113: #{tpu_custom_call.1} parent=88 // pred_check_branch
            %482 = sbr.rel target = $region115
          $region114: #{tpu_custom_call.1} parent=88 // pred_region
            _
          $region115: #{tpu_custom_call.1} parent=88 // pred_fallthru
            _
        $region89: #{tpu_custom_call.1} parent=84 // pred_fallthru
          _
        // Predicated region
        $region90: #{tpu_custom_call.1} parent=84 // pred_check
          _
        $region91: #{tpu_custom_call.1} parent=84 // pred_check_branch
          %333 = sbr.rel target = $region93
        $region92: #{tpu_custom_call.1} parent=84 // pred_region
          loop: start=0, step=1, limit=1
          $region94: #{tpu_custom_call.1} parent=92 // loop_pre_header
            _
          $region95: #{tpu_custom_call.1} parent=92 // loop_header
            %s336 = sphi 0, %s340
            %p337 = scmp.ge.s32.totalorder %s336, 1
            %s341 = sphi %s327, %s327
            %s342 = sphi [#allocation7], [#allocation7]
          $region96: #{tpu_custom_call.1} parent=92 // loop_header_branch
            %339 = sbr.rel (%p337) target = $region100
          $region97: #{tpu_custom_call.1} parent=92 // loop_body
            %v343 = vld [vmem:[%s341] sm:$0xff]
            %344 = vst [vmem:[%s342] sm:$0xff] %v343
            %v345 = vld [vmem:[%s341 + $0x8] sm:$0xff]
            %346 = vst [vmem:[%s342 + $0x8] sm:$0xff] %v345
            %v347 = vld [vmem:[%s341 + $0x10] sm:$0xff]
            %348 = vst [vmem:[%s342 + $0x10] sm:$0xff] %v347
            %v349 = vld [vmem:[%s341 + $0x18] sm:$0xff]
            %350 = vst [vmem:[%s342 + $0x18] sm:$0xff] %v349
            %v351 = vld [vmem:[%s341 + $0x60] sm:$0xff]
            %352 = vst [vmem:[%s342 + $0x20] sm:$0xff] %v351
            %v353 = vld [vmem:[%s341 + $0x68] sm:$0xff]
            %354 = vst [vmem:[%s342 + $0x28] sm:$0xff] %v353
            %v355 = vld [vmem:[%s341 + $0x70] sm:$0xff]
            %356 = vst [vmem:[%s342 + $0x30] sm:$0xff] %v355
            %v357 = vld [vmem:[%s341 + $0x78] sm:$0xff]
            %358 = vst [vmem:[%s342 + $0x38] sm:$0xff] %v357
            %v359 = vld [vmem:[%s341 + $0xc0] sm:$0xff]
            %360 = vst [vmem:[%s342 + $0x40] sm:$0xff] %v359
            %v361 = vld [vmem:[%s341 + $0xc8] sm:$0xff]
            %362 = vst [vmem:[%s342 + $0x48] sm:$0xff] %v361
            %v363 = vld [vmem:[%s341 + $0xd0] sm:$0xff]
            %364 = vst [vmem:[%s342 + $0x50] sm:$0xff] %v363
            %v365 = vld [vmem:[%s341 + $0xd8] sm:$0xff]
            %366 = vst [vmem:[%s342 + $0x58] sm:$0xff] %v365
            %v367 = vld [vmem:[%s341 + $0x120] sm:$0xff]
            %368 = vst [vmem:[%s342 + $0x60] sm:$0xff] %v367
            %v369 = vld [vmem:[%s341 + $0x128] sm:$0xff]
            %370 = vst [vmem:[%s342 + $0x68] sm:$0xff] %v369
            %v371 = vld [vmem:[%s341 + $0x130] sm:$0xff]
            %372 = vst [vmem:[%s342 + $0x70] sm:$0xff] %v371
            %v373 = vld [vmem:[%s341 + $0x138] sm:$0xff]
            %374 = vst [vmem:[%s342 + $0x78] sm:$0xff] %v373
            %v375 = vld [vmem:[%s341 + $0x180] sm:$0xff]
            %376 = vst [vmem:[%s342 + $0x80] sm:$0xff] %v375
            %v377 = vld [vmem:[%s341 + $0x188] sm:$0xff]
            %378 = vst [vmem:[%s342 + $0x88] sm:$0xff] %v377
            %v379 = vld [vmem:[%s341 + $0x190] sm:$0xff]
            %380 = vst [vmem:[%s342 + $0x90] sm:$0xff] %v379
            %v381 = vld [vmem:[%s341 + $0x198] sm:$0xff]
            %382 = vst [vmem:[%s342 + $0x98] sm:$0xff] %v381
            %v383 = vld [vmem:[%s341 + $0x1e0] sm:$0xff]
            %384 = vst [vmem:[%s342 + $0xa0] sm:$0xff] %v383
            %v385 = vld [vmem:[%s341 + $0x1e8] sm:$0xff]
            %386 = vst [vmem:[%s342 + $0xa8] sm:$0xff] %v385
            %v387 = vld [vmem:[%s341 + $0x1f0] sm:$0xff]
            %388 = vst [vmem:[%s342 + $0xb0] sm:$0xff] %v387
            %v389 = vld [vmem:[%s341 + $0x1f8] sm:$0xff]
            %390 = vst [vmem:[%s342 + $0xb8] sm:$0xff] %v389
            %v391 = vld [vmem:[%s341 + $0x240] sm:$0xff]
            %392 = vst [vmem:[%s342 + $0xc0] sm:$0xff] %v391
            %v393 = vld [vmem:[%s341 + $0x248] sm:$0xff]
            %394 = vst [vmem:[%s342 + $0xc8] sm:$0xff] %v393
            %v395 = vld [vmem:[%s341 + $0x250] sm:$0xff]
            %396 = vst [vmem:[%s342 + $0xd0] sm:$0xff] %v395
            %v397 = vld [vmem:[%s341 + $0x258] sm:$0xff]
            %398 = vst [vmem:[%s342 + $0xd8] sm:$0xff] %v397
            %v399 = vld [vmem:[%s341 + $0x2a0] sm:$0xff]
            %400 = vst [vmem:[%s342 + $0xe0] sm:$0xff] %v399
            %v401 = vld [vmem:[%s341 + $0x2a8] sm:$0xff]
            %402 = vst [vmem:[%s342 + $0xe8] sm:$0xff] %v401
            %v403 = vld [vmem:[%s341 + $0x2b0] sm:$0xff]
            %404 = vst [vmem:[%s342 + $0xf0] sm:$0xff] %v403
            %v405 = vld [vmem:[%s341 + $0x2b8] sm:$0xff]
            %406 = vst [vmem:[%s342 + $0xf8] sm:$0xff] %v405
          $region98: #{tpu_custom_call.1} parent=92 // loop_footer
            %s340 = sadd.s32 1, %s336
          $region99: #{tpu_custom_call.1} parent=92 // loop_footer_branch
            %335 = sbr.rel target = $region95
          $region100: #{tpu_custom_call.1} parent=92 // loop_exit
            _
        $region93: #{tpu_custom_call.1} parent=84 // pred_fallthru
          _
      $region85: #{tpu_custom_call.1} parent=80 // pred_fallthru
        _
      %483 = vnop
    $region81: #{tpu_custom_call.1} parent=1 // pred_fallthru
      _
    // Predicated region
    $region116: #{tpu_custom_call.1} parent=1 // pred_check
      _
    $region117: #{tpu_custom_call.1} parent=1 // pred_check_branch
      %485 = sbr.rel (0) target = $region119
    $region118: #{tpu_custom_call.1} parent=1 // pred_region
      _
    $region119: #{tpu_custom_call.1} parent=1 // pred_fallthru
      _
    // Predicated region
    $region120: #{tpu_custom_call.1} parent=1 // pred_check
      _
    $region121: #{tpu_custom_call.1} parent=1 // pred_check_branch
      %487 = sbr.rel (0) target = $region123
    $region122: #{tpu_custom_call.1} parent=1 // pred_region
      _
    $region123: #{tpu_custom_call.1} parent=1 // pred_fallthru
      _
    // Predicated region
    $region124: #{tpu_custom_call.1} parent=1 // pred_check
      _
    $region125: #{tpu_custom_call.1} parent=1 // pred_check_branch
      %489 = sbr.rel (0) target = $region127
    $region126: #{tpu_custom_call.1} parent=1 // pred_region
      _
    $region127: #{tpu_custom_call.1} parent=1 // pred_fallthru
      _
    %p490 = scmp.eq.s32.totalorder 0, 0
    // Predicated region
    $region128: #{tpu_custom_call.1} parent=1 // pred_check
      %p491 = pneg %p490
    $region129: #{tpu_custom_call.1} parent=1 // pred_check_branch
      %493 = sbr.rel (%p491) target = $region131
    $region130: #{tpu_custom_call.1} parent=1 // pred_region
      %vm494 = vcmask 122880
      %495 = vst.msk [vmem:[#allocation2] sm:$0x1] %vm494, -inf
      %496 = vst.msk [vmem:[#allocation2 + $0x1] sm:$0x1] %vm494, -inf
      %497 = vst.msk [vmem:[#allocation2 + $0x2] sm:$0x1] %vm494, -inf
      %498 = vst.msk [vmem:[#allocation2 + $0x3] sm:$0x1] %vm494, -inf
      %499 = vst.msk [vmem:[#allocation2 + $0x4] sm:$0x1] %vm494, -inf
      %500 = vst.msk [vmem:[#allocation2 + $0x5] sm:$0x1] %vm494, -inf
      %501 = vst.msk [vmem:[#allocation2 + $0x6] sm:$0x1] %vm494, -inf
      %502 = vst.msk [vmem:[#allocation2 + $0x7] sm:$0x1] %vm494, -inf
      %503 = vst.msk [vmem:[#allocation3] sm:$0x1] %vm494, 0.0
      %504 = vst.msk [vmem:[#allocation3 + $0x1] sm:$0x1] %vm494, 0.0
      %505 = vst.msk [vmem:[#allocation3 + $0x2] sm:$0x1] %vm494, 0.0
      %506 = vst.msk [vmem:[#allocation3 + $0x3] sm:$0x1] %vm494, 0.0
      %507 = vst.msk [vmem:[#allocation3 + $0x4] sm:$0x1] %vm494, 0.0
      %508 = vst.msk [vmem:[#allocation3 + $0x5] sm:$0x1] %vm494, 0.0
      %509 = vst.msk [vmem:[#allocation3 + $0x6] sm:$0x1] %vm494, 0.0
      %510 = vst.msk [vmem:[#allocation3 + $0x7] sm:$0x1] %vm494, 0.0
      %vm511 = vcmask 130048
      %512 = vst.msk [vmem:[#allocation4] sm:$0xff] %vm511, 0.0
      %513 = vst.msk [vmem:[#allocation4 + $0x8] sm:$0xff] %vm511, 0.0
      %514 = vst.msk [vmem:[#allocation4 + $0x10] sm:$0xff] %vm511, 0.0
      %515 = vst.msk [vmem:[#allocation4 + $0x18] sm:$0xff] %vm511, 0.0
      %516 = vst.msk [vmem:[#allocation4 + $0x20] sm:$0xff] %vm511, 0.0
      %517 = vst.msk [vmem:[#allocation4 + $0x28] sm:$0xff] %vm511, 0.0
      %518 = vst.msk [vmem:[#allocation4 + $0x30] sm:$0xff] %vm511, 0.0
      %519 = vst.msk [vmem:[#allocation4 + $0x38] sm:$0xff] %vm511, 0.0
      %520 = vst.msk [vmem:[#allocation4 + $0x40] sm:$0xff] %vm511, 0.0
      %521 = vst.msk [vmem:[#allocation4 + $0x48] sm:$0xff] %vm511, 0.0
      %522 = vst.msk [vmem:[#allocation4 + $0x50] sm:$0xff] %vm511, 0.0
      %523 = vst.msk [vmem:[#allocation4 + $0x58] sm:$0xff] %vm511, 0.0
      %524 = vst.msk [vmem:[#allocation4 + $0x60] sm:$0xff] %vm511, 0.0
      %525 = vst.msk [vmem:[#allocation4 + $0x68] sm:$0xff] %vm511, 0.0
      %526 = vst.msk [vmem:[#allocation4 + $0x70] sm:$0xff] %vm511, 0.0
      %527 = vst.msk [vmem:[#allocation4 + $0x78] sm:$0xff] %vm511, 0.0
      %528 = vst.msk [vmem:[#allocation4 + $0x80] sm:$0xff] %vm511, 0.0
      %529 = vst.msk [vmem:[#allocation4 + $0x88] sm:$0xff] %vm511, 0.0
      %530 = vst.msk [vmem:[#allocation4 + $0x90] sm:$0xff] %vm511, 0.0
      %531 = vst.msk [vmem:[#allocation4 + $0x98] sm:$0xff] %vm511, 0.0
      %532 = vst.msk [vmem:[#allocation4 + $0xa0] sm:$0xff] %vm511, 0.0
      %533 = vst.msk [vmem:[#allocation4 + $0xa8] sm:$0xff] %vm511, 0.0
      %534 = vst.msk [vmem:[#allocation4 + $0xb0] sm:$0xff] %vm511, 0.0
      %535 = vst.msk [vmem:[#allocation4 + $0xb8] sm:$0xff] %vm511, 0.0
      %536 = vst.msk [vmem:[#allocation4 + $0xc0] sm:$0xff] %vm511, 0.0
      %537 = vst.msk [vmem:[#allocation4 + $0xc8] sm:$0xff] %vm511, 0.0
      %538 = vst.msk [vmem:[#allocation4 + $0xd0] sm:$0xff] %vm511, 0.0
      %539 = vst.msk [vmem:[#allocation4 + $0xd8] sm:$0xff] %vm511, 0.0
      %540 = vst.msk [vmem:[#allocation4 + $0xe0] sm:$0xff] %vm511, 0.0
      %541 = vst.msk [vmem:[#allocation4 + $0xe8] sm:$0xff] %vm511, 0.0
      %542 = vst.msk [vmem:[#allocation4 + $0xf0] sm:$0xff] %vm511, 0.0
      %543 = vst.msk [vmem:[#allocation4 + $0xf8] sm:$0xff] %vm511, 0.0
    $region131: #{tpu_custom_call.1} parent=1 // pred_fallthru
      _
    %v544 = vld [vmem:[#allocation5] sm:$0xff]
    %v545 = vld [vmem:[#allocation5 + $0x8] sm:$0xff]
    %v546 = vld [vmem:[#allocation5 + $0x10] sm:$0xff]
    %v547 = vld [vmem:[#allocation5 + $0x18] sm:$0xff]
    %v548 = vmul.f32 %v544, 0.17677669
    %v549 = vmul.f32 %v545, 0.17677669
    %v550 = vmul.f32 %v546, 0.17677669
    %v551 = vmul.f32 %v547, 0.17677669
    %v552 = vld [vmem:[#allocation6] sm:$0xff]
    %v553 = vld [vmem:[#allocation6 + $0x8] sm:$0xff]
    %v554 = vld [vmem:[#allocation6 + $0x10] sm:$0xff]
    %v555 = vld [vmem:[#allocation6 + $0x18] sm:$0xff]
    %556 = vxpose.xlu0.b32.start [1/16] %v552, 128
    %557 = vxpose.xlu0.b32.cont [2/16] %v553, 128
    %558 = vxpose.xlu0.b32.cont [3/16] %v554, 128
    %559 = vxpose.xlu0.b32.cont [4/16] %v555, 128
    %560 = vxpose.xlu0.b32.cont [5/16] 0.0, 128
    %561 = vxpose.xlu0.b32.cont [6/16] 0.0, 128
    %562 = vxpose.xlu0.b32.cont [7/16] 0.0, 128
    %563 = vxpose.xlu0.b32.cont [8/16] 0.0, 128
    %564 = vxpose.xlu0.b32.cont [9/16] 0.0, 128
    %565 = vxpose.xlu0.b32.cont [10/16] 0.0, 128
    %566 = vxpose.xlu0.b32.cont [11/16] 0.0, 128
    %567 = vxpose.xlu0.b32.cont [12/16] 0.0, 128
    %568 = vxpose.xlu0.b32.cont [13/16] 0.0, 128
    %569 = vxpose.xlu0.b32.cont [14/16] 0.0, 128
    %570 = vxpose.xlu0.b32.cont [15/16] 0.0, 128
    %571 = vxpose.xlu0.b32.end [16/16] 0.0, 128
    %v572 = vpop.trf.xlu0
    %v573 = vpop.trf.xlu0
    %v574 = vpop.trf.xlu0
    %v575 = vpop.trf.xlu0
    %v576 = vpop.trf.xlu0
    %v577 = vpop.trf.xlu0
    %v578 = vpop.trf.xlu0
    %v579 = vpop.trf.xlu0
    %v580 = vpop.trf.xlu0
    %v581 = vpop.trf.xlu0
    %v582 = vpop.trf.xlu0
    %v583 = vpop.trf.xlu0
    %v584 = vpop.trf.xlu0
    %v585 = vpop.trf.xlu0
    %v586 = vpop.trf.xlu0
    %v587 = vpop.trf.xlu0
    %vm588 = vcmask 261120
    %v590 = vsel %vm588, %v572, 0
    %v593 = vsel %vm588, %v573, 0
    %595 = vmatprep.subr.mxu0 0.0
    %596 = vmatpush1.msra.mxu0 %v548
    %597 = vmatprep.subr.mxu0 0.0
    %598 = vmatpush1.msra.mxu0 %v549
    %599 = vmatprep.subr.mxu0 0.0
    %600 = vmatpush1.msra.mxu0 %v550
    %601 = vmatprep.subr.mxu0 0.0
    %602 = vmatpush1.msra.mxu0 %v551
    %603 = vmatprep.subr.mxu0 0.0
    %604 = vmatpush1.msra.mxu0 0.0
    %605 = vmatprep.subr.mxu0 0.0
    %606 = vmatpush1.msra.mxu0 0.0
    %607 = vmatprep.subr.mxu0 0.0
    %608 = vmatpush1.msra.mxu0 0.0
    %609 = vmatprep.subr.mxu0 0.0
    %610 = vmatpush1.msra.mxu0 0.0
    %611 = vmatprep.subr.mxu0 0.0
    %612 = vmatpush1.msra.mxu0 0.0
    %613 = vmatprep.subr.mxu0 0.0
    %614 = vmatpush1.msra.mxu0 0.0
    %615 = vmatprep.subr.mxu0 0.0
    %616 = vmatpush1.msra.mxu0 0.0
    %617 = vmatprep.subr.mxu0 0.0
    %618 = vmatpush1.msra.mxu0 0.0
    %619 = vmatprep.subr.mxu0 0.0
    %620 = vmatpush1.msra.mxu0 0.0
    %621 = vmatprep.subr.mxu0 0.0
    %622 = vmatpush1.msra.mxu0 0.0
    %623 = vmatprep.subr.mxu0 0.0
    %624 = vmatpush1.msra.mxu0 0.0
    %625 = vmatprep.subr.mxu0 0.0
    %626 = vmatpush1.msra.mxu0 0.0
    %627 = vmatprep.subr.mxu0 0.0
    %628 = vmatpush1.msra.mxu0 0.0
    %629 = vmatprep.subr.mxu0 0.0
    %630 = vmatpush1.msra.mxu0 0.0
    %631 = vmatprep.subr.mxu0 0.0
    %632 = vmatpush1.msra.mxu0 0.0
    %633 = vmatprep.subr.mxu0 0.0
    %634 = vmatpush1.msra.mxu0 0.0
    %635 = vmatprep.subr.mxu0 0.0
    %636 = vmatpush1.msra.mxu0 0.0
    %637 = vmatprep.subr.mxu0 0.0
    %638 = vmatpush1.msra.mxu0 0.0
    %639 = vmatprep.subr.mxu0 0.0
    %640 = vmatpush1.msra.mxu0 0.0
    %641 = vmatprep.subr.mxu0 0.0
    %642 = vmatpush1.msra.mxu0 0.0
    %643 = vmatprep.subr.mxu0 0.0
    %644 = vmatpush1.msra.mxu0 0.0
    %645 = vmatprep.subr.mxu0 0.0
    %646 = vmatpush1.msra.mxu0 0.0
    %647 = vmatprep.subr.mxu0 0.0
    %648 = vmatpush1.msra.mxu0 0.0
    %649 = vmatprep.subr.mxu0 0.0
    %650 = vmatpush1.msra.mxu0 0.0
    %651 = vmatprep.subr.mxu0 0.0
    %652 = vmatpush1.msra.mxu0 0.0
    %653 = vmatprep.subr.mxu0 0.0
    %654 = vmatpush1.msra.mxu0 0.0
    %655 = vmatprep.subr.mxu0 0.0
    %656 = vmatpush1.msra.mxu0 0.0
    %657 = vmatprep.subr.mxu0 0.0
    %658 = vmatpush1.msra.mxu0 0.0
    %659 = vmatprep.mubr.f32.mxu0 0.0
    %660 = vmatmul.mubr.f32.gmra.mrb[0].mxu0 %v590
    %v661 = vpop.f32.mrb[0].mxu0
    %v662 = vadd.f32 0.0, %v661
    %v663 = vpop.f32.mrb[0].mxu0
    %664 = vmatprep.mubr.f32.mxu0 0.0
    %665 = vmatmul.mubr.f32.gmra.mrb[0].mxu0 %v593
    %v666 = vpop.f32.mrb[0].mxu0
    %v667 = vadd.f32 0.0, %v666
    %v668 = vpop.f32.mrb[0].mxu0
    %669 = vdwg.mxu0
    %v670 = vld [vmem:[#allocation2] sm:$0x1]
    %vm671 = vcmask 130048
    %v672 = vsel %vm671, %v662, -inf
    %v673 = vsel %vm671, %v667, -inf
    %v674 = vmax.f32 %v672, %v673
    %v675 = vrot.slane %v674, 4
    %v676 = vmax.f32 %v674, %v675
    %v677 = vrot.slane %v676, 2
    %v678 = vmax.f32 %v676, %v677
    %v679 = vrot.slane %v678, 1
    %v680 = vmax.f32 %v678, %v679
    %v681 = vmax.f32 %v670, %v680
    %v682 = vsub.f32 %v670, %v681
    %v683 = vmul.f32 %v682, 1.442695
    %v684 = vpow.pop %v683
    %v686 = vlaneseq
    %v687 = vshrl.u32 %v686, 7
    %v688 = vsub.s32 0, %v687
    %v689 = vrot.slane %v681, %v688
    %v691 = vsub.f32 %v662, %v689
    %v692 = vsub.f32 %v667, %v689
    %v693 = vmul.f32 %v691, 1.442695
    %v694 = vpow.pop %v693
    %v695 = vmul.f32 %v692, 1.442695
    %v696 = vpow.pop %v695
    %v697 = vld [vmem:[#allocation3] sm:$0x1]
    %v698 = vmul.f32 %v684, %v697
    %v699 = vsel %vm671, %v694, 0.0
    %v700 = vsel %vm671, %v696, 0.0
    %v701 = vadd.f32 %v699, %v700
    %v702 = vrot.slane %v701, 4
    %v703 = vadd.f32 %v701, %v702
    %v704 = vrot.slane %v703, 2
    %v705 = vadd.f32 %v703, %v704
    %v706 = vrot.slane %v705, 1
    %v707 = vadd.f32 %v705, %v706
    %v708 = vadd.f32 %v698, %v707
    %vm709 = vcmask 122880
    %710 = vst.msk [vmem:[#allocation3] sm:$0x1] %vm709, %v708
    %v711 = vld [vmem:[#allocation4] sm:$0xff]
    %v712 = vld [vmem:[#allocation4 + $0x8] sm:$0xff]
    %v713 = vld [vmem:[#allocation4 + $0x10] sm:$0xff]
    %v714 = vld [vmem:[#allocation4 + $0x18] sm:$0xff]
    %v716 = vlaneseq
    %v717 = vshrl.u32 %v716, 7
    %v718 = vsub.s32 0, %v717
    %v719 = vrot.slane %v684, %v718
    %v721 = vmul.f32 %v719, %v711
    %v722 = vmul.f32 %v719, %v712
    %v723 = vmul.f32 %v719, %v713
    %v724 = vmul.f32 %v719, %v714
    %v725 = vld [vmem:[#allocation7] sm:$0xff]
    %v726 = vld [vmem:[#allocation7 + $0x8] sm:$0xff]
    %v727 = vld [vmem:[#allocation7 + $0x10] sm:$0xff]
    %v728 = vld [vmem:[#allocation7 + $0x18] sm:$0xff]
    %v730 = vsel %vm671, %v725, 0
    %v733 = vsel %vm671, %v726, 0
    %v736 = vsel %vm671, %v727, 0
    %v739 = vsel %vm671, %v728, 0
    %741 = vmatprep.subr.mxu0 0.0
    %742 = vmatpush1.msra.mxu0 %v694
    %743 = vmatprep.subr.mxu0 0.0
    %744 = vmatpush1.msra.mxu0 %v696
    %745 = vmatprep.subr.mxu0 0.0
    %746 = vmatpush1.msra.mxu0 0.0
    %747 = vmatprep.subr.mxu0 0.0
    %748 = vmatpush1.msra.mxu0 0.0
    %749 = vmatprep.subr.mxu0 0.0
    %750 = vmatpush1.msra.mxu0 0.0
    %751 = vmatprep.subr.mxu0 0.0
    %752 = vmatpush1.msra.mxu0 0.0
    %753 = vmatprep.subr.mxu0 0.0
    %754 = vmatpush1.msra.mxu0 0.0
    %755 = vmatprep.subr.mxu0 0.0
    %756 = vmatpush1.msra.mxu0 0.0
    %757 = vmatprep.subr.mxu0 0.0
    %758 = vmatpush1.msra.mxu0 0.0
    %759 = vmatprep.subr.mxu0 0.0
    %760 = vmatpush1.msra.mxu0 0.0
    %761 = vmatprep.subr.mxu0 0.0
    %762 = vmatpush1.msra.mxu0 0.0
    %763 = vmatprep.subr.mxu0 0.0
    %764 = vmatpush1.msra.mxu0 0.0
    %765 = vmatprep.subr.mxu0 0.0
    %766 = vmatpush1.msra.mxu0 0.0
    %767 = vmatprep.subr.mxu0 0.0
    %768 = vmatpush1.msra.mxu0 0.0
    %769 = vmatprep.subr.mxu0 0.0
    %770 = vmatpush1.msra.mxu0 0.0
    %771 = vmatprep.subr.mxu0 0.0
    %772 = vmatpush1.msra.mxu0 0.0
    %773 = vmatprep.subr.mxu0 0.0
    %774 = vmatpush1.msra.mxu0 0.0
    %775 = vmatprep.subr.mxu0 0.0
    %776 = vmatpush1.msra.mxu0 0.0
    %777 = vmatprep.subr.mxu0 0.0
    %778 = vmatpush1.msra.mxu0 0.0
    %779 = vmatprep.subr.mxu0 0.0
    %780 = vmatpush1.msra.mxu0 0.0
    %781 = vmatprep.subr.mxu0 0.0
    %782 = vmatpush1.msra.mxu0 0.0
    %783 = vmatprep.subr.mxu0 0.0
    %784 = vmatpush1.msra.mxu0 0.0
    %785 = vmatprep.subr.mxu0 0.0
    %786 = vmatpush1.msra.mxu0 0.0
    %787 = vmatprep.subr.mxu0 0.0
    %788 = vmatpush1.msra.mxu0 0.0
    %789 = vmatprep.subr.mxu0 0.0
    %790 = vmatpush1.msra.mxu0 0.0
    %791 = vmatprep.subr.mxu0 0.0
    %792 = vmatpush1.msra.mxu0 0.0
    %793 = vmatprep.subr.mxu0 0.0
    %794 = vmatpush1.msra.mxu0 0.0
    %795 = vmatprep.subr.mxu0 0.0
    %796 = vmatpush1.msra.mxu0 0.0
    %797 = vmatprep.subr.mxu0 0.0
    %798 = vmatpush1.msra.mxu0 0.0
    %799 = vmatprep.subr.mxu0 0.0
    %800 = vmatpush1.msra.mxu0 0.0
    %801 = vmatprep.subr.mxu0 0.0
    %802 = vmatpush1.msra.mxu0 0.0
    %803 = vmatprep.subr.mxu0 0.0
    %804 = vmatpush1.msra.mxu0 0.0
    %805 = vmatprep.mubr.f32.mxu0 0.0
    %806 = vmatmul.mubr.f32.gmra.mrb[0].mxu0 %v730
    %v807 = vpop.f32.mrb[0].mxu0
    %v808 = vadd.f32 0.0, %v807
    %v809 = vpop.f32.mrb[0].mxu0
    %810 = vmatprep.mubr.f32.mxu0 0.0
    %811 = vmatmul.mubr.f32.gmra.mrb[0].mxu0 %v733
    %v812 = vpop.f32.mrb[0].mxu0
    %v813 = vadd.f32 0.0, %v812
    %v814 = vpop.f32.mrb[0].mxu0
    %815 = vmatprep.mubr.f32.mxu0 0.0
    %816 = vmatmul.mubr.f32.gmra.mrb[0].mxu0 %v736
    %v817 = vpop.f32.mrb[0].mxu0
    %v818 = vadd.f32 0.0, %v817
    %v819 = vpop.f32.mrb[0].mxu0
    %820 = vmatprep.mubr.f32.mxu0 0.0
    %821 = vmatmul.mubr.f32.gmra.mrb[0].mxu0 %v739
    %v822 = vpop.f32.mrb[0].mxu0
    %v823 = vadd.f32 0.0, %v822
    %v824 = vpop.f32.mrb[0].mxu0
    %825 = vdwg.mxu0
    %v826 = vadd.f32 %v721, %v808
    %v827 = vadd.f32 %v722, %v813
    %v828 = vadd.f32 %v723, %v818
    %v829 = vadd.f32 %v724, %v823
    %830 = vst.msk [vmem:[#allocation4] sm:$0xff] %vm671, %v826
    %831 = vst.msk [vmem:[#allocation4 + $0x8] sm:$0xff] %vm671, %v827
    %832 = vst.msk [vmem:[#allocation4 + $0x10] sm:$0xff] %vm671, %v828
    %833 = vst.msk [vmem:[#allocation4 + $0x18] sm:$0xff] %vm671, %v829
    %834 = vst.msk [vmem:[#allocation2] sm:$0x1] %vm709, %v681
    %s835 = scalar_lea.vmem [#allocation5], 32
    %v836 = vld [vmem:[%s835] sm:$0xff]
    %v837 = vld [vmem:[%s835 + $0x8] sm:$0xff]
    %v838 = vld [vmem:[%s835 + $0x10] sm:$0xff]
    %v839 = vld [vmem:[%s835 + $0x18] sm:$0xff]
    %v840 = vmul.f32 %v836, 0.17677669
    %v841 = vmul.f32 %v837, 0.17677669
    %v842 = vmul.f32 %v838, 0.17677669
    %v843 = vmul.f32 %v839, 0.17677669
    %s844 = scalar_lea.vmem [#allocation6], 32
    %v845 = vld [vmem:[%s844] sm:$0xff]
    %v846 = vld [vmem:[%s844 + $0x8] sm:$0xff]
    %v847 = vld [vmem:[%s844 + $0x10] sm:$0xff]
    %v848 = vld [vmem:[%s844 + $0x18] sm:$0xff]
    %849 = vxpose.xlu0.b32.start [1/16] %v845, 128
    %850 = vxpose.xlu0.b32.cont [2/16] %v846, 128
    %851 = vxpose.xlu0.b32.cont [3/16] %v847, 128
    %852 = vxpose.xlu0.b32.cont [4/16] %v848, 128
    %853 = vxpose.xlu0.b32.cont [5/16] 0.0, 128
    %854 = vxpose.xlu0.b32.cont [6/16] 0.0, 128
    %855 = vxpose.xlu0.b32.cont [7/16] 0.0, 128
    %856 = vxpose.xlu0.b32.cont [8/16] 0.0, 128
    %857 = vxpose.xlu0.b32.cont [9/16] 0.0, 128
    %858 = vxpose.xlu0.b32.cont [10/16] 0.0, 128
    %859 = vxpose.xlu0.b32.cont [11/16] 0.0, 128
    %860 = vxpose.xlu0.b32.cont [12/16] 0.0, 128
    %861 = vxpose.xlu0.b32.cont [13/16] 0.0, 128
    %862 = vxpose.xlu0.b32.cont [14/16] 0.0, 128
    %863 = vxpose.xlu0.b32.cont [15/16] 0.0, 128
    %864 = vxpose.xlu0.b32.end [16/16] 0.0, 128
    %v865 = vpop.trf.xlu0
    %v866 = vpop.trf.xlu0
    %v867 = vpop.trf.xlu0
    %v868 = vpop.trf.xlu0
    %v869 = vpop.trf.xlu0
    %v870 = vpop.trf.xlu0
    %v871 = vpop.trf.xlu0
    %v872 = vpop.trf.xlu0
    %v873 = vpop.trf.xlu0
    %v874 = vpop.trf.xlu0
    %v875 = vpop.trf.xlu0
    %v876 = vpop.trf.xlu0
    %v877 = vpop.trf.xlu0
    %v878 = vpop.trf.xlu0
    %v879 = vpop.trf.xlu0
    %v880 = vpop.trf.xlu0
    %v882 = vsel %vm588, %v865, 0
    %v885 = vsel %vm588, %v866, 0
    %887 = vmatprep.subr.mxu0 0.0
    %888 = vmatpush1.msra.mxu0 %v840
    %889 = vmatprep.subr.mxu0 0.0
    %890 = vmatpush1.msra.mxu0 %v841
    %891 = vmatprep.subr.mxu0 0.0
    %892 = vmatpush1.msra.mxu0 %v842
    %893 = vmatprep.subr.mxu0 0.0
    %894 = vmatpush1.msra.mxu0 %v843
    %895 = vmatprep.subr.mxu0 0.0
    %896 = vmatpush1.msra.mxu0 0.0
    %897 = vmatprep.subr.mxu0 0.0
    %898 = vmatpush1.msra.mxu0 0.0
    %899 = vmatprep.subr.mxu0 0.0
    %900 = vmatpush1.msra.mxu0 0.0
    %901 = vmatprep.subr.mxu0 0.0
    %902 = vmatpush1.msra.mxu0 0.0
    %903 = vmatprep.subr.mxu0 0.0
    %904 = vmatpush1.msra.mxu0 0.0
    %905 = vmatprep.subr.mxu0 0.0
    %906 = vmatpush1.msra.mxu0 0.0
    %907 = vmatprep.subr.mxu0 0.0
    %908 = vmatpush1.msra.mxu0 0.0
    %909 = vmatprep.subr.mxu0 0.0
    %910 = vmatpush1.msra.mxu0 0.0
    %911 = vmatprep.subr.mxu0 0.0
    %912 = vmatpush1.msra.mxu0 0.0
    %913 = vmatprep.subr.mxu0 0.0
    %914 = vmatpush1.msra.mxu0 0.0
    %915 = vmatprep.subr.mxu0 0.0
    %916 = vmatpush1.msra.mxu0 0.0
    %917 = vmatprep.subr.mxu0 0.0
    %918 = vmatpush1.msra.mxu0 0.0
    %919 = vmatprep.subr.mxu0 0.0
    %920 = vmatpush1.msra.mxu0 0.0
    %921 = vmatprep.subr.mxu0 0.0
    %922 = vmatpush1.msra.mxu0 0.0
    %923 = vmatprep.subr.mxu0 0.0
    %924 = vmatpush1.msra.mxu0 0.0
    %925 = vmatprep.subr.mxu0 0.0
    %926 = vmatpush1.msra.mxu0 0.0
    %927 = vmatprep.subr.mxu0 0.0
    %928 = vmatpush1.msra.mxu0 0.0
    %929 = vmatprep.subr.mxu0 0.0
    %930 = vmatpush1.msra.mxu0 0.0
    %931 = vmatprep.subr.mxu0 0.0
    %932 = vmatpush1.msra.mxu0 0.0
    %933 = vmatprep.subr.mxu0 0.0
    %934 = vmatpush1.msra.mxu0 0.0
    %935 = vmatprep.subr.mxu0 0.0
    %936 = vmatpush1.msra.mxu0 0.0
    %937 = vmatprep.subr.mxu0 0.0
    %938 = vmatpush1.msra.mxu0 0.0
    %939 = vmatprep.subr.mxu0 0.0
    %940 = vmatpush1.msra.mxu0 0.0
    %941 = vmatprep.subr.mxu0 0.0
    %942 = vmatpush1.msra.mxu0 0.0
    %943 = vmatprep.subr.mxu0 0.0
    %944 = vmatpush1.msra.mxu0 0.0
    %945 = vmatprep.subr.mxu0 0.0
    %946 = vmatpush1.msra.mxu0 0.0
    %947 = vmatprep.subr.mxu0 0.0
    %948 = vmatpush1.msra.mxu0 0.0
    %949 = vmatprep.subr.mxu0 0.0
    %950 = vmatpush1.msra.mxu0 0.0
    %951 = vmatprep.mubr.f32.mxu0 0.0
    %952 = vmatmul.mubr.f32.gmra.mrb[0].mxu0 %v882
    %v953 = vpop.f32.mrb[0].mxu0
    %v954 = vadd.f32 0.0, %v953
    %v955 = vpop.f32.mrb[0].mxu0
    %956 = vmatprep.mubr.f32.mxu0 0.0
    %957 = vmatmul.mubr.f32.gmra.mrb[0].mxu0 %v885
    %v958 = vpop.f32.mrb[0].mxu0
    %v959 = vadd.f32 0.0, %v958
    %v960 = vpop.f32.mrb[0].mxu0
    %961 = vdwg.mxu0
    %s962 = scalar_lea.vmem [#allocation2], 1
    %v963 = vld [vmem:[%s962] sm:$0x1]
    %v964 = vsel %vm671, %v954, -inf
    %v965 = vsel %vm671, %v959, -inf
    %v966 = vmax.f32 %v964, %v965
    %v967 = vrot.slane %v966, 4
    %v968 = vmax.f32 %v966, %v967
    %v969 = vrot.slane %v968, 2
    %v970 = vmax.f32 %v968, %v969
    %v971 = vrot.slane %v970, 1
    %v972 = vmax.f32 %v970, %v971
    %v973 = vmax.f32 %v963, %v972
    %v974 = vsub.f32 %v963, %v973
    %v975 = vmul.f32 %v974, 1.442695
    %v976 = vpow.pop %v975
    %v978 = vlaneseq
    %v979 = vshrl.u32 %v978, 7
    %v980 = vsub.s32 0, %v979
    %v981 = vrot.slane %v973, %v980
    %v983 = vsub.f32 %v954, %v981
    %v984 = vsub.f32 %v959, %v981
    %v985 = vmul.f32 %v983, 1.442695
    %v986 = vpow.pop %v985
    %v987 = vmul.f32 %v984, 1.442695
    %v988 = vpow.pop %v987
    %s989 = scalar_lea.vmem [#allocation3], 1
    %v990 = vld [vmem:[%s989] sm:$0x1]
    %v991 = vmul.f32 %v976, %v990
    %v992 = vsel %vm671, %v986, 0.0
    %v993 = vsel %vm671, %v988, 0.0
    %v994 = vadd.f32 %v992, %v993
    %v995 = vrot.slane %v994, 4
    %v996 = vadd.f32 %v994, %v995
    %v997 = vrot.slane %v996, 2
    %v998 = vadd.f32 %v996, %v997
    %v999 = vrot.slane %v998, 1
    %v1000 = vadd.f32 %v998, %v999
    %v1001 = vadd.f32 %v991, %v1000
    %1002 = vst.msk [vmem:[%s989] sm:$0x1] %vm709, %v1001
    %s1003 = scalar_lea.vmem [#allocation4], 32
    %v1004 = vld [vmem:[%s1003] sm:$0xff]
    %v1005 = vld [vmem:[%s1003 + $0x8] sm:$0xff]
    %v1006 = vld [vmem:[%s1003 + $0x10] sm:$0xff]
    %v1007 = vld [vmem:[%s1003 + $0x18] sm:$0xff]
    %v1009 = vlaneseq
    %v1010 = vshrl.u32 %v1009, 7
    %v1011 = vsub.s32 0, %v1010
    %v1012 = vrot.slane %v976, %v1011
    %v1014 = vmul.f32 %v1012, %v1004
    %v1015 = vmul.f32 %v1012, %v1005
    %v1016 = vmul.f32 %v1012, %v1006
    %v1017 = vmul.f32 %v1012, %v1007
    %s1018 = scalar_lea.vmem [#allocation7], 32
    %v1019 = vld [vmem:[%s1018] sm:$0xff]
    %v1020 = vld [vmem:[%s1018 + $0x8] sm:$0xff]
    %v1021 = vld [vmem:[%s1018 + $0x10] sm:$0xff]
    %v1022 = vld [vmem:[%s1018 + $0x18] sm:$0xff]
    %v1024 = vsel %vm671, %v1019, 0
    %v1027 = vsel %vm671, %v1020, 0
    %v1030 = vsel %vm671, %v1021, 0
    %v1033 = vsel %vm671, %v1022, 0
    %1035 = vmatprep.subr.mxu0 0.0
    %1036 = vmatpush1.msra.mxu0 %v986
    %1037 = vmatprep.subr.mxu0 0.0
    %1038 = vmatpush1.msra.mxu0 %v988
    %1039 = vmatprep.subr.mxu0 0.0
    %1040 = vmatpush1.msra.mxu0 0.0
    %1041 = vmatprep.subr.mxu0 0.0
    %1042 = vmatpush1.msra.mxu0 0.0
    %1043 = vmatprep.subr.mxu0 0.0
    %1044 = vmatpush1.msra.mxu0 0.0
    %1045 = vmatprep.subr.mxu0 0.0
    %1046 = vmatpush1.msra.mxu0 0.0
    %1047 = vmatprep.subr.mxu0 0.0
    %1048 = vmatpush1.msra.mxu0 0.0
    %1049 = vmatprep.subr.mxu0 0.0
    %1050 = vmatpush1.msra.mxu0 0.0
    %1051 = vmatprep.subr.mxu0 0.0
    %1052 = vmatpush1.msra.mxu0 0.0
    %1053 = vmatprep.subr.mxu0 0.0
    %1054 = vmatpush1.msra.mxu0 0.0
    %1055 = vmatprep.subr.mxu0 0.0
    %1056 = vmatpush1.msra.mxu0 0.0
    %1057 = vmatprep.subr.mxu0 0.0
    %1058 = vmatpush1.msra.mxu0 0.0
    %1059 = vmatprep.subr.mxu0 0.0
    %1060 = vmatpush1.msra.mxu0 0.0
    %1061 = vmatprep.subr.mxu0 0.0
    %1062 = vmatpush1.msra.mxu0 0.0
    %1063 = vmatprep.subr.mxu0 0.0
    %1064 = vmatpush1.msra.mxu0 0.0
    %1065 = vmatprep.subr.mxu0 0.0
    %1066 = vmatpush1.msra.mxu0 0.0
    %1067 = vmatprep.subr.mxu0 0.0
    %1068 = vmatpush1.msra.mxu0 0.0
    %1069 = vmatprep.subr.mxu0 0.0
    %1070 = vmatpush1.msra.mxu0 0.0
    %1071 = vmatprep.subr.mxu0 0.0
    %1072 = vmatpush1.msra.mxu0 0.0
    %1073 = vmatprep.subr.mxu0 0.0
    %1074 = vmatpush1.msra.mxu0 0.0
    %1075 = vmatprep.subr.mxu0 0.0
    %1076 = vmatpush1.msra.mxu0 0.0
    %1077 = vmatprep.subr.mxu0 0.0
    %1078 = vmatpush1.msra.mxu0 0.0
    %1079 = vmatprep.subr.mxu0 0.0
    %1080 = vmatpush1.msra.mxu0 0.0
    %1081 = vmatprep.subr.mxu0 0.0
    %1082 = vmatpush1.msra.mxu0 0.0
    %1083 = vmatprep.subr.mxu0 0.0
    %1084 = vmatpush1.msra.mxu0 0.0
    %1085 = vmatprep.subr.mxu0 0.0
    %1086 = vmatpush1.msra.mxu0 0.0
    %1087 = vmatprep.subr.mxu0 0.0
    %1088 = vmatpush1.msra.mxu0 0.0
    %1089 = vmatprep.subr.mxu0 0.0
    %1090 = vmatpush1.msra.mxu0 0.0
    %1091 = vmatprep.subr.mxu0 0.0
    %1092 = vmatpush1.msra.mxu0 0.0
    %1093 = vmatprep.subr.mxu0 0.0
    %1094 = vmatpush1.msra.mxu0 0.0
    %1095 = vmatprep.subr.mxu0 0.0
    %1096 = vmatpush1.msra.mxu0 0.0
    %1097 = vmatprep.subr.mxu0 0.0
    %1098 = vmatpush1.msra.mxu0 0.0
    %1099 = vmatprep.mubr.f32.mxu0 0.0
    %1100 = vmatmul.mubr.f32.gmra.mrb[0].mxu0 %v1024
    %v1101 = vpop.f32.mrb[0].mxu0
    %v1102 = vadd.f32 0.0, %v1101
    %v1103 = vpop.f32.mrb[0].mxu0
    %1104 = vmatprep.mubr.f32.mxu0 0.0
    %1105 = vmatmul.mubr.f32.gmra.mrb[0].mxu0 %v1027
    %v1106 = vpop.f32.mrb[0].mxu0
    %v1107 = vadd.f32 0.0, %v1106
    %v1108 = vpop.f32.mrb[0].mxu0
    %1109 = vmatprep.mubr.f32.mxu0 0.0
    %1110 = vmatmul.mubr.f32.gmra.mrb[0].mxu0 %v1030
    %v1111 = vpop.f32.mrb[0].mxu0
    %v1112 = vadd.f32 0.0, %v1111
    %v1113 = vpop.f32.mrb[0].mxu0
    %1114 = vmatprep.mubr.f32.mxu0 0.0
    %1115 = vmatmul.mubr.f32.gmra.mrb[0].mxu0 %v1033
    %v1116 = vpop.f32.mrb[0].mxu0
    %v1117 = vadd.f32 0.0, %v1116
    %v1118 = vpop.f32.mrb[0].mxu0
    %1119 = vdwg.mxu0
    %v1120 = vadd.f32 %v1014, %v1102
    %v1121 = vadd.f32 %v1015, %v1107
    %v1122 = vadd.f32 %v1016, %v1112
    %v1123 = vadd.f32 %v1017, %v1117
    %1124 = vst.msk [vmem:[%s1003] sm:$0xff] %vm671, %v1120
    %1125 = vst.msk [vmem:[%s1003 + $0x8] sm:$0xff] %vm671, %v1121
    %1126 = vst.msk [vmem:[%s1003 + $0x10] sm:$0xff] %vm671, %v1122
    %1127 = vst.msk [vmem:[%s1003 + $0x18] sm:$0xff] %vm671, %v1123
    %1128 = vst.msk [vmem:[%s962] sm:$0x1] %vm709, %v973
    %s1129 = scalar_lea.vmem [#allocation5], 64
    %v1130 = vld [vmem:[%s1129] sm:$0xff]
    %v1131 = vld [vmem:[%s1129 + $0x8] sm:$0xff]
    %v1132 = vld [vmem:[%s1129 + $0x10] sm:$0xff]
    %v1133 = vld [vmem:[%s1129 + $0x18] sm:$0xff]
    %v1134 = vmul.f32 %v1130, 0.17677669
    %v1135 = vmul.f32 %v1131, 0.17677669
    %v1136 = vmul.f32 %v1132, 0.17677669
    %v1137 = vmul.f32 %v1133, 0.17677669
    %s1138 = scalar_lea.vmem [#allocation6], 64
    %v1139 = vld [vmem:[%s1138] sm:$0xff]
    %v1140 = vld [vmem:[%s1138 + $0x8] sm:$0xff]
    %v1141 = vld [vmem:[%s1138 + $0x10] sm:$0xff]
    %v1142 = vld [vmem:[%s1138 + $0x18] sm:$0xff]
    %1143 = vxpose.xlu0.b32.start [1/16] %v1139, 128
    %1144 = vxpose.xlu0.b32.cont [2/16] %v1140, 128
    %1145 = vxpose.xlu0.b32.cont [3/16] %v1141, 128
    %1146 = vxpose.xlu0.b32.cont [4/16] %v1142, 128
    %1147 = vxpose.xlu0.b32.cont [5/16] 0.0, 128
    %1148 = vxpose.xlu0.b32.cont [6/16] 0.0, 128
    %1149 = vxpose.xlu0.b32.cont [7/16] 0.0, 128
    %1150 = vxpose.xlu0.b32.cont [8/16] 0.0, 128
    %1151 = vxpose.xlu0.b32.cont [9/16] 0.0, 128
    %1152 = vxpose.xlu0.b32.cont [10/16] 0.0, 128
    %1153 = vxpose.xlu0.b32.cont [11/16] 0.0, 128
    %1154 = vxpose.xlu0.b32.cont [12/16] 0.0, 128
    %1155 = vxpose.xlu0.b32.cont [13/16] 0.0, 128
    %1156 = vxpose.xlu0.b32.cont [14/16] 0.0, 128
    %1157 = vxpose.xlu0.b32.cont [15/16] 0.0, 128
    %1158 = vxpose.xlu0.b32.end [16/16] 0.0, 128
    %v1159 = vpop.trf.xlu0
    %v1160 = vpop.trf.xlu0
    %v1161 = vpop.trf.xlu0
    %v1162 = vpop.trf.xlu0
    %v1163 = vpop.trf.xlu0
    %v1164 = vpop.trf.xlu0
    %v1165 = vpop.trf.xlu0
    %v1166 = vpop.trf.xlu0
    %v1167 = vpop.trf.xlu0
    %v1168 = vpop.trf.xlu0
    %v1169 = vpop.trf.xlu0
    %v1170 = vpop.trf.xlu0
    %v1171 = vpop.trf.xlu0
    %v1172 = vpop.trf.xlu0
    %v1173 = vpop.trf.xlu0
    %v1174 = vpop.trf.xlu0
    %v1176 = vsel %vm588, %v1159, 0
    %v1179 = vsel %vm588, %v1160, 0
    %1181 = vmatprep.subr.mxu0 0.0
    %1182 = vmatpush1.msra.mxu0 %v1134
    %1183 = vmatprep.subr.mxu0 0.0
    %1184 = vmatpush1.msra.mxu0 %v1135
    %1185 = vmatprep.subr.mxu0 0.0
    %1186 = vmatpush1.msra.mxu0 %v1136
    %1187 = vmatprep.subr.mxu0 0.0
    %1188 = vmatpush1.msra.mxu0 %v1137
    %1189 = vmatprep.subr.mxu0 0.0
    %1190 = vmatpush1.msra.mxu0 0.0
    %1191 = vmatprep.subr.mxu0 0.0
    %1192 = vmatpush1.msra.mxu0 0.0
    %1193 = vmatprep.subr.mxu0 0.0
    %1194 = vmatpush1.msra.mxu0 0.0
    %1195 = vmatprep.subr.mxu0 0.0
    %1196 = vmatpush1.msra.mxu0 0.0
    %1197 = vmatprep.subr.mxu0 0.0
    %1198 = vmatpush1.msra.mxu0 0.0
    %1199 = vmatprep.subr.mxu0 0.0
    %1200 = vmatpush1.msra.mxu0 0.0
    %1201 = vmatprep.subr.mxu0 0.0
    %1202 = vmatpush1.msra.mxu0 0.0
    %1203 = vmatprep.subr.mxu0 0.0
    %1204 = vmatpush1.msra.mxu0 0.0
    %1205 = vmatprep.subr.mxu0 0.0
    %1206 = vmatpush1.msra.mxu0 0.0
    %1207 = vmatprep.subr.mxu0 0.0
    %1208 = vmatpush1.msra.mxu0 0.0
    %1209 = vmatprep.subr.mxu0 0.0
    %1210 = vmatpush1.msra.mxu0 0.0
    %1211 = vmatprep.subr.mxu0 0.0
    %1212 = vmatpush1.msra.mxu0 0.0
    %1213 = vmatprep.subr.mxu0 0.0
    %1214 = vmatpush1.msra.mxu0 0.0
    %1215 = vmatprep.subr.mxu0 0.0
    %1216 = vmatpush1.msra.mxu0 0.0
    %1217 = vmatprep.subr.mxu0 0.0
    %1218 = vmatpush1.msra.mxu0 0.0
    %1219 = vmatprep.subr.mxu0 0.0
    %1220 = vmatpush1.msra.mxu0 0.0
    %1221 = vmatprep.subr.mxu0 0.0
    %1222 = vmatpush1.msra.mxu0 0.0
    %1223 = vmatprep.subr.mxu0 0.0
    %1224 = vmatpush1.msra.mxu0 0.0
    %1225 = vmatprep.subr.mxu0 0.0
    %1226 = vmatpush1.msra.mxu0 0.0
    %1227 = vmatprep.subr.mxu0 0.0
    %1228 = vmatpush1.msra.mxu0 0.0
    %1229 = vmatprep.subr.mxu0 0.0
    %1230 = vmatpush1.msra.mxu0 0.0
    %1231 = vmatprep.subr.mxu0 0.0
    %1232 = vmatpush1.msra.mxu0 0.0
    %1233 = vmatprep.subr.mxu0 0.0
    %1234 = vmatpush1.msra.mxu0 0.0
    %1235 = vmatprep.subr.mxu0 0.0
    %1236 = vmatpush1.msra.mxu0 0.0
    %1237 = vmatprep.subr.mxu0 0.0
    %1238 = vmatpush1.msra.mxu0 0.0
    %1239 = vmatprep.subr.mxu0 0.0
    %1240 = vmatpush1.msra.mxu0 0.0
    %1241 = vmatprep.subr.mxu0 0.0
    %1242 = vmatpush1.msra.mxu0 0.0
    %1243 = vmatprep.subr.mxu0 0.0
    %1244 = vmatpush1.msra.mxu0 0.0
    %1245 = vmatprep.mubr.f32.mxu0 0.0
    %1246 = vmatmul.mubr.f32.gmra.mrb[0].mxu0 %v1176
    %v1247 = vpop.f32.mrb[0].mxu0
    %v1248 = vadd.f32 0.0, %v1247
    %v1249 = vpop.f32.mrb[0].mxu0
    %1250 = vmatprep.mubr.f32.mxu0 0.0
    %1251 = vmatmul.mubr.f32.gmra.mrb[0].mxu0 %v1179
    %v1252 = vpop.f32.mrb[0].mxu0
    %v1253 = vadd.f32 0.0, %v1252
    %v1254 = vpop.f32.mrb[0].mxu0
    %1255 = vdwg.mxu0
    %s1256 = scalar_lea.vmem [#allocation2], 2
    %v1257 = vld [vmem:[%s1256] sm:$0x1]
    %v1258 = vsel %vm671, %v1248, -inf
    %v1259 = vsel %vm671, %v1253, -inf
    %v1260 = vmax.f32 %v1258, %v1259
    %v1261 = vrot.slane %v1260, 4
    %v1262 = vmax.f32 %v1260, %v1261
    %v1263 = vrot.slane %v1262, 2
    %v1264 = vmax.f32 %v1262, %v1263
    %v1265 = vrot.slane %v1264, 1
    %v1266 = vmax.f32 %v1264, %v1265
    %v1267 = vmax.f32 %v1257, %v1266
    %v1268 = vsub.f32 %v1257, %v1267
    %v1269 = vmul.f32 %v1268, 1.442695
    %v1270 = vpow.pop %v1269
    %v1272 = vlaneseq
    %v1273 = vshrl.u32 %v1272, 7
    %v1274 = vsub.s32 0, %v1273
    %v1275 = vrot.slane %v1267, %v1274
    %v1277 = vsub.f32 %v1248, %v1275
    %v1278 = vsub.f32 %v1253, %v1275
    %v1279 = vmul.f32 %v1277, 1.442695
    %v1280 = vpow.pop %v1279
    %v1281 = vmul.f32 %v1278, 1.442695
    %v1282 = vpow.pop %v1281
    %s1283 = scalar_lea.vmem [#allocation3], 2
    %v1284 = vld [vmem:[%s1283] sm:$0x1]
    %v1285 = vmul.f32 %v1270, %v1284
    %v1286 = vsel %vm671, %v1280, 0.0
    %v1287 = vsel %vm671, %v1282, 0.0
    %v1288 = vadd.f32 %v1286, %v1287
    %v1289 = vrot.slane %v1288, 4
    %v1290 = vadd.f32 %v1288, %v1289
    %v1291 = vrot.slane %v1290, 2
    %v1292 = vadd.f32 %v1290, %v1291
    %v1293 = vrot.slane %v1292, 1
    %v1294 = vadd.f32 %v1292, %v1293
    %v1295 = vadd.f32 %v1285, %v1294
    %1296 = vst.msk [vmem:[%s1283] sm:$0x1] %vm709, %v1295
    %s1297 = scalar_lea.vmem [#allocation4], 64
    %v1298 = vld [vmem:[%s1297] sm:$0xff]
    %v1299 = vld [vmem:[%s1297 + $0x8] sm:$0xff]
    %v1300 = vld [vmem:[%s1297 + $0x10] sm:$0xff]
    %v1301 = vld [vmem:[%s1297 + $0x18] sm:$0xff]
    %v1303 = vlaneseq
    %v1304 = vshrl.u32 %v1303, 7
    %v1305 = vsub.s32 0, %v1304
    %v1306 = vrot.slane %v1270, %v1305
    %v1308 = vmul.f32 %v1306, %v1298
    %v1309 = vmul.f32 %v1306, %v1299
    %v1310 = vmul.f32 %v1306, %v1300
    %v1311 = vmul.f32 %v1306, %v1301
    %s1312 = scalar_lea.vmem [#allocation7], 64
    %v1313 = vld [vmem:[%s1312] sm:$0xff]
    %v1314 = vld [vmem:[%s1312 + $0x8] sm:$0xff]
    %v1315 = vld [vmem:[%s1312 + $0x10] sm:$0xff]
    %v1316 = vld [vmem:[%s1312 + $0x18] sm:$0xff]
    %v1318 = vsel %vm671, %v1313, 0
    %v1321 = vsel %vm671, %v1314, 0
    %v1324 = vsel %vm671, %v1315, 0
    %v1327 = vsel %vm671, %v1316, 0
    %1329 = vmatprep.subr.mxu0 0.0
    %1330 = vmatpush1.msra.mxu0 %v1280
    %1331 = vmatprep.subr.mxu0 0.0
    %1332 = vmatpush1.msra.mxu0 %v1282
    %1333 = vmatprep.subr.mxu0 0.0
    %1334 = vmatpush1.msra.mxu0 0.0
    %1335 = vmatprep.subr.mxu0 0.0
    %1336 = vmatpush1.msra.mxu0 0.0
    %1337 = vmatprep.subr.mxu0 0.0
    %1338 = vmatpush1.msra.mxu0 0.0
    %1339 = vmatprep.subr.mxu0 0.0
    %1340 = vmatpush1.msra.mxu0 0.0
    %1341 = vmatprep.subr.mxu0 0.0
    %1342 = vmatpush1.msra.mxu0 0.0
    %1343 = vmatprep.subr.mxu0 0.0
    %1344 = vmatpush1.msra.mxu0 0.0
    %1345 = vmatprep.subr.mxu0 0.0
    %1346 = vmatpush1.msra.mxu0 0.0
    %1347 = vmatprep.subr.mxu0 0.0
    %1348 = vmatpush1.msra.mxu0 0.0
    %1349 = vmatprep.subr.mxu0 0.0
    %1350 = vmatpush1.msra.mxu0 0.0
    %1351 = vmatprep.subr.mxu0 0.0
    %1352 = vmatpush1.msra.mxu0 0.0
    %1353 = vmatprep.subr.mxu0 0.0
    %1354 = vmatpush1.msra.mxu0 0.0
    %1355 = vmatprep.subr.mxu0 0.0
    %1356 = vmatpush1.msra.mxu0 0.0
    %1357 = vmatprep.subr.mxu0 0.0
    %1358 = vmatpush1.msra.mxu0 0.0
    %1359 = vmatprep.subr.mxu0 0.0
    %1360 = vmatpush1.msra.mxu0 0.0
    %1361 = vmatprep.subr.mxu0 0.0
    %1362 = vmatpush1.msra.mxu0 0.0
    %1363 = vmatprep.subr.mxu0 0.0
    %1364 = vmatpush1.msra.mxu0 0.0
    %1365 = vmatprep.subr.mxu0 0.0
    %1366 = vmatpush1.msra.mxu0 0.0
    %1367 = vmatprep.subr.mxu0 0.0
    %1368 = vmatpush1.msra.mxu0 0.0
    %1369 = vmatprep.subr.mxu0 0.0
    %1370 = vmatpush1.msra.mxu0 0.0
    %1371 = vmatprep.subr.mxu0 0.0
    %1372 = vmatpush1.msra.mxu0 0.0
    %1373 = vmatprep.subr.mxu0 0.0
    %1374 = vmatpush1.msra.mxu0 0.0
    %1375 = vmatprep.subr.mxu0 0.0
    %1376 = vmatpush1.msra.mxu0 0.0
    %1377 = vmatprep.subr.mxu0 0.0
    %1378 = vmatpush1.msra.mxu0 0.0
    %1379 = vmatprep.subr.mxu0 0.0
    %1380 = vmatpush1.msra.mxu0 0.0
    %1381 = vmatprep.subr.mxu0 0.0
    %1382 = vmatpush1.msra.mxu0 0.0
    %1383 = vmatprep.subr.mxu0 0.0
    %1384 = vmatpush1.msra.mxu0 0.0
    %1385 = vmatprep.subr.mxu0 0.0
    %1386 = vmatpush1.msra.mxu0 0.0
    %1387 = vmatprep.subr.mxu0 0.0
    %1388 = vmatpush1.msra.mxu0 0.0
    %1389 = vmatprep.subr.mxu0 0.0
    %1390 = vmatpush1.msra.mxu0 0.0
    %1391 = vmatprep.subr.mxu0 0.0
    %1392 = vmatpush1.msra.mxu0 0.0
    %1393 = vmatprep.mubr.f32.mxu0 0.0
    %1394 = vmatmul.mubr.f32.gmra.mrb[0].mxu0 %v1318
    %v1395 = vpop.f32.mrb[0].mxu0
    %v1396 = vadd.f32 0.0, %v1395
    %v1397 = vpop.f32.mrb[0].mxu0
    %1398 = vmatprep.mubr.f32.mxu0 0.0
    %1399 = vmatmul.mubr.f32.gmra.mrb[0].mxu0 %v1321
    %v1400 = vpop.f32.mrb[0].mxu0
    %v1401 = vadd.f32 0.0, %v1400
    %v1402 = vpop.f32.mrb[0].mxu0
    %1403 = vmatprep.mubr.f32.mxu0 0.0
    %1404 = vmatmul.mubr.f32.gmra.mrb[0].mxu0 %v1324
    %v1405 = vpop.f32.mrb[0].mxu0
    %v1406 = vadd.f32 0.0, %v1405
    %v1407 = vpop.f32.mrb[0].mxu0
    %1408 = vmatprep.mubr.f32.mxu0 0.0
    %1409 = vmatmul.mubr.f32.gmra.mrb[0].mxu0 %v1327
    %v1410 = vpop.f32.mrb[0].mxu0
    %v1411 = vadd.f32 0.0, %v1410
    %v1412 = vpop.f32.mrb[0].mxu0
    %1413 = vdwg.mxu0
    %v1414 = vadd.f32 %v1308, %v1396
    %v1415 = vadd.f32 %v1309, %v1401
    %v1416 = vadd.f32 %v1310, %v1406
    %v1417 = vadd.f32 %v1311, %v1411
    %1418 = vst.msk [vmem:[%s1297] sm:$0xff] %vm671, %v1414
    %1419 = vst.msk [vmem:[%s1297 + $0x8] sm:$0xff] %vm671, %v1415
    %1420 = vst.msk [vmem:[%s1297 + $0x10] sm:$0xff] %vm671, %v1416
    %1421 = vst.msk [vmem:[%s1297 + $0x18] sm:$0xff] %vm671, %v1417
    %1422 = vst.msk [vmem:[%s1256] sm:$0x1] %vm709, %v1267
    %s1423 = scalar_lea.vmem [#allocation5], 96
    %v1424 = vld [vmem:[%s1423] sm:$0xff]
    %v1425 = vld [vmem:[%s1423 + $0x8] sm:$0xff]
    %v1426 = vld [vmem:[%s1423 + $0x10] sm:$0xff]
    %v1427 = vld [vmem:[%s1423 + $0x18] sm:$0xff]
    %v1428 = vmul.f32 %v1424, 0.17677669
    %v1429 = vmul.f32 %v1425, 0.17677669
    %v1430 = vmul.f32 %v1426, 0.17677669
    %v1431 = vmul.f32 %v1427, 0.17677669
    %s1432 = scalar_lea.vmem [#allocation6], 96
    %v1433 = vld [vmem:[%s1432] sm:$0xff]
    %v1434 = vld [vmem:[%s1432 + $0x8] sm:$0xff]
    %v1435 = vld [vmem:[%s1432 + $0x10] sm:$0xff]
    %v1436 = vld [vmem:[%s1432 + $0x18] sm:$0xff]
    %1437 = vxpose.xlu0.b32.start [1/16] %v1433, 128
    %1438 = vxpose.xlu0.b32.cont [2/16] %v1434, 128
    %1439 = vxpose.xlu0.b32.cont [3/16] %v1435, 128
    %1440 = vxpose.xlu0.b32.cont [4/16] %v1436, 128
    %1441 = vxpose.xlu0.b32.cont [5/16] 0.0, 128
    %1442 = vxpose.xlu0.b32.cont [6/16] 0.0, 128
    %1443 = vxpose.xlu0.b32.cont [7/16] 0.0, 128
    %1444 = vxpose.xlu0.b32.cont [8/16] 0.0, 128
    %1445 = vxpose.xlu0.b32.cont [9/16] 0.0, 128
    %1446 = vxpose.xlu0.b32.cont [10/16] 0.0, 128
    %1447 = vxpose.xlu0.b32.cont [11/16] 0.0, 128
    %1448 = vxpose.xlu0.b32.cont [12/16] 0.0, 128
    %1449 = vxpose.xlu0.b32.cont [13/16] 0.0, 128
    %1450 = vxpose.xlu0.b32.cont [14/16] 0.0, 128
    %1451 = vxpose.xlu0.b32.cont [15/16] 0.0, 128
    %1452 = vxpose.xlu0.b32.end [16/16] 0.0, 128
    %v1453 = vpop.trf.xlu0
    %v1454 = vpop.trf.xlu0
    %v1455 = vpop.trf.xlu0
    %v1456 = vpop.trf.xlu0
    %v1457 = vpop.trf.xlu0
    %v1458 = vpop.trf.xlu0
    %v1459 = vpop.trf.xlu0
    %v1460 = vpop.trf.xlu0
    %v1461 = vpop.trf.xlu0
    %v1462 = vpop.trf.xlu0
    %v1463 = vpop.trf.xlu0
    %v1464 = vpop.trf.xlu0
    %v1465 = vpop.trf.xlu0
    %v1466 = vpop.trf.xlu0
    %v1467 = vpop.trf.xlu0
    %v1468 = vpop.trf.xlu0
    %v1470 = vsel %vm588, %v1453, 0
    %v1473 = vsel %vm588, %v1454, 0
    %1475 = vmatprep.subr.mxu0 0.0
    %1476 = vmatpush1.msra.mxu0 %v1428
    %1477 = vmatprep.subr.mxu0 0.0
    %1478 = vmatpush1.msra.mxu0 %v1429
    %1479 = vmatprep.subr.mxu0 0.0
    %1480 = vmatpush1.msra.mxu0 %v1430
    %1481 = vmatprep.subr.mxu0 0.0
    %1482 = vmatpush1.msra.mxu0 %v1431
    %1483 = vmatprep.subr.mxu0 0.0
    %1484 = vmatpush1.msra.mxu0 0.0
    %1485 = vmatprep.subr.mxu0 0.0
    %1486 = vmatpush1.msra.mxu0 0.0
    %1487 = vmatprep.subr.mxu0 0.0
    %1488 = vmatpush1.msra.mxu0 0.0
    %1489 = vmatprep.subr.mxu0 0.0
    %1490 = vmatpush1.msra.mxu0 0.0
    %1491 = vmatprep.subr.mxu0 0.0
    %1492 = vmatpush1.msra.mxu0 0.0
    %1493 = vmatprep.subr.mxu0 0.0
    %1494 = vmatpush1.msra.mxu0 0.0
    %1495 = vmatprep.subr.mxu0 0.0
    %1496 = vmatpush1.msra.mxu0 0.0
    %1497 = vmatprep.subr.mxu0 0.0
    %1498 = vmatpush1.msra.mxu0 0.0
    %1499 = vmatprep.subr.mxu0 0.0
    %1500 = vmatpush1.msra.mxu0 0.0
    %1501 = vmatprep.subr.mxu0 0.0
    %1502 = vmatpush1.msra.mxu0 0.0
    %1503 = vmatprep.subr.mxu0 0.0
    %1504 = vmatpush1.msra.mxu0 0.0
    %1505 = vmatprep.subr.mxu0 0.0
    %1506 = vmatpush1.msra.mxu0 0.0
    %1507 = vmatprep.subr.mxu0 0.0
    %1508 = vmatpush1.msra.mxu0 0.0
    %1509 = vmatprep.subr.mxu0 0.0
    %1510 = vmatpush1.msra.mxu0 0.0
    %1511 = vmatprep.subr.mxu0 0.0
    %1512 = vmatpush1.msra.mxu0 0.0
    %1513 = vmatprep.subr.mxu0 0.0
    %1514 = vmatpush1.msra.mxu0 0.0
    %1515 = vmatprep.subr.mxu0 0.0
    %1516 = vmatpush1.msra.mxu0 0.0
    %1517 = vmatprep.subr.mxu0 0.0
    %1518 = vmatpush1.msra.mxu0 0.0
    %1519 = vmatprep.subr.mxu0 0.0
    %1520 = vmatpush1.msra.mxu0 0.0
    %1521 = vmatprep.subr.mxu0 0.0
    %1522 = vmatpush1.msra.mxu0 0.0
    %1523 = vmatprep.subr.mxu0 0.0
    %1524 = vmatpush1.msra.mxu0 0.0
    %1525 = vmatprep.subr.mxu0 0.0
    %1526 = vmatpush1.msra.mxu0 0.0
    %1527 = vmatprep.subr.mxu0 0.0
    %1528 = vmatpush1.msra.mxu0 0.0
    %1529 = vmatprep.subr.mxu0 0.0
    %1530 = vmatpush1.msra.mxu0 0.0
    %1531 = vmatprep.subr.mxu0 0.0
    %1532 = vmatpush1.msra.mxu0 0.0
    %1533 = vmatprep.subr.mxu0 0.0
    %1534 = vmatpush1.msra.mxu0 0.0
    %1535 = vmatprep.subr.mxu0 0.0
    %1536 = vmatpush1.msra.mxu0 0.0
    %1537 = vmatprep.subr.mxu0 0.0
    %1538 = vmatpush1.msra.mxu0 0.0
    %1539 = vmatprep.mubr.f32.mxu0 0.0
    %1540 = vmatmul.mubr.f32.gmra.mrb[0].mxu0 %v1470
    %v1541 = vpop.f32.mrb[0].mxu0
    %v1542 = vadd.f32 0.0, %v1541
    %v1543 = vpop.f32.mrb[0].mxu0
    %1544 = vmatprep.mubr.f32.mxu0 0.0
    %1545 = vmatmul.mubr.f32.gmra.mrb[0].mxu0 %v1473
    %v1546 = vpop.f32.mrb[0].mxu0
    %v1547 = vadd.f32 0.0, %v1546
    %v1548 = vpop.f32.mrb[0].mxu0
    %1549 = vdwg.mxu0
    %s1550 = scalar_lea.vmem [#allocation2], 3
    %v1551 = vld [vmem:[%s1550] sm:$0x1]
    %v1552 = vsel %vm671, %v1542, -inf
    %v1553 = vsel %vm671, %v1547, -inf
    %v1554 = vmax.f32 %v1552, %v1553
    %v1555 = vrot.slane %v1554, 4
    %v1556 = vmax.f32 %v1554, %v1555
    %v1557 = vrot.slane %v1556, 2
    %v1558 = vmax.f32 %v1556, %v1557
    %v1559 = vrot.slane %v1558, 1
    %v1560 = vmax.f32 %v1558, %v1559
    %v1561 = vmax.f32 %v1551, %v1560
    %v1562 = vsub.f32 %v1551, %v1561
    %v1563 = vmul.f32 %v1562, 1.442695
    %v1564 = vpow.pop %v1563
    %v1566 = vlaneseq
    %v1567 = vshrl.u32 %v1566, 7
    %v1568 = vsub.s32 0, %v1567
    %v1569 = vrot.slane %v1561, %v1568
    %v1571 = vsub.f32 %v1542, %v1569
    %v1572 = vsub.f32 %v1547, %v1569
    %v1573 = vmul.f32 %v1571, 1.442695
    %v1574 = vpow.pop %v1573
    %v1575 = vmul.f32 %v1572, 1.442695
    %v1576 = vpow.pop %v1575
    %s1577 = scalar_lea.vmem [#allocation3], 3
    %v1578 = vld [vmem:[%s1577] sm:$0x1]
    %v1579 = vmul.f32 %v1564, %v1578
    %v1580 = vsel %vm671, %v1574, 0.0
    %v1581 = vsel %vm671, %v1576, 0.0
    %v1582 = vadd.f32 %v1580, %v1581
    %v1583 = vrot.slane %v1582, 4
    %v1584 = vadd.f32 %v1582, %v1583
    %v1585 = vrot.slane %v1584, 2
    %v1586 = vadd.f32 %v1584, %v1585
    %v1587 = vrot.slane %v1586, 1
    %v1588 = vadd.f32 %v1586, %v1587
    %v1589 = vadd.f32 %v1579, %v1588
    %1590 = vst.msk [vmem:[%s1577] sm:$0x1] %vm709, %v1589
    %s1591 = scalar_lea.vmem [#allocation4], 96
    %v1592 = vld [vmem:[%s1591] sm:$0xff]
    %v1593 = vld [vmem:[%s1591 + $0x8] sm:$0xff]
    %v1594 = vld [vmem:[%s1591 + $0x10] sm:$0xff]
    %v1595 = vld [vmem:[%s1591 + $0x18] sm:$0xff]
    %v1597 = vlaneseq
    %v1598 = vshrl.u32 %v1597, 7
    %v1599 = vsub.s32 0, %v1598
    %v1600 = vrot.slane %v1564, %v1599
    %v1602 = vmul.f32 %v1600, %v1592
    %v1603 = vmul.f32 %v1600, %v1593
    %v1604 = vmul.f32 %v1600, %v1594
    %v1605 = vmul.f32 %v1600, %v1595
    %s1606 = scalar_lea.vmem [#allocation7], 96
    %v1607 = vld [vmem:[%s1606] sm:$0xff]
    %v1608 = vld [vmem:[%s1606 + $0x8] sm:$0xff]
    %v1609 = vld [vmem:[%s1606 + $0x10] sm:$0xff]
    %v1610 = vld [vmem:[%s1606 + $0x18] sm:$0xff]
    %v1612 = vsel %vm671, %v1607, 0
    %v1615 = vsel %vm671, %v1608, 0
    %v1618 = vsel %vm671, %v1609, 0
    %v1621 = vsel %vm671, %v1610, 0
    %1623 = vmatprep.subr.mxu0 0.0
    %1624 = vmatpush1.msra.mxu0 %v1574
    %1625 = vmatprep.subr.mxu0 0.0
    %1626 = vmatpush1.msra.mxu0 %v1576
    %1627 = vmatprep.subr.mxu0 0.0
    %1628 = vmatpush1.msra.mxu0 0.0
    %1629 = vmatprep.subr.mxu0 0.0
    %1630 = vmatpush1.msra.mxu0 0.0
    %1631 = vmatprep.subr.mxu0 0.0
    %1632 = vmatpush1.msra.mxu0 0.0
    %1633 = vmatprep.subr.mxu0 0.0
    %1634 = vmatpush1.msra.mxu0 0.0
    %1635 = vmatprep.subr.mxu0 0.0
    %1636 = vmatpush1.msra.mxu0 0.0
    %1637 = vmatprep.subr.mxu0 0.0
    %1638 = vmatpush1.msra.mxu0 0.0
    %1639 = vmatprep.subr.mxu0 0.0
    %1640 = vmatpush1.msra.mxu0 0.0
    %1641 = vmatprep.subr.mxu0 0.0
    %1642 = vmatpush1.msra.mxu0 0.0
    %1643 = vmatprep.subr.mxu0 0.0
    %1644 = vmatpush1.msra.mxu0 0.0
    %1645 = vmatprep.subr.mxu0 0.0
    %1646 = vmatpush1.msra.mxu0 0.0
    %1647 = vmatprep.subr.mxu0 0.0
    %1648 = vmatpush1.msra.mxu0 0.0
    %1649 = vmatprep.subr.mxu0 0.0
    %1650 = vmatpush1.msra.mxu0 0.0
    %1651 = vmatprep.subr.mxu0 0.0
    %1652 = vmatpush1.msra.mxu0 0.0
    %1653 = vmatprep.subr.mxu0 0.0
    %1654 = vmatpush1.msra.mxu0 0.0
    %1655 = vmatprep.subr.mxu0 0.0
    %1656 = vmatpush1.msra.mxu0 0.0
    %1657 = vmatprep.subr.mxu0 0.0
    %1658 = vmatpush1.msra.mxu0 0.0
    %1659 = vmatprep.subr.mxu0 0.0
    %1660 = vmatpush1.msra.mxu0 0.0
    %1661 = vmatprep.subr.mxu0 0.0
    %1662 = vmatpush1.msra.mxu0 0.0
    %1663 = vmatprep.subr.mxu0 0.0
    %1664 = vmatpush1.msra.mxu0 0.0
    %1665 = vmatprep.subr.mxu0 0.0
    %1666 = vmatpush1.msra.mxu0 0.0
    %1667 = vmatprep.subr.mxu0 0.0
    %1668 = vmatpush1.msra.mxu0 0.0
    %1669 = vmatprep.subr.mxu0 0.0
    %1670 = vmatpush1.msra.mxu0 0.0
    %1671 = vmatprep.subr.mxu0 0.0
    %1672 = vmatpush1.msra.mxu0 0.0
    %1673 = vmatprep.subr.mxu0 0.0
    %1674 = vmatpush1.msra.mxu0 0.0
    %1675 = vmatprep.subr.mxu0 0.0
    %1676 = vmatpush1.msra.mxu0 0.0
    %1677 = vmatprep.subr.mxu0 0.0
    %1678 = vmatpush1.msra.mxu0 0.0
    %1679 = vmatprep.subr.mxu0 0.0
    %1680 = vmatpush1.msra.mxu0 0.0
    %1681 = vmatprep.subr.mxu0 0.0
    %1682 = vmatpush1.msra.mxu0 0.0
    %1683 = vmatprep.subr.mxu0 0.0
    %1684 = vmatpush1.msra.mxu0 0.0
    %1685 = vmatprep.subr.mxu0 0.0
    %1686 = vmatpush1.msra.mxu0 0.0
    %1687 = vmatprep.mubr.f32.mxu0 0.0
    %1688 = vmatmul.mubr.f32.gmra.mrb[0].mxu0 %v1612
    %v1689 = vpop.f32.mrb[0].mxu0
    %v1690 = vadd.f32 0.0, %v1689
    %v1691 = vpop.f32.mrb[0].mxu0
    %1692 = vmatprep.mubr.f32.mxu0 0.0
    %1693 = vmatmul.mubr.f32.gmra.mrb[0].mxu0 %v1615
    %v1694 = vpop.f32.mrb[0].mxu0
    %v1695 = vadd.f32 0.0, %v1694
    %v1696 = vpop.f32.mrb[0].mxu0
    %1697 = vmatprep.mubr.f32.mxu0 0.0
    %1698 = vmatmul.mubr.f32.gmra.mrb[0].mxu0 %v1618
    %v1699 = vpop.f32.mrb[0].mxu0
    %v1700 = vadd.f32 0.0, %v1699
    %v1701 = vpop.f32.mrb[0].mxu0
    %1702 = vmatprep.mubr.f32.mxu0 0.0
    %1703 = vmatmul.mubr.f32.gmra.mrb[0].mxu0 %v1621
    %v1704 = vpop.f32.mrb[0].mxu0
    %v1705 = vadd.f32 0.0, %v1704
    %v1706 = vpop.f32.mrb[0].mxu0
    %1707 = vdwg.mxu0
    %v1708 = vadd.f32 %v1602, %v1690
    %v1709 = vadd.f32 %v1603, %v1695
    %v1710 = vadd.f32 %v1604, %v1700
    %v1711 = vadd.f32 %v1605, %v1705
    %1712 = vst.msk [vmem:[%s1591] sm:$0xff] %vm671, %v1708
    %1713 = vst.msk [vmem:[%s1591 + $0x8] sm:$0xff] %vm671, %v1709
    %1714 = vst.msk [vmem:[%s1591 + $0x10] sm:$0xff] %vm671, %v1710
    %1715 = vst.msk [vmem:[%s1591 + $0x18] sm:$0xff] %vm671, %v1711
    %1716 = vst.msk [vmem:[%s1550] sm:$0x1] %vm709, %v1561
    %s1717 = scalar_lea.vmem [#allocation5], 128
    %v1718 = vld [vmem:[%s1717] sm:$0xff]
    %v1719 = vld [vmem:[%s1717 + $0x8] sm:$0xff]
    %v1720 = vld [vmem:[%s1717 + $0x10] sm:$0xff]
    %v1721 = vld [vmem:[%s1717 + $0x18] sm:$0xff]
    %v1722 = vmul.f32 %v1718, 0.17677669
    %v1723 = vmul.f32 %v1719, 0.17677669
    %v1724 = vmul.f32 %v1720, 0.17677669
    %v1725 = vmul.f32 %v1721, 0.17677669
    %s1726 = scalar_lea.vmem [#allocation6], 128
    %v1727 = vld [vmem:[%s1726] sm:$0xff]
    %v1728 = vld [vmem:[%s1726 + $0x8] sm:$0xff]
    %v1729 = vld [vmem:[%s1726 + $0x10] sm:$0xff]
    %v1730 = vld [vmem:[%s1726 + $0x18] sm:$0xff]
    %1731 = vxpose.xlu0.b32.start [1/16] %v1727, 128
    %1732 = vxpose.xlu0.b32.cont [2/16] %v1728, 128
    %1733 = vxpose.xlu0.b32.cont [3/16] %v1729, 128
    %1734 = vxpose.xlu0.b32.cont [4/16] %v1730, 128
    %1735 = vxpose.xlu0.b32.cont [5/16] 0.0, 128
    %1736 = vxpose.xlu0.b32.cont [6/16] 0.0, 128
    %1737 = vxpose.xlu0.b32.cont [7/16] 0.0, 128
    %1738 = vxpose.xlu0.b32.cont [8/16] 0.0, 128
    %1739 = vxpose.xlu0.b32.cont [9/16] 0.0, 128
    %1740 = vxpose.xlu0.b32.cont [10/16] 0.0, 128
    %1741 = vxpose.xlu0.b32.cont [11/16] 0.0, 128
    %1742 = vxpose.xlu0.b32.cont [12/16] 0.0, 128
    %1743 = vxpose.xlu0.b32.cont [13/16] 0.0, 128
    %1744 = vxpose.xlu0.b32.cont [14/16] 0.0, 128
    %1745 = vxpose.xlu0.b32.cont [15/16] 0.0, 128
    %1746 = vxpose.xlu0.b32.end [16/16] 0.0, 128
    %v1747 = vpop.trf.xlu0
    %v1748 = vpop.trf.xlu0
    %v1749 = vpop.trf.xlu0
    %v1750 = vpop.trf.xlu0
    %v1751 = vpop.trf.xlu0
    %v1752 = vpop.trf.xlu0
    %v1753 = vpop.trf.xlu0
    %v1754 = vpop.trf.xlu0
    %v1755 = vpop.trf.xlu0
    %v1756 = vpop.trf.xlu0
    %v1757 = vpop.trf.xlu0
    %v1758 = vpop.trf.xlu0
    %v1759 = vpop.trf.xlu0
    %v1760 = vpop.trf.xlu0
    %v1761 = vpop.trf.xlu0
    %v1762 = vpop.trf.xlu0
    %v1764 = vsel %vm588, %v1747, 0
    %v1767 = vsel %vm588, %v1748, 0
    %1769 = vmatprep.subr.mxu0 0.0
    %1770 = vmatpush1.msra.mxu0 %v1722
    %1771 = vmatprep.subr.mxu0 0.0
    %1772 = vmatpush1.msra.mxu0 %v1723
    %1773 = vmatprep.subr.mxu0 0.0
    %1774 = vmatpush1.msra.mxu0 %v1724
    %1775 = vmatprep.subr.mxu0 0.0
    %1776 = vmatpush1.msra.mxu0 %v1725
    %1777 = vmatprep.subr.mxu0 0.0
    %1778 = vmatpush1.msra.mxu0 0.0
    %1779 = vmatprep.subr.mxu0 0.0
    %1780 = vmatpush1.msra.mxu0 0.0
    %1781 = vmatprep.subr.mxu0 0.0
    %1782 = vmatpush1.msra.mxu0 0.0
    %1783 = vmatprep.subr.mxu0 0.0
    %1784 = vmatpush1.msra.mxu0 0.0
    %1785 = vmatprep.subr.mxu0 0.0
    %1786 = vmatpush1.msra.mxu0 0.0
    %1787 = vmatprep.subr.mxu0 0.0
    %1788 = vmatpush1.msra.mxu0 0.0
    %1789 = vmatprep.subr.mxu0 0.0
    %1790 = vmatpush1.msra.mxu0 0.0
    %1791 = vmatprep.subr.mxu0 0.0
    %1792 = vmatpush1.msra.mxu0 0.0
    %1793 = vmatprep.subr.mxu0 0.0
    %1794 = vmatpush1.msra.mxu0 0.0
    %1795 = vmatprep.subr.mxu0 0.0
    %1796 = vmatpush1.msra.mxu0 0.0
    %1797 = vmatprep.subr.mxu0 0.0
    %1798 = vmatpush1.msra.mxu0 0.0
    %1799 = vmatprep.subr.mxu0 0.0
    %1800 = vmatpush1.msra.mxu0 0.0
    %1801 = vmatprep.subr.mxu0 0.0
    %1802 = vmatpush1.msra.mxu0 0.0
    %1803 = vmatprep.subr.mxu0 0.0
    %1804 = vmatpush1.msra.mxu0 0.0
    %1805 = vmatprep.subr.mxu0 0.0
    %1806 = vmatpush1.msra.mxu0 0.0
    %1807 = vmatprep.subr.mxu0 0.0
    %1808 = vmatpush1.msra.mxu0 0.0
    %1809 = vmatprep.subr.mxu0 0.0
    %1810 = vmatpush1.msra.mxu0 0.0
    %1811 = vmatprep.subr.mxu0 0.0
    %1812 = vmatpush1.msra.mxu0 0.0
    %1813 = vmatprep.subr.mxu0 0.0
    %1814 = vmatpush1.msra.mxu0 0.0
    %1815 = vmatprep.subr.mxu0 0.0
    %1816 = vmatpush1.msra.mxu0 0.0
    %1817 = vmatprep.subr.mxu0 0.0
    %1818 = vmatpush1.msra.mxu0 0.0
    %1819 = vmatprep.subr.mxu0 0.0
    %1820 = vmatpush1.msra.mxu0 0.0
    %1821 = vmatprep.subr.mxu0 0.0
    %1822 = vmatpush1.msra.mxu0 0.0
    %1823 = vmatprep.subr.mxu0 0.0
    %1824 = vmatpush1.msra.mxu0 0.0
    %1825 = vmatprep.subr.mxu0 0.0
    %1826 = vmatpush1.msra.mxu0 0.0
    %1827 = vmatprep.subr.mxu0 0.0
    %1828 = vmatpush1.msra.mxu0 0.0
    %1829 = vmatprep.subr.mxu0 0.0
    %1830 = vmatpush1.msra.mxu0 0.0
    %1831 = vmatprep.subr.mxu0 0.0
    %1832 = vmatpush1.msra.mxu0 0.0
    %1833 = vmatprep.mubr.f32.mxu0 0.0
    %1834 = vmatmul.mubr.f32.gmra.mrb[0].mxu0 %v1764
    %v1835 = vpop.f32.mrb[0].mxu0
    %v1836 = vadd.f32 0.0, %v1835
    %v1837 = vpop.f32.mrb[0].mxu0
    %1838 = vmatprep.mubr.f32.mxu0 0.0
    %1839 = vmatmul.mubr.f32.gmra.mrb[0].mxu0 %v1767
    %v1840 = vpop.f32.mrb[0].mxu0
    %v1841 = vadd.f32 0.0, %v1840
    %v1842 = vpop.f32.mrb[0].mxu0
    %1843 = vdwg.mxu0
    %s1844 = scalar_lea.vmem [#allocation2], 4
    %v1845 = vld [vmem:[%s1844] sm:$0x1]
    %v1846 = vsel %vm671, %v1836, -inf
    %v1847 = vsel %vm671, %v1841, -inf
    %v1848 = vmax.f32 %v1846, %v1847
    %v1849 = vrot.slane %v1848, 4
    %v1850 = vmax.f32 %v1848, %v1849
    %v1851 = vrot.slane %v1850, 2
    %v1852 = vmax.f32 %v1850, %v1851
    %v1853 = vrot.slane %v1852, 1
    %v1854 = vmax.f32 %v1852, %v1853
    %v1855 = vmax.f32 %v1845, %v1854
    %v1856 = vsub.f32 %v1845, %v1855
    %v1857 = vmul.f32 %v1856, 1.442695
    %v1858 = vpow.pop %v1857
    %v1860 = vlaneseq
    %v1861 = vshrl.u32 %v1860, 7
    %v1862 = vsub.s32 0, %v1861
    %v1863 = vrot.slane %v1855, %v1862
    %v1865 = vsub.f32 %v1836, %v1863
    %v1866 = vsub.f32 %v1841, %v1863
    %v1867 = vmul.f32 %v1865, 1.442695
    %v1868 = vpow.pop %v1867
    %v1869 = vmul.f32 %v1866, 1.442695
    %v1870 = vpow.pop %v1869
    %s1871 = scalar_lea.vmem [#allocation3], 4
    %v1872 = vld [vmem:[%s1871] sm:$0x1]
    %v1873 = vmul.f32 %v1858, %v1872
    %v1874 = vsel %vm671, %v1868, 0.0
    %v1875 = vsel %vm671, %v1870, 0.0
    %v1876 = vadd.f32 %v1874, %v1875
    %v1877 = vrot.slane %v1876, 4
    %v1878 = vadd.f32 %v1876, %v1877
    %v1879 = vrot.slane %v1878, 2
    %v1880 = vadd.f32 %v1878, %v1879
    %v1881 = vrot.slane %v1880, 1
    %v1882 = vadd.f32 %v1880, %v1881
    %v1883 = vadd.f32 %v1873, %v1882
    %1884 = vst.msk [vmem:[%s1871] sm:$0x1] %vm709, %v1883
    %s1885 = scalar_lea.vmem [#allocation4], 128
    %v1886 = vld [vmem:[%s1885] sm:$0xff]
    %v1887 = vld [vmem:[%s1885 + $0x8] sm:$0xff]
    %v1888 = vld [vmem:[%s1885 + $0x10] sm:$0xff]
    %v1889 = vld [vmem:[%s1885 + $0x18] sm:$0xff]
    %v1891 = vlaneseq
    %v1892 = vshrl.u32 %v1891, 7
    %v1893 = vsub.s32 0, %v1892
    %v1894 = vrot.slane %v1858, %v1893
    %v1896 = vmul.f32 %v1894, %v1886
    %v1897 = vmul.f32 %v1894, %v1887
    %v1898 = vmul.f32 %v1894, %v1888
    %v1899 = vmul.f32 %v1894, %v1889
    %s1900 = scalar_lea.vmem [#allocation7], 128
    %v1901 = vld [vmem:[%s1900] sm:$0xff]
    %v1902 = vld [vmem:[%s1900 + $0x8] sm:$0xff]
    %v1903 = vld [vmem:[%s1900 + $0x10] sm:$0xff]
    %v1904 = vld [vmem:[%s1900 + $0x18] sm:$0xff]
    %v1906 = vsel %vm671, %v1901, 0
    %v1909 = vsel %vm671, %v1902, 0
    %v1912 = vsel %vm671, %v1903, 0
    %v1915 = vsel %vm671, %v1904, 0
    %1917 = vmatprep.subr.mxu0 0.0
    %1918 = vmatpush1.msra.mxu0 %v1868
    %1919 = vmatprep.subr.mxu0 0.0
    %1920 = vmatpush1.msra.mxu0 %v1870
    %1921 = vmatprep.subr.mxu0 0.0
    %1922 = vmatpush1.msra.mxu0 0.0
    %1923 = vmatprep.subr.mxu0 0.0
    %1924 = vmatpush1.msra.mxu0 0.0
    %1925 = vmatprep.subr.mxu0 0.0
    %1926 = vmatpush1.msra.mxu0 0.0
    %1927 = vmatprep.subr.mxu0 0.0
    %1928 = vmatpush1.msra.mxu0 0.0
    %1929 = vmatprep.subr.mxu0 0.0
    %1930 = vmatpush1.msra.mxu0 0.0
    %1931 = vmatprep.subr.mxu0 0.0
    %1932 = vmatpush1.msra.mxu0 0.0
    %1933 = vmatprep.subr.mxu0 0.0
    %1934 = vmatpush1.msra.mxu0 0.0
    %1935 = vmatprep.subr.mxu0 0.0
    %1936 = vmatpush1.msra.mxu0 0.0
    %1937 = vmatprep.subr.mxu0 0.0
    %1938 = vmatpush1.msra.mxu0 0.0
    %1939 = vmatprep.subr.mxu0 0.0
    %1940 = vmatpush1.msra.mxu0 0.0
    %1941 = vmatprep.subr.mxu0 0.0
    %1942 = vmatpush1.msra.mxu0 0.0
    %1943 = vmatprep.subr.mxu0 0.0
    %1944 = vmatpush1.msra.mxu0 0.0
    %1945 = vmatprep.subr.mxu0 0.0
    %1946 = vmatpush1.msra.mxu0 0.0
    %1947 = vmatprep.subr.mxu0 0.0
    %1948 = vmatpush1.msra.mxu0 0.0
    %1949 = vmatprep.subr.mxu0 0.0
    %1950 = vmatpush1.msra.mxu0 0.0
    %1951 = vmatprep.subr.mxu0 0.0
    %1952 = vmatpush1.msra.mxu0 0.0
    %1953 = vmatprep.subr.mxu0 0.0
    %1954 = vmatpush1.msra.mxu0 0.0
    %1955 = vmatprep.subr.mxu0 0.0
    %1956 = vmatpush1.msra.mxu0 0.0
    %1957 = vmatprep.subr.mxu0 0.0
    %1958 = vmatpush1.msra.mxu0 0.0
    %1959 = vmatprep.subr.mxu0 0.0
    %1960 = vmatpush1.msra.mxu0 0.0
    %1961 = vmatprep.subr.mxu0 0.0
    %1962 = vmatpush1.msra.mxu0 0.0
    %1963 = vmatprep.subr.mxu0 0.0
    %1964 = vmatpush1.msra.mxu0 0.0
    %1965 = vmatprep.subr.mxu0 0.0
    %1966 = vmatpush1.msra.mxu0 0.0
    %1967 = vmatprep.subr.mxu0 0.0
    %1968 = vmatpush1.msra.mxu0 0.0
    %1969 = vmatprep.subr.mxu0 0.0
    %1970 = vmatpush1.msra.mxu0 0.0
    %1971 = vmatprep.subr.mxu0 0.0
    %1972 = vmatpush1.msra.mxu0 0.0
    %1973 = vmatprep.subr.mxu0 0.0
    %1974 = vmatpush1.msra.mxu0 0.0
    %1975 = vmatprep.subr.mxu0 0.0
    %1976 = vmatpush1.msra.mxu0 0.0
    %1977 = vmatprep.subr.mxu0 0.0
    %1978 = vmatpush1.msra.mxu0 0.0
    %1979 = vmatprep.subr.mxu0 0.0
    %1980 = vmatpush1.msra.mxu0 0.0
    %1981 = vmatprep.mubr.f32.mxu0 0.0
    %1982 = vmatmul.mubr.f32.gmra.mrb[0].mxu0 %v1906
    %v1983 = vpop.f32.mrb[0].mxu0
    %v1984 = vadd.f32 0.0, %v1983
    %v1985 = vpop.f32.mrb[0].mxu0
    %1986 = vmatprep.mubr.f32.mxu0 0.0
    %1987 = vmatmul.mubr.f32.gmra.mrb[0].mxu0 %v1909
    %v1988 = vpop.f32.mrb[0].mxu0
    %v1989 = vadd.f32 0.0, %v1988
    %v1990 = vpop.f32.mrb[0].mxu0
    %1991 = vmatprep.mubr.f32.mxu0 0.0
    %1992 = vmatmul.mubr.f32.gmra.mrb[0].mxu0 %v1912
    %v1993 = vpop.f32.mrb[0].mxu0
    %v1994 = vadd.f32 0.0, %v1993
    %v1995 = vpop.f32.mrb[0].mxu0
    %1996 = vmatprep.mubr.f32.mxu0 0.0
    %1997 = vmatmul.mubr.f32.gmra.mrb[0].mxu0 %v1915
    %v1998 = vpop.f32.mrb[0].mxu0
    %v1999 = vadd.f32 0.0, %v1998
    %v2000 = vpop.f32.mrb[0].mxu0
    %2001 = vdwg.mxu0
    %v2002 = vadd.f32 %v1896, %v1984
    %v2003 = vadd.f32 %v1897, %v1989
    %v2004 = vadd.f32 %v1898, %v1994
    %v2005 = vadd.f32 %v1899, %v1999
    %2006 = vst.msk [vmem:[%s1885] sm:$0xff] %vm671, %v2002
    %2007 = vst.msk [vmem:[%s1885 + $0x8] sm:$0xff] %vm671, %v2003
    %2008 = vst.msk [vmem:[%s1885 + $0x10] sm:$0xff] %vm671, %v2004
    %2009 = vst.msk [vmem:[%s1885 + $0x18] sm:$0xff] %vm671, %v2005
    %2010 = vst.msk [vmem:[%s1844] sm:$0x1] %vm709, %v1855
    %s2011 = scalar_lea.vmem [#allocation5], 160
    %v2012 = vld [vmem:[%s2011] sm:$0xff]
    %v2013 = vld [vmem:[%s2011 + $0x8] sm:$0xff]
    %v2014 = vld [vmem:[%s2011 + $0x10] sm:$0xff]
    %v2015 = vld [vmem:[%s2011 + $0x18] sm:$0xff]
    %v2016 = vmul.f32 %v2012, 0.17677669
    %v2017 = vmul.f32 %v2013, 0.17677669
    %v2018 = vmul.f32 %v2014, 0.17677669
    %v2019 = vmul.f32 %v2015, 0.17677669
    %s2020 = scalar_lea.vmem [#allocation6], 160
    %v2021 = vld [vmem:[%s2020] sm:$0xff]
    %v2022 = vld [vmem:[%s2020 + $0x8] sm:$0xff]
    %v2023 = vld [vmem:[%s2020 + $0x10] sm:$0xff]
    %v2024 = vld [vmem:[%s2020 + $0x18] sm:$0xff]
    %2025 = vxpose.xlu0.b32.start [1/16] %v2021, 128
    %2026 = vxpose.xlu0.b32.cont [2/16] %v2022, 128
    %2027 = vxpose.xlu0.b32.cont [3/16] %v2023, 128
    %2028 = vxpose.xlu0.b32.cont [4/16] %v2024, 128
    %2029 = vxpose.xlu0.b32.cont [5/16] 0.0, 128
    %2030 = vxpose.xlu0.b32.cont [6/16] 0.0, 128
    %2031 = vxpose.xlu0.b32.cont [7/16] 0.0, 128
    %2032 = vxpose.xlu0.b32.cont [8/16] 0.0, 128
    %2033 = vxpose.xlu0.b32.cont [9/16] 0.0, 128
    %2034 = vxpose.xlu0.b32.cont [10/16] 0.0, 128
    %2035 = vxpose.xlu0.b32.cont [11/16] 0.0, 128
    %2036 = vxpose.xlu0.b32.cont [12/16] 0.0, 128
    %2037 = vxpose.xlu0.b32.cont [13/16] 0.0, 128
    %2038 = vxpose.xlu0.b32.cont [14/16] 0.0, 128
    %2039 = vxpose.xlu0.b32.cont [15/16] 0.0, 128
    %2040 = vxpose.xlu0.b32.end [16/16] 0.0, 128
    %v2041 = vpop.trf.xlu0
    %v2042 = vpop.trf.xlu0
    %v2043 = vpop.trf.xlu0
    %v2044 = vpop.trf.xlu0
    %v2045 = vpop.trf.xlu0
    %v2046 = vpop.trf.xlu0
    %v2047 = vpop.trf.xlu0
    %v2048 = vpop.trf.xlu0
    %v2049 = vpop.trf.xlu0
    %v2050 = vpop.trf.xlu0
    %v2051 = vpop.trf.xlu0
    %v2052 = vpop.trf.xlu0
    %v2053 = vpop.trf.xlu0
    %v2054 = vpop.trf.xlu0
    %v2055 = vpop.trf.xlu0
    %v2056 = vpop.trf.xlu0
    %v2058 = vsel %vm588, %v2041, 0
    %v2061 = vsel %vm588, %v2042, 0
    %2063 = vmatprep.subr.mxu0 0.0
    %2064 = vmatpush1.msra.mxu0 %v2016
    %2065 = vmatprep.subr.mxu0 0.0
    %2066 = vmatpush1.msra.mxu0 %v2017
    %2067 = vmatprep.subr.mxu0 0.0
    %2068 = vmatpush1.msra.mxu0 %v2018
    %2069 = vmatprep.subr.mxu0 0.0
    %2070 = vmatpush1.msra.mxu0 %v2019
    %2071 = vmatprep.subr.mxu0 0.0
    %2072 = vmatpush1.msra.mxu0 0.0
    %2073 = vmatprep.subr.mxu0 0.0
    %2074 = vmatpush1.msra.mxu0 0.0
    %2075 = vmatprep.subr.mxu0 0.0
    %2076 = vmatpush1.msra.mxu0 0.0
    %2077 = vmatprep.subr.mxu0 0.0
    %2078 = vmatpush1.msra.mxu0 0.0
    %2079 = vmatprep.subr.mxu0 0.0
    %2080 = vmatpush1.msra.mxu0 0.0
    %2081 = vmatprep.subr.mxu0 0.0
    %2082 = vmatpush1.msra.mxu0 0.0
    %2083 = vmatprep.subr.mxu0 0.0
    %2084 = vmatpush1.msra.mxu0 0.0
    %2085 = vmatprep.subr.mxu0 0.0
    %2086 = vmatpush1.msra.mxu0 0.0
    %2087 = vmatprep.subr.mxu0 0.0
    %2088 = vmatpush1.msra.mxu0 0.0
    %2089 = vmatprep.subr.mxu0 0.0
    %2090 = vmatpush1.msra.mxu0 0.0
    %2091 = vmatprep.subr.mxu0 0.0
    %2092 = vmatpush1.msra.mxu0 0.0
    %2093 = vmatprep.subr.mxu0 0.0
    %2094 = vmatpush1.msra.mxu0 0.0
    %2095 = vmatprep.subr.mxu0 0.0
    %2096 = vmatpush1.msra.mxu0 0.0
    %2097 = vmatprep.subr.mxu0 0.0
    %2098 = vmatpush1.msra.mxu0 0.0
    %2099 = vmatprep.subr.mxu0 0.0
    %2100 = vmatpush1.msra.mxu0 0.0
    %2101 = vmatprep.subr.mxu0 0.0
    %2102 = vmatpush1.msra.mxu0 0.0
    %2103 = vmatprep.subr.mxu0 0.0
    %2104 = vmatpush1.msra.mxu0 0.0
    %2105 = vmatprep.subr.mxu0 0.0
    %2106 = vmatpush1.msra.mxu0 0.0
    %2107 = vmatprep.subr.mxu0 0.0
    %2108 = vmatpush1.msra.mxu0 0.0
    %2109 = vmatprep.subr.mxu0 0.0
    %2110 = vmatpush1.msra.mxu0 0.0
    %2111 = vmatprep.subr.mxu0 0.0
    %2112 = vmatpush1.msra.mxu0 0.0
    %2113 = vmatprep.subr.mxu0 0.0
    %2114 = vmatpush1.msra.mxu0 0.0
    %2115 = vmatprep.subr.mxu0 0.0
    %2116 = vmatpush1.msra.mxu0 0.0
    %2117 = vmatprep.subr.mxu0 0.0
    %2118 = vmatpush1.msra.mxu0 0.0
    %2119 = vmatprep.subr.mxu0 0.0
    %2120 = vmatpush1.msra.mxu0 0.0
    %2121 = vmatprep.subr.mxu0 0.0
    %2122 = vmatpush1.msra.mxu0 0.0
    %2123 = vmatprep.subr.mxu0 0.0
    %2124 = vmatpush1.msra.mxu0 0.0
    %2125 = vmatprep.subr.mxu0 0.0
    %2126 = vmatpush1.msra.mxu0 0.0
    %2127 = vmatprep.mubr.f32.mxu0 0.0
    %2128 = vmatmul.mubr.f32.gmra.mrb[0].mxu0 %v2058
    %v2129 = vpop.f32.mrb[0].mxu0
    %v2130 = vadd.f32 0.0, %v2129
    %v2131 = vpop.f32.mrb[0].mxu0
    %2132 = vmatprep.mubr.f32.mxu0 0.0
    %2133 = vmatmul.mubr.f32.gmra.mrb[0].mxu0 %v2061
    %v2134 = vpop.f32.mrb[0].mxu0
    %v2135 = vadd.f32 0.0, %v2134
    %v2136 = vpop.f32.mrb[0].mxu0
    %2137 = vdwg.mxu0
    %s2138 = scalar_lea.vmem [#allocation2], 5
    %v2139 = vld [vmem:[%s2138] sm:$0x1]
    %v2140 = vsel %vm671, %v2130, -inf
    %v2141 = vsel %vm671, %v2135, -inf
    %v2142 = vmax.f32 %v2140, %v2141
    %v2143 = vrot.slane %v2142, 4
    %v2144 = vmax.f32 %v2142, %v2143
    %v2145 = vrot.slane %v2144, 2
    %v2146 = vmax.f32 %v2144, %v2145
    %v2147 = vrot.slane %v2146, 1
    %v2148 = vmax.f32 %v2146, %v2147
    %v2149 = vmax.f32 %v2139, %v2148
    %v2150 = vsub.f32 %v2139, %v2149
    %v2151 = vmul.f32 %v2150, 1.442695
    %v2152 = vpow.pop %v2151
    %v2154 = vlaneseq
    %v2155 = vshrl.u32 %v2154, 7
    %v2156 = vsub.s32 0, %v2155
    %v2157 = vrot.slane %v2149, %v2156
    %v2159 = vsub.f32 %v2130, %v2157
    %v2160 = vsub.f32 %v2135, %v2157
    %v2161 = vmul.f32 %v2159, 1.442695
    %v2162 = vpow.pop %v2161
    %v2163 = vmul.f32 %v2160, 1.442695
    %v2164 = vpow.pop %v2163
    %s2165 = scalar_lea.vmem [#allocation3], 5
    %v2166 = vld [vmem:[%s2165] sm:$0x1]
    %v2167 = vmul.f32 %v2152, %v2166
    %v2168 = vsel %vm671, %v2162, 0.0
    %v2169 = vsel %vm671, %v2164, 0.0
    %v2170 = vadd.f32 %v2168, %v2169
    %v2171 = vrot.slane %v2170, 4
    %v2172 = vadd.f32 %v2170, %v2171
    %v2173 = vrot.slane %v2172, 2
    %v2174 = vadd.f32 %v2172, %v2173
    %v2175 = vrot.slane %v2174, 1
    %v2176 = vadd.f32 %v2174, %v2175
    %v2177 = vadd.f32 %v2167, %v2176
    %2178 = vst.msk [vmem:[%s2165] sm:$0x1] %vm709, %v2177
    %s2179 = scalar_lea.vmem [#allocation4], 160
    %v2180 = vld [vmem:[%s2179] sm:$0xff]
    %v2181 = vld [vmem:[%s2179 + $0x8] sm:$0xff]
    %v2182 = vld [vmem:[%s2179 + $0x10] sm:$0xff]
    %v2183 = vld [vmem:[%s2179 + $0x18] sm:$0xff]
    %v2185 = vlaneseq
    %v2186 = vshrl.u32 %v2185, 7
    %v2187 = vsub.s32 0, %v2186
    %v2188 = vrot.slane %v2152, %v2187
    %v2190 = vmul.f32 %v2188, %v2180
    %v2191 = vmul.f32 %v2188, %v2181
    %v2192 = vmul.f32 %v2188, %v2182
    %v2193 = vmul.f32 %v2188, %v2183
    %s2194 = scalar_lea.vmem [#allocation7], 160
    %v2195 = vld [vmem:[%s2194] sm:$0xff]
    %v2196 = vld [vmem:[%s2194 + $0x8] sm:$0xff]
    %v2197 = vld [vmem:[%s2194 + $0x10] sm:$0xff]
    %v2198 = vld [vmem:[%s2194 + $0x18] sm:$0xff]
    %v2200 = vsel %vm671, %v2195, 0
    %v2203 = vsel %vm671, %v2196, 0
    %v2206 = vsel %vm671, %v2197, 0
    %v2209 = vsel %vm671, %v2198, 0
    %2211 = vmatprep.subr.mxu0 0.0
    %2212 = vmatpush1.msra.mxu0 %v2162
    %2213 = vmatprep.subr.mxu0 0.0
    %2214 = vmatpush1.msra.mxu0 %v2164
    %2215 = vmatprep.subr.mxu0 0.0
    %2216 = vmatpush1.msra.mxu0 0.0
    %2217 = vmatprep.subr.mxu0 0.0
    %2218 = vmatpush1.msra.mxu0 0.0
    %2219 = vmatprep.subr.mxu0 0.0
    %2220 = vmatpush1.msra.mxu0 0.0
    %2221 = vmatprep.subr.mxu0 0.0
    %2222 = vmatpush1.msra.mxu0 0.0
    %2223 = vmatprep.subr.mxu0 0.0
    %2224 = vmatpush1.msra.mxu0 0.0
    %2225 = vmatprep.subr.mxu0 0.0
    %2226 = vmatpush1.msra.mxu0 0.0
    %2227 = vmatprep.subr.mxu0 0.0
    %2228 = vmatpush1.msra.mxu0 0.0
    %2229 = vmatprep.subr.mxu0 0.0
    %2230 = vmatpush1.msra.mxu0 0.0
    %2231 = vmatprep.subr.mxu0 0.0
    %2232 = vmatpush1.msra.mxu0 0.0
    %2233 = vmatprep.subr.mxu0 0.0
    %2234 = vmatpush1.msra.mxu0 0.0
    %2235 = vmatprep.subr.mxu0 0.0
    %2236 = vmatpush1.msra.mxu0 0.0
    %2237 = vmatprep.subr.mxu0 0.0
    %2238 = vmatpush1.msra.mxu0 0.0
    %2239 = vmatprep.subr.mxu0 0.0
    %2240 = vmatpush1.msra.mxu0 0.0
    %2241 = vmatprep.subr.mxu0 0.0
    %2242 = vmatpush1.msra.mxu0 0.0
    %2243 = vmatprep.subr.mxu0 0.0
    %2244 = vmatpush1.msra.mxu0 0.0
    %2245 = vmatprep.subr.mxu0 0.0
    %2246 = vmatpush1.msra.mxu0 0.0
    %2247 = vmatprep.subr.mxu0 0.0
    %2248 = vmatpush1.msra.mxu0 0.0
    %2249 = vmatprep.subr.mxu0 0.0
    %2250 = vmatpush1.msra.mxu0 0.0
    %2251 = vmatprep.subr.mxu0 0.0
    %2252 = vmatpush1.msra.mxu0 0.0
    %2253 = vmatprep.subr.mxu0 0.0
    %2254 = vmatpush1.msra.mxu0 0.0
    %2255 = vmatprep.subr.mxu0 0.0
    %2256 = vmatpush1.msra.mxu0 0.0
    %2257 = vmatprep.subr.mxu0 0.0
    %2258 = vmatpush1.msra.mxu0 0.0
    %2259 = vmatprep.subr.mxu0 0.0
    %2260 = vmatpush1.msra.mxu0 0.0
    %2261 = vmatprep.subr.mxu0 0.0
    %2262 = vmatpush1.msra.mxu0 0.0
    %2263 = vmatprep.subr.mxu0 0.0
    %2264 = vmatpush1.msra.mxu0 0.0
    %2265 = vmatprep.subr.mxu0 0.0
    %2266 = vmatpush1.msra.mxu0 0.0
    %2267 = vmatprep.subr.mxu0 0.0
    %2268 = vmatpush1.msra.mxu0 0.0
    %2269 = vmatprep.subr.mxu0 0.0
    %2270 = vmatpush1.msra.mxu0 0.0
    %2271 = vmatprep.subr.mxu0 0.0
    %2272 = vmatpush1.msra.mxu0 0.0
    %2273 = vmatprep.subr.mxu0 0.0
    %2274 = vmatpush1.msra.mxu0 0.0
    %2275 = vmatprep.mubr.f32.mxu0 0.0
    %2276 = vmatmul.mubr.f32.gmra.mrb[0].mxu0 %v2200
    %v2277 = vpop.f32.mrb[0].mxu0
    %v2278 = vadd.f32 0.0, %v2277
    %v2279 = vpop.f32.mrb[0].mxu0
    %2280 = vmatprep.mubr.f32.mxu0 0.0
    %2281 = vmatmul.mubr.f32.gmra.mrb[0].mxu0 %v2203
    %v2282 = vpop.f32.mrb[0].mxu0
    %v2283 = vadd.f32 0.0, %v2282
    %v2284 = vpop.f32.mrb[0].mxu0
    %2285 = vmatprep.mubr.f32.mxu0 0.0
    %2286 = vmatmul.mubr.f32.gmra.mrb[0].mxu0 %v2206
    %v2287 = vpop.f32.mrb[0].mxu0
    %v2288 = vadd.f32 0.0, %v2287
    %v2289 = vpop.f32.mrb[0].mxu0
    %2290 = vmatprep.mubr.f32.mxu0 0.0
    %2291 = vmatmul.mubr.f32.gmra.mrb[0].mxu0 %v2209
    %v2292 = vpop.f32.mrb[0].mxu0
    %v2293 = vadd.f32 0.0, %v2292
    %v2294 = vpop.f32.mrb[0].mxu0
    %2295 = vdwg.mxu0
    %v2296 = vadd.f32 %v2190, %v2278
    %v2297 = vadd.f32 %v2191, %v2283
    %v2298 = vadd.f32 %v2192, %v2288
    %v2299 = vadd.f32 %v2193, %v2293
    %2300 = vst.msk [vmem:[%s2179] sm:$0xff] %vm671, %v2296
    %2301 = vst.msk [vmem:[%s2179 + $0x8] sm:$0xff] %vm671, %v2297
    %2302 = vst.msk [vmem:[%s2179 + $0x10] sm:$0xff] %vm671, %v2298
    %2303 = vst.msk [vmem:[%s2179 + $0x18] sm:$0xff] %vm671, %v2299
    %2304 = vst.msk [vmem:[%s2138] sm:$0x1] %vm709, %v2149
    %s2305 = scalar_lea.vmem [#allocation5], 192
    %v2306 = vld [vmem:[%s2305] sm:$0xff]
    %v2307 = vld [vmem:[%s2305 + $0x8] sm:$0xff]
    %v2308 = vld [vmem:[%s2305 + $0x10] sm:$0xff]
    %v2309 = vld [vmem:[%s2305 + $0x18] sm:$0xff]
    %v2310 = vmul.f32 %v2306, 0.17677669
    %v2311 = vmul.f32 %v2307, 0.17677669
    %v2312 = vmul.f32 %v2308, 0.17677669
    %v2313 = vmul.f32 %v2309, 0.17677669
    %s2314 = scalar_lea.vmem [#allocation6], 192
    %v2315 = vld [vmem:[%s2314] sm:$0xff]
    %v2316 = vld [vmem:[%s2314 + $0x8] sm:$0xff]
    %v2317 = vld [vmem:[%s2314 + $0x10] sm:$0xff]
    %v2318 = vld [vmem:[%s2314 + $0x18] sm:$0xff]
    %2319 = vxpose.xlu0.b32.start [1/16] %v2315, 128
    %2320 = vxpose.xlu0.b32.cont [2/16] %v2316, 128
    %2321 = vxpose.xlu0.b32.cont [3/16] %v2317, 128
    %2322 = vxpose.xlu0.b32.cont [4/16] %v2318, 128
    %2323 = vxpose.xlu0.b32.cont [5/16] 0.0, 128
    %2324 = vxpose.xlu0.b32.cont [6/16] 0.0, 128
    %2325 = vxpose.xlu0.b32.cont [7/16] 0.0, 128
    %2326 = vxpose.xlu0.b32.cont [8/16] 0.0, 128
    %2327 = vxpose.xlu0.b32.cont [9/16] 0.0, 128
    %2328 = vxpose.xlu0.b32.cont [10/16] 0.0, 128
    %2329 = vxpose.xlu0.b32.cont [11/16] 0.0, 128
    %2330 = vxpose.xlu0.b32.cont [12/16] 0.0, 128
    %2331 = vxpose.xlu0.b32.cont [13/16] 0.0, 128
    %2332 = vxpose.xlu0.b32.cont [14/16] 0.0, 128
    %2333 = vxpose.xlu0.b32.cont [15/16] 0.0, 128
    %2334 = vxpose.xlu0.b32.end [16/16] 0.0, 128
    %v2335 = vpop.trf.xlu0
    %v2336 = vpop.trf.xlu0
    %v2337 = vpop.trf.xlu0
    %v2338 = vpop.trf.xlu0
    %v2339 = vpop.trf.xlu0
    %v2340 = vpop.trf.xlu0
    %v2341 = vpop.trf.xlu0
    %v2342 = vpop.trf.xlu0
    %v2343 = vpop.trf.xlu0
    %v2344 = vpop.trf.xlu0
    %v2345 = vpop.trf.xlu0
    %v2346 = vpop.trf.xlu0
    %v2347 = vpop.trf.xlu0
    %v2348 = vpop.trf.xlu0
    %v2349 = vpop.trf.xlu0
    %v2350 = vpop.trf.xlu0
    %v2352 = vsel %vm588, %v2335, 0
    %v2355 = vsel %vm588, %v2336, 0
    %2357 = vmatprep.subr.mxu0 0.0
    %2358 = vmatpush1.msra.mxu0 %v2310
    %2359 = vmatprep.subr.mxu0 0.0
    %2360 = vmatpush1.msra.mxu0 %v2311
    %2361 = vmatprep.subr.mxu0 0.0
    %2362 = vmatpush1.msra.mxu0 %v2312
    %2363 = vmatprep.subr.mxu0 0.0
    %2364 = vmatpush1.msra.mxu0 %v2313
    %2365 = vmatprep.subr.mxu0 0.0
    %2366 = vmatpush1.msra.mxu0 0.0
    %2367 = vmatprep.subr.mxu0 0.0
    %2368 = vmatpush1.msra.mxu0 0.0
    %2369 = vmatprep.subr.mxu0 0.0
    %2370 = vmatpush1.msra.mxu0 0.0
    %2371 = vmatprep.subr.mxu0 0.0
    %2372 = vmatpush1.msra.mxu0 0.0
    %2373 = vmatprep.subr.mxu0 0.0
    %2374 = vmatpush1.msra.mxu0 0.0
    %2375 = vmatprep.subr.mxu0 0.0
    %2376 = vmatpush1.msra.mxu0 0.0
    %2377 = vmatprep.subr.mxu0 0.0
    %2378 = vmatpush1.msra.mxu0 0.0
    %2379 = vmatprep.subr.mxu0 0.0
    %2380 = vmatpush1.msra.mxu0 0.0
    %2381 = vmatprep.subr.mxu0 0.0
    %2382 = vmatpush1.msra.mxu0 0.0
    %2383 = vmatprep.subr.mxu0 0.0
    %2384 = vmatpush1.msra.mxu0 0.0
    %2385 = vmatprep.subr.mxu0 0.0
    %2386 = vmatpush1.msra.mxu0 0.0
    %2387 = vmatprep.subr.mxu0 0.0
    %2388 = vmatpush1.msra.mxu0 0.0
    %2389 = vmatprep.subr.mxu0 0.0
    %2390 = vmatpush1.msra.mxu0 0.0
    %2391 = vmatprep.subr.mxu0 0.0
    %2392 = vmatpush1.msra.mxu0 0.0
    %2393 = vmatprep.subr.mxu0 0.0
    %2394 = vmatpush1.msra.mxu0 0.0
    %2395 = vmatprep.subr.mxu0 0.0
    %2396 = vmatpush1.msra.mxu0 0.0
    %2397 = vmatprep.subr.mxu0 0.0
    %2398 = vmatpush1.msra.mxu0 0.0
    %2399 = vmatprep.subr.mxu0 0.0
    %2400 = vmatpush1.msra.mxu0 0.0
    %2401 = vmatprep.subr.mxu0 0.0
    %2402 = vmatpush1.msra.mxu0 0.0
    %2403 = vmatprep.subr.mxu0 0.0
    %2404 = vmatpush1.msra.mxu0 0.0
    %2405 = vmatprep.subr.mxu0 0.0
    %2406 = vmatpush1.msra.mxu0 0.0
    %2407 = vmatprep.subr.mxu0 0.0
    %2408 = vmatpush1.msra.mxu0 0.0
    %2409 = vmatprep.subr.mxu0 0.0
    %2410 = vmatpush1.msra.mxu0 0.0
    %2411 = vmatprep.subr.mxu0 0.0
    %2412 = vmatpush1.msra.mxu0 0.0
    %2413 = vmatprep.subr.mxu0 0.0
    %2414 = vmatpush1.msra.mxu0 0.0
    %2415 = vmatprep.subr.mxu0 0.0
    %2416 = vmatpush1.msra.mxu0 0.0
    %2417 = vmatprep.subr.mxu0 0.0
    %2418 = vmatpush1.msra.mxu0 0.0
    %2419 = vmatprep.subr.mxu0 0.0
    %2420 = vmatpush1.msra.mxu0 0.0
    %2421 = vmatprep.mubr.f32.mxu0 0.0
    %2422 = vmatmul.mubr.f32.gmra.mrb[0].mxu0 %v2352
    %v2423 = vpop.f32.mrb[0].mxu0
    %v2424 = vadd.f32 0.0, %v2423
    %v2425 = vpop.f32.mrb[0].mxu0
    %2426 = vmatprep.mubr.f32.mxu0 0.0
    %2427 = vmatmul.mubr.f32.gmra.mrb[0].mxu0 %v2355
    %v2428 = vpop.f32.mrb[0].mxu0
    %v2429 = vadd.f32 0.0, %v2428
    %v2430 = vpop.f32.mrb[0].mxu0
    %2431 = vdwg.mxu0
    %s2432 = scalar_lea.vmem [#allocation2], 6
    %v2433 = vld [vmem:[%s2432] sm:$0x1]
    %v2434 = vsel %vm671, %v2424, -inf
    %v2435 = vsel %vm671, %v2429, -inf
    %v2436 = vmax.f32 %v2434, %v2435
    %v2437 = vrot.slane %v2436, 4
    %v2438 = vmax.f32 %v2436, %v2437
    %v2439 = vrot.slane %v2438, 2
    %v2440 = vmax.f32 %v2438, %v2439
    %v2441 = vrot.slane %v2440, 1
    %v2442 = vmax.f32 %v2440, %v2441
    %v2443 = vmax.f32 %v2433, %v2442
    %v2444 = vsub.f32 %v2433, %v2443
    %v2445 = vmul.f32 %v2444, 1.442695
    %v2446 = vpow.pop %v2445
    %v2448 = vlaneseq
    %v2449 = vshrl.u32 %v2448, 7
    %v2450 = vsub.s32 0, %v2449
    %v2451 = vrot.slane %v2443, %v2450
    %v2453 = vsub.f32 %v2424, %v2451
    %v2454 = vsub.f32 %v2429, %v2451
    %v2455 = vmul.f32 %v2453, 1.442695
    %v2456 = vpow.pop %v2455
    %v2457 = vmul.f32 %v2454, 1.442695
    %v2458 = vpow.pop %v2457
    %s2459 = scalar_lea.vmem [#allocation3], 6
    %v2460 = vld [vmem:[%s2459] sm:$0x1]
    %v2461 = vmul.f32 %v2446, %v2460
    %v2462 = vsel %vm671, %v2456, 0.0
    %v2463 = vsel %vm671, %v2458, 0.0
    %v2464 = vadd.f32 %v2462, %v2463
    %v2465 = vrot.slane %v2464, 4
    %v2466 = vadd.f32 %v2464, %v2465
    %v2467 = vrot.slane %v2466, 2
    %v2468 = vadd.f32 %v2466, %v2467
    %v2469 = vrot.slane %v2468, 1
    %v2470 = vadd.f32 %v2468, %v2469
    %v2471 = vadd.f32 %v2461, %v2470
    %2472 = vst.msk [vmem:[%s2459] sm:$0x1] %vm709, %v2471
    %s2473 = scalar_lea.vmem [#allocation4], 192
    %v2474 = vld [vmem:[%s2473] sm:$0xff]
    %v2475 = vld [vmem:[%s2473 + $0x8] sm:$0xff]
    %v2476 = vld [vmem:[%s2473 + $0x10] sm:$0xff]
    %v2477 = vld [vmem:[%s2473 + $0x18] sm:$0xff]
    %v2479 = vlaneseq
    %v2480 = vshrl.u32 %v2479, 7
    %v2481 = vsub.s32 0, %v2480
    %v2482 = vrot.slane %v2446, %v2481
    %v2484 = vmul.f32 %v2482, %v2474
    %v2485 = vmul.f32 %v2482, %v2475
    %v2486 = vmul.f32 %v2482, %v2476
    %v2487 = vmul.f32 %v2482, %v2477
    %s2488 = scalar_lea.vmem [#allocation7], 192
    %v2489 = vld [vmem:[%s2488] sm:$0xff]
    %v2490 = vld [vmem:[%s2488 + $0x8] sm:$0xff]
    %v2491 = vld [vmem:[%s2488 + $0x10] sm:$0xff]
    %v2492 = vld [vmem:[%s2488 + $0x18] sm:$0xff]
    %v2494 = vsel %vm671, %v2489, 0
    %v2497 = vsel %vm671, %v2490, 0
    %v2500 = vsel %vm671, %v2491, 0
    %v2503 = vsel %vm671, %v2492, 0
    %2505 = vmatprep.subr.mxu0 0.0
    %2506 = vmatpush1.msra.mxu0 %v2456
    %2507 = vmatprep.subr.mxu0 0.0
    %2508 = vmatpush1.msra.mxu0 %v2458
    %2509 = vmatprep.subr.mxu0 0.0
    %2510 = vmatpush1.msra.mxu0 0.0
    %2511 = vmatprep.subr.mxu0 0.0
    %2512 = vmatpush1.msra.mxu0 0.0
    %2513 = vmatprep.subr.mxu0 0.0
    %2514 = vmatpush1.msra.mxu0 0.0
    %2515 = vmatprep.subr.mxu0 0.0
    %2516 = vmatpush1.msra.mxu0 0.0
    %2517 = vmatprep.subr.mxu0 0.0
    %2518 = vmatpush1.msra.mxu0 0.0
    %2519 = vmatprep.subr.mxu0 0.0
    %2520 = vmatpush1.msra.mxu0 0.0
    %2521 = vmatprep.subr.mxu0 0.0
    %2522 = vmatpush1.msra.mxu0 0.0
    %2523 = vmatprep.subr.mxu0 0.0
    %2524 = vmatpush1.msra.mxu0 0.0
    %2525 = vmatprep.subr.mxu0 0.0
    %2526 = vmatpush1.msra.mxu0 0.0
    %2527 = vmatprep.subr.mxu0 0.0
    %2528 = vmatpush1.msra.mxu0 0.0
    %2529 = vmatprep.subr.mxu0 0.0
    %2530 = vmatpush1.msra.mxu0 0.0
    %2531 = vmatprep.subr.mxu0 0.0
    %2532 = vmatpush1.msra.mxu0 0.0
    %2533 = vmatprep.subr.mxu0 0.0
    %2534 = vmatpush1.msra.mxu0 0.0
    %2535 = vmatprep.subr.mxu0 0.0
    %2536 = vmatpush1.msra.mxu0 0.0
    %2537 = vmatprep.subr.mxu0 0.0
    %2538 = vmatpush1.msra.mxu0 0.0
    %2539 = vmatprep.subr.mxu0 0.0
    %2540 = vmatpush1.msra.mxu0 0.0
    %2541 = vmatprep.subr.mxu0 0.0
    %2542 = vmatpush1.msra.mxu0 0.0
    %2543 = vmatprep.subr.mxu0 0.0
    %2544 = vmatpush1.msra.mxu0 0.0
    %2545 = vmatprep.subr.mxu0 0.0
    %2546 = vmatpush1.msra.mxu0 0.0
    %2547 = vmatprep.subr.mxu0 0.0
    %2548 = vmatpush1.msra.mxu0 0.0
    %2549 = vmatprep.subr.mxu0 0.0
    %2550 = vmatpush1.msra.mxu0 0.0
    %2551 = vmatprep.subr.mxu0 0.0
    %2552 = vmatpush1.msra.mxu0 0.0
    %2553 = vmatprep.subr.mxu0 0.0
    %2554 = vmatpush1.msra.mxu0 0.0
    %2555 = vmatprep.subr.mxu0 0.0
    %2556 = vmatpush1.msra.mxu0 0.0
    %2557 = vmatprep.subr.mxu0 0.0
    %2558 = vmatpush1.msra.mxu0 0.0
    %2559 = vmatprep.subr.mxu0 0.0
    %2560 = vmatpush1.msra.mxu0 0.0
    %2561 = vmatprep.subr.mxu0 0.0
    %2562 = vmatpush1.msra.mxu0 0.0
    %2563 = vmatprep.subr.mxu0 0.0
    %2564 = vmatpush1.msra.mxu0 0.0
    %2565 = vmatprep.subr.mxu0 0.0
    %2566 = vmatpush1.msra.mxu0 0.0
    %2567 = vmatprep.subr.mxu0 0.0
    %2568 = vmatpush1.msra.mxu0 0.0
    %2569 = vmatprep.mubr.f32.mxu0 0.0
    %2570 = vmatmul.mubr.f32.gmra.mrb[0].mxu0 %v2494
    %v2571 = vpop.f32.mrb[0].mxu0
    %v2572 = vadd.f32 0.0, %v2571
    %v2573 = vpop.f32.mrb[0].mxu0
    %2574 = vmatprep.mubr.f32.mxu0 0.0
    %2575 = vmatmul.mubr.f32.gmra.mrb[0].mxu0 %v2497
    %v2576 = vpop.f32.mrb[0].mxu0
    %v2577 = vadd.f32 0.0, %v2576
    %v2578 = vpop.f32.mrb[0].mxu0
    %2579 = vmatprep.mubr.f32.mxu0 0.0
    %2580 = vmatmul.mubr.f32.gmra.mrb[0].mxu0 %v2500
    %v2581 = vpop.f32.mrb[0].mxu0
    %v2582 = vadd.f32 0.0, %v2581
    %v2583 = vpop.f32.mrb[0].mxu0
    %2584 = vmatprep.mubr.f32.mxu0 0.0
    %2585 = vmatmul.mubr.f32.gmra.mrb[0].mxu0 %v2503
    %v2586 = vpop.f32.mrb[0].mxu0
    %v2587 = vadd.f32 0.0, %v2586
    %v2588 = vpop.f32.mrb[0].mxu0
    %2589 = vdwg.mxu0
    %v2590 = vadd.f32 %v2484, %v2572
    %v2591 = vadd.f32 %v2485, %v2577
    %v2592 = vadd.f32 %v2486, %v2582
    %v2593 = vadd.f32 %v2487, %v2587
    %2594 = vst.msk [vmem:[%s2473] sm:$0xff] %vm671, %v2590
    %2595 = vst.msk [vmem:[%s2473 + $0x8] sm:$0xff] %vm671, %v2591
    %2596 = vst.msk [vmem:[%s2473 + $0x10] sm:$0xff] %vm671, %v2592
    %2597 = vst.msk [vmem:[%s2473 + $0x18] sm:$0xff] %vm671, %v2593
    %2598 = vst.msk [vmem:[%s2432] sm:$0x1] %vm709, %v2443
    %s2599 = scalar_lea.vmem [#allocation5], 224
    %v2600 = vld [vmem:[%s2599] sm:$0xff]
    %v2601 = vld [vmem:[%s2599 + $0x8] sm:$0xff]
    %v2602 = vld [vmem:[%s2599 + $0x10] sm:$0xff]
    %v2603 = vld [vmem:[%s2599 + $0x18] sm:$0xff]
    %v2604 = vmul.f32 %v2600, 0.17677669
    %v2605 = vmul.f32 %v2601, 0.17677669
    %v2606 = vmul.f32 %v2602, 0.17677669
    %v2607 = vmul.f32 %v2603, 0.17677669
    %s2608 = scalar_lea.vmem [#allocation6], 224
    %v2609 = vld [vmem:[%s2608] sm:$0xff]
    %v2610 = vld [vmem:[%s2608 + $0x8] sm:$0xff]
    %v2611 = vld [vmem:[%s2608 + $0x10] sm:$0xff]
    %v2612 = vld [vmem:[%s2608 + $0x18] sm:$0xff]
    %2613 = vxpose.xlu0.b32.start [1/16] %v2609, 128
    %2614 = vxpose.xlu0.b32.cont [2/16] %v2610, 128
    %2615 = vxpose.xlu0.b32.cont [3/16] %v2611, 128
    %2616 = vxpose.xlu0.b32.cont [4/16] %v2612, 128
    %2617 = vxpose.xlu0.b32.cont [5/16] 0.0, 128
    %2618 = vxpose.xlu0.b32.cont [6/16] 0.0, 128
    %2619 = vxpose.xlu0.b32.cont [7/16] 0.0, 128
    %2620 = vxpose.xlu0.b32.cont [8/16] 0.0, 128
    %2621 = vxpose.xlu0.b32.cont [9/16] 0.0, 128
    %2622 = vxpose.xlu0.b32.cont [10/16] 0.0, 128
    %2623 = vxpose.xlu0.b32.cont [11/16] 0.0, 128
    %2624 = vxpose.xlu0.b32.cont [12/16] 0.0, 128
    %2625 = vxpose.xlu0.b32.cont [13/16] 0.0, 128
    %2626 = vxpose.xlu0.b32.cont [14/16] 0.0, 128
    %2627 = vxpose.xlu0.b32.cont [15/16] 0.0, 128
    %2628 = vxpose.xlu0.b32.end [16/16] 0.0, 128
    %v2629 = vpop.trf.xlu0
    %v2630 = vpop.trf.xlu0
    %v2631 = vpop.trf.xlu0
    %v2632 = vpop.trf.xlu0
    %v2633 = vpop.trf.xlu0
    %v2634 = vpop.trf.xlu0
    %v2635 = vpop.trf.xlu0
    %v2636 = vpop.trf.xlu0
    %v2637 = vpop.trf.xlu0
    %v2638 = vpop.trf.xlu0
    %v2639 = vpop.trf.xlu0
    %v2640 = vpop.trf.xlu0
    %v2641 = vpop.trf.xlu0
    %v2642 = vpop.trf.xlu0
    %v2643 = vpop.trf.xlu0
    %v2644 = vpop.trf.xlu0
    %v2646 = vsel %vm588, %v2629, 0
    %v2649 = vsel %vm588, %v2630, 0
    %2651 = vmatprep.subr.mxu0 0.0
    %2652 = vmatpush1.msra.mxu0 %v2604
    %2653 = vmatprep.subr.mxu0 0.0
    %2654 = vmatpush1.msra.mxu0 %v2605
    %2655 = vmatprep.subr.mxu0 0.0
    %2656 = vmatpush1.msra.mxu0 %v2606
    %2657 = vmatprep.subr.mxu0 0.0
    %2658 = vmatpush1.msra.mxu0 %v2607
    %2659 = vmatprep.subr.mxu0 0.0
    %2660 = vmatpush1.msra.mxu0 0.0
    %2661 = vmatprep.subr.mxu0 0.0
    %2662 = vmatpush1.msra.mxu0 0.0
    %2663 = vmatprep.subr.mxu0 0.0
    %2664 = vmatpush1.msra.mxu0 0.0
    %2665 = vmatprep.subr.mxu0 0.0
    %2666 = vmatpush1.msra.mxu0 0.0
    %2667 = vmatprep.subr.mxu0 0.0
    %2668 = vmatpush1.msra.mxu0 0.0
    %2669 = vmatprep.subr.mxu0 0.0
    %2670 = vmatpush1.msra.mxu0 0.0
    %2671 = vmatprep.subr.mxu0 0.0
    %2672 = vmatpush1.msra.mxu0 0.0
    %2673 = vmatprep.subr.mxu0 0.0
    %2674 = vmatpush1.msra.mxu0 0.0
    %2675 = vmatprep.subr.mxu0 0.0
    %2676 = vmatpush1.msra.mxu0 0.0
    %2677 = vmatprep.subr.mxu0 0.0
    %2678 = vmatpush1.msra.mxu0 0.0
    %2679 = vmatprep.subr.mxu0 0.0
    %2680 = vmatpush1.msra.mxu0 0.0
    %2681 = vmatprep.subr.mxu0 0.0
    %2682 = vmatpush1.msra.mxu0 0.0
    %2683 = vmatprep.subr.mxu0 0.0
    %2684 = vmatpush1.msra.mxu0 0.0
    %2685 = vmatprep.subr.mxu0 0.0
    %2686 = vmatpush1.msra.mxu0 0.0
    %2687 = vmatprep.subr.mxu0 0.0
    %2688 = vmatpush1.msra.mxu0 0.0
    %2689 = vmatprep.subr.mxu0 0.0
    %2690 = vmatpush1.msra.mxu0 0.0
    %2691 = vmatprep.subr.mxu0 0.0
    %2692 = vmatpush1.msra.mxu0 0.0
    %2693 = vmatprep.subr.mxu0 0.0
    %2694 = vmatpush1.msra.mxu0 0.0
    %2695 = vmatprep.subr.mxu0 0.0
    %2696 = vmatpush1.msra.mxu0 0.0
    %2697 = vmatprep.subr.mxu0 0.0
    %2698 = vmatpush1.msra.mxu0 0.0
    %2699 = vmatprep.subr.mxu0 0.0
    %2700 = vmatpush1.msra.mxu0 0.0
    %2701 = vmatprep.subr.mxu0 0.0
    %2702 = vmatpush1.msra.mxu0 0.0
    %2703 = vmatprep.subr.mxu0 0.0
    %2704 = vmatpush1.msra.mxu0 0.0
    %2705 = vmatprep.subr.mxu0 0.0
    %2706 = vmatpush1.msra.mxu0 0.0
    %2707 = vmatprep.subr.mxu0 0.0
    %2708 = vmatpush1.msra.mxu0 0.0
    %2709 = vmatprep.subr.mxu0 0.0
    %2710 = vmatpush1.msra.mxu0 0.0
    %2711 = vmatprep.subr.mxu0 0.0
    %2712 = vmatpush1.msra.mxu0 0.0
    %2713 = vmatprep.subr.mxu0 0.0
    %2714 = vmatpush1.msra.mxu0 0.0
    %2715 = vmatprep.mubr.f32.mxu0 0.0
    %2716 = vmatmul.mubr.f32.gmra.mrb[0].mxu0 %v2646
    %v2717 = vpop.f32.mrb[0].mxu0
    %v2718 = vadd.f32 0.0, %v2717
    %v2719 = vpop.f32.mrb[0].mxu0
    %2720 = vmatprep.mubr.f32.mxu0 0.0
    %2721 = vmatmul.mubr.f32.gmra.mrb[0].mxu0 %v2649
    %v2722 = vpop.f32.mrb[0].mxu0
    %v2723 = vadd.f32 0.0, %v2722
    %v2724 = vpop.f32.mrb[0].mxu0
    %2725 = vdwg.mxu0
    %s2726 = scalar_lea.vmem [#allocation2], 7
    %v2727 = vld [vmem:[%s2726] sm:$0x1]
    %v2728 = vsel %vm671, %v2718, -inf
    %v2729 = vsel %vm671, %v2723, -inf
    %v2730 = vmax.f32 %v2728, %v2729
    %v2731 = vrot.slane %v2730, 4
    %v2732 = vmax.f32 %v2730, %v2731
    %v2733 = vrot.slane %v2732, 2
    %v2734 = vmax.f32 %v2732, %v2733
    %v2735 = vrot.slane %v2734, 1
    %v2736 = vmax.f32 %v2734, %v2735
    %v2737 = vmax.f32 %v2727, %v2736
    %v2738 = vsub.f32 %v2727, %v2737
    %v2739 = vmul.f32 %v2738, 1.442695
    %v2740 = vpow.pop %v2739
    %v2742 = vlaneseq
    %v2743 = vshrl.u32 %v2742, 7
    %v2744 = vsub.s32 0, %v2743
    %v2745 = vrot.slane %v2737, %v2744
    %v2747 = vsub.f32 %v2718, %v2745
    %v2748 = vsub.f32 %v2723, %v2745
    %v2749 = vmul.f32 %v2747, 1.442695
    %v2750 = vpow.pop %v2749
    %v2751 = vmul.f32 %v2748, 1.442695
    %v2752 = vpow.pop %v2751
    %s2753 = scalar_lea.vmem [#allocation3], 7
    %v2754 = vld [vmem:[%s2753] sm:$0x1]
    %v2755 = vmul.f32 %v2740, %v2754
    %v2756 = vsel %vm671, %v2750, 0.0
    %v2757 = vsel %vm671, %v2752, 0.0
    %v2758 = vadd.f32 %v2756, %v2757
    %v2759 = vrot.slane %v2758, 4
    %v2760 = vadd.f32 %v2758, %v2759
    %v2761 = vrot.slane %v2760, 2
    %v2762 = vadd.f32 %v2760, %v2761
    %v2763 = vrot.slane %v2762, 1
    %v2764 = vadd.f32 %v2762, %v2763
    %v2765 = vadd.f32 %v2755, %v2764
    %2766 = vst.msk [vmem:[%s2753] sm:$0x1] %vm709, %v2765
    %s2767 = scalar_lea.vmem [#allocation4], 224
    %v2768 = vld [vmem:[%s2767] sm:$0xff]
    %v2769 = vld [vmem:[%s2767 + $0x8] sm:$0xff]
    %v2770 = vld [vmem:[%s2767 + $0x10] sm:$0xff]
    %v2771 = vld [vmem:[%s2767 + $0x18] sm:$0xff]
    %v2773 = vlaneseq
    %v2774 = vshrl.u32 %v2773, 7
    %v2775 = vsub.s32 0, %v2774
    %v2776 = vrot.slane %v2740, %v2775
    %v2778 = vmul.f32 %v2776, %v2768
    %v2779 = vmul.f32 %v2776, %v2769
    %v2780 = vmul.f32 %v2776, %v2770
    %v2781 = vmul.f32 %v2776, %v2771
    %s2782 = scalar_lea.vmem [#allocation7], 224
    %v2783 = vld [vmem:[%s2782] sm:$0xff]
    %v2784 = vld [vmem:[%s2782 + $0x8] sm:$0xff]
    %v2785 = vld [vmem:[%s2782 + $0x10] sm:$0xff]
    %v2786 = vld [vmem:[%s2782 + $0x18] sm:$0xff]
    %v2788 = vsel %vm671, %v2783, 0
    %v2791 = vsel %vm671, %v2784, 0
    %v2794 = vsel %vm671, %v2785, 0
    %v2797 = vsel %vm671, %v2786, 0
    %2799 = vmatprep.subr.mxu0 0.0
    %2800 = vmatpush1.msra.mxu0 %v2750
    %2801 = vmatprep.subr.mxu0 0.0
    %2802 = vmatpush1.msra.mxu0 %v2752
    %2803 = vmatprep.subr.mxu0 0.0
    %2804 = vmatpush1.msra.mxu0 0.0
    %2805 = vmatprep.subr.mxu0 0.0
    %2806 = vmatpush1.msra.mxu0 0.0
    %2807 = vmatprep.subr.mxu0 0.0
    %2808 = vmatpush1.msra.mxu0 0.0
    %2809 = vmatprep.subr.mxu0 0.0
    %2810 = vmatpush1.msra.mxu0 0.0
    %2811 = vmatprep.subr.mxu0 0.0
    %2812 = vmatpush1.msra.mxu0 0.0
    %2813 = vmatprep.subr.mxu0 0.0
    %2814 = vmatpush1.msra.mxu0 0.0
    %2815 = vmatprep.subr.mxu0 0.0
    %2816 = vmatpush1.msra.mxu0 0.0
    %2817 = vmatprep.subr.mxu0 0.0
    %2818 = vmatpush1.msra.mxu0 0.0
    %2819 = vmatprep.subr.mxu0 0.0
    %2820 = vmatpush1.msra.mxu0 0.0
    %2821 = vmatprep.subr.mxu0 0.0
    %2822 = vmatpush1.msra.mxu0 0.0
    %2823 = vmatprep.subr.mxu0 0.0
    %2824 = vmatpush1.msra.mxu0 0.0
    %2825 = vmatprep.subr.mxu0 0.0
    %2826 = vmatpush1.msra.mxu0 0.0
    %2827 = vmatprep.subr.mxu0 0.0
    %2828 = vmatpush1.msra.mxu0 0.0
    %2829 = vmatprep.subr.mxu0 0.0
    %2830 = vmatpush1.msra.mxu0 0.0
    %2831 = vmatprep.subr.mxu0 0.0
    %2832 = vmatpush1.msra.mxu0 0.0
    %2833 = vmatprep.subr.mxu0 0.0
    %2834 = vmatpush1.msra.mxu0 0.0
    %2835 = vmatprep.subr.mxu0 0.0
    %2836 = vmatpush1.msra.mxu0 0.0
    %2837 = vmatprep.subr.mxu0 0.0
    %2838 = vmatpush1.msra.mxu0 0.0
    %2839 = vmatprep.subr.mxu0 0.0
    %2840 = vmatpush1.msra.mxu0 0.0
    %2841 = vmatprep.subr.mxu0 0.0
    %2842 = vmatpush1.msra.mxu0 0.0
    %2843 = vmatprep.subr.mxu0 0.0
    %2844 = vmatpush1.msra.mxu0 0.0
    %2845 = vmatprep.subr.mxu0 0.0
    %2846 = vmatpush1.msra.mxu0 0.0
    %2847 = vmatprep.subr.mxu0 0.0
    %2848 = vmatpush1.msra.mxu0 0.0
    %2849 = vmatprep.subr.mxu0 0.0
    %2850 = vmatpush1.msra.mxu0 0.0
    %2851 = vmatprep.subr.mxu0 0.0
    %2852 = vmatpush1.msra.mxu0 0.0
    %2853 = vmatprep.subr.mxu0 0.0
    %2854 = vmatpush1.msra.mxu0 0.0
    %2855 = vmatprep.subr.mxu0 0.0
    %2856 = vmatpush1.msra.mxu0 0.0
    %2857 = vmatprep.subr.mxu0 0.0
    %2858 = vmatpush1.msra.mxu0 0.0
    %2859 = vmatprep.subr.mxu0 0.0
    %2860 = vmatpush1.msra.mxu0 0.0
    %2861 = vmatprep.subr.mxu0 0.0
    %2862 = vmatpush1.msra.mxu0 0.0
    %2863 = vmatprep.mubr.f32.mxu0 0.0
    %2864 = vmatmul.mubr.f32.gmra.mrb[0].mxu0 %v2788
    %v2865 = vpop.f32.mrb[0].mxu0
    %v2866 = vadd.f32 0.0, %v2865
    %v2867 = vpop.f32.mrb[0].mxu0
    %2868 = vmatprep.mubr.f32.mxu0 0.0
    %2869 = vmatmul.mubr.f32.gmra.mrb[0].mxu0 %v2791
    %v2870 = vpop.f32.mrb[0].mxu0
    %v2871 = vadd.f32 0.0, %v2870
    %v2872 = vpop.f32.mrb[0].mxu0
    %2873 = vmatprep.mubr.f32.mxu0 0.0
    %2874 = vmatmul.mubr.f32.gmra.mrb[0].mxu0 %v2794
    %v2875 = vpop.f32.mrb[0].mxu0
    %v2876 = vadd.f32 0.0, %v2875
    %v2877 = vpop.f32.mrb[0].mxu0
    %2878 = vmatprep.mubr.f32.mxu0 0.0
    %2879 = vmatmul.mubr.f32.gmra.mrb[0].mxu0 %v2797
    %v2880 = vpop.f32.mrb[0].mxu0
    %v2881 = vadd.f32 0.0, %v2880
    %v2882 = vpop.f32.mrb[0].mxu0
    %2883 = vdwg.mxu0
    %v2884 = vadd.f32 %v2778, %v2866
    %v2885 = vadd.f32 %v2779, %v2871
    %v2886 = vadd.f32 %v2780, %v2876
    %v2887 = vadd.f32 %v2781, %v2881
    %2888 = vst.msk [vmem:[%s2767] sm:$0xff] %vm671, %v2884
    %2889 = vst.msk [vmem:[%s2767 + $0x8] sm:$0xff] %vm671, %v2885
    %2890 = vst.msk [vmem:[%s2767 + $0x10] sm:$0xff] %vm671, %v2886
    %2891 = vst.msk [vmem:[%s2767 + $0x18] sm:$0xff] %vm671, %v2887
    %2892 = vst.msk [vmem:[%s2726] sm:$0x1] %vm709, %v2737
    // Predicated region
    $region132: #{tpu_custom_call.1} parent=1 // pred_check
      %p2893 = pneg %p490
    $region133: #{tpu_custom_call.1} parent=1 // pred_check_branch
      %2895 = sbr.rel (%p2893) target = $region135
    $region134: #{tpu_custom_call.1} parent=1 // pred_region
      %v2896 = vld [vmem:[#allocation4] sm:$0xff]
      %v2897 = vld [vmem:[#allocation4 + $0x8] sm:$0xff]
      %v2898 = vld [vmem:[#allocation4 + $0x10] sm:$0xff]
      %v2899 = vld [vmem:[#allocation4 + $0x18] sm:$0xff]
      %v2900 = vld [vmem:[#allocation4 + $0x20] sm:$0xff]
      %v2901 = vld [vmem:[#allocation4 + $0x28] sm:$0xff]
      %v2902 = vld [vmem:[#allocation4 + $0x30] sm:$0xff]
      %v2903 = vld [vmem:[#allocation4 + $0x38] sm:$0xff]
      %v2904 = vld [vmem:[#allocation4 + $0x40] sm:$0xff]
      %v2905 = vld [vmem:[#allocation4 + $0x48] sm:$0xff]
      %v2906 = vld [vmem:[#allocation4 + $0x50] sm:$0xff]
      %v2907 = vld [vmem:[#allocation4 + $0x58] sm:$0xff]
      %v2908 = vld [vmem:[#allocation4 + $0x60] sm:$0xff]
      %v2909 = vld [vmem:[#allocation4 + $0x68] sm:$0xff]
      %v2910 = vld [vmem:[#allocation4 + $0x70] sm:$0xff]
      %v2911 = vld [vmem:[#allocation4 + $0x78] sm:$0xff]
      %v2912 = vld [vmem:[#allocation4 + $0x80] sm:$0xff]
      %v2913 = vld [vmem:[#allocation4 + $0x88] sm:$0xff]
      %v2914 = vld [vmem:[#allocation4 + $0x90] sm:$0xff]
      %v2915 = vld [vmem:[#allocation4 + $0x98] sm:$0xff]
      %v2916 = vld [vmem:[#allocation4 + $0xa0] sm:$0xff]
      %v2917 = vld [vmem:[#allocation4 + $0xa8] sm:$0xff]
      %v2918 = vld [vmem:[#allocation4 + $0xb0] sm:$0xff]
      %v2919 = vld [vmem:[#allocation4 + $0xb8] sm:$0xff]
      %v2920 = vld [vmem:[#allocation4 + $0xc0] sm:$0xff]
      %v2921 = vld [vmem:[#allocation4 + $0xc8] sm:$0xff]
      %v2922 = vld [vmem:[#allocation4 + $0xd0] sm:$0xff]
      %v2923 = vld [vmem:[#allocation4 + $0xd8] sm:$0xff]
      %v2924 = vld [vmem:[#allocation4 + $0xe0] sm:$0xff]
      %v2925 = vld [vmem:[#allocation4 + $0xe8] sm:$0xff]
      %v2926 = vld [vmem:[#allocation4 + $0xf0] sm:$0xff]
      %v2927 = vld [vmem:[#allocation4 + $0xf8] sm:$0xff]
      %v2928 = vld [vmem:[#allocation3] sm:$0x1]
      %v2929 = vld [vmem:[#allocation3 + $0x1] sm:$0x1]
      %v2930 = vld [vmem:[#allocation3 + $0x2] sm:$0x1]
      %v2931 = vld [vmem:[#allocation3 + $0x3] sm:$0x1]
      %v2932 = vld [vmem:[#allocation3 + $0x4] sm:$0x1]
      %v2933 = vld [vmem:[#allocation3 + $0x5] sm:$0x1]
      %v2934 = vld [vmem:[#allocation3 + $0x6] sm:$0x1]
      %v2935 = vld [vmem:[#allocation3 + $0x7] sm:$0x1]
      %v2936 = vrcp.pop %v2928
      %v2937 = vrcp.pop %v2929
      %v2938 = vrcp.pop %v2930
      %v2939 = vrcp.pop %v2931
      %v2940 = vrcp.pop %v2932
      %v2941 = vrcp.pop %v2933
      %v2942 = vrcp.pop %v2934
      %v2943 = vrcp.pop %v2935
      %v2952 = vlaneseq
      %v2953 = vshrl.u32 %v2952, 7
      %v2954 = vsub.s32 0, %v2953
      %v2955 = vrot.slane %v2936, %v2954
      %v2956 = vlaneseq
      %v2957 = vshrl.u32 %v2956, 7
      %v2958 = vsub.s32 0, %v2957
      %v2959 = vrot.slane %v2937, %v2958
      %v2960 = vlaneseq
      %v2961 = vshrl.u32 %v2960, 7
      %v2962 = vsub.s32 0, %v2961
      %v2963 = vrot.slane %v2938, %v2962
      %v2964 = vlaneseq
      %v2965 = vshrl.u32 %v2964, 7
      %v2966 = vsub.s32 0, %v2965
      %v2967 = vrot.slane %v2939, %v2966
      %v2968 = vlaneseq
      %v2969 = vshrl.u32 %v2968, 7
      %v2970 = vsub.s32 0, %v2969
      %v2971 = vrot.slane %v2940, %v2970
      %v2972 = vlaneseq
      %v2973 = vshrl.u32 %v2972, 7
      %v2974 = vsub.s32 0, %v2973
      %v2975 = vrot.slane %v2941, %v2974
      %v2976 = vlaneseq
      %v2977 = vshrl.u32 %v2976, 7
      %v2978 = vsub.s32 0, %v2977
      %v2979 = vrot.slane %v2942, %v2978
      %v2980 = vlaneseq
      %v2981 = vshrl.u32 %v2980, 7
      %v2982 = vsub.s32 0, %v2981
      %v2983 = vrot.slane %v2943, %v2982
      %v2992 = vmul.f32 %v2896, %v2955
      %v2993 = vmul.f32 %v2897, %v2955
      %v2994 = vmul.f32 %v2898, %v2955
      %v2995 = vmul.f32 %v2899, %v2955
      %v2996 = vmul.f32 %v2900, %v2959
      %v2997 = vmul.f32 %v2901, %v2959
      %v2998 = vmul.f32 %v2902, %v2959
      %v2999 = vmul.f32 %v2903, %v2959
      %v3000 = vmul.f32 %v2904, %v2963
      %v3001 = vmul.f32 %v2905, %v2963
      %v3002 = vmul.f32 %v2906, %v2963
      %v3003 = vmul.f32 %v2907, %v2963
      %v3004 = vmul.f32 %v2908, %v2967
      %v3005 = vmul.f32 %v2909, %v2967
      %v3006 = vmul.f32 %v2910, %v2967
      %v3007 = vmul.f32 %v2911, %v2967
      %v3008 = vmul.f32 %v2912, %v2971
      %v3009 = vmul.f32 %v2913, %v2971
      %v3010 = vmul.f32 %v2914, %v2971
      %v3011 = vmul.f32 %v2915, %v2971
      %v3012 = vmul.f32 %v2916, %v2975
      %v3013 = vmul.f32 %v2917, %v2975
      %v3014 = vmul.f32 %v2918, %v2975
      %v3015 = vmul.f32 %v2919, %v2975
      %v3016 = vmul.f32 %v2920, %v2979
      %v3017 = vmul.f32 %v2921, %v2979
      %v3018 = vmul.f32 %v2922, %v2979
      %v3019 = vmul.f32 %v2923, %v2979
      %v3020 = vmul.f32 %v2924, %v2983
      %v3021 = vmul.f32 %v2925, %v2983
      %v3022 = vmul.f32 %v2926, %v2983
      %v3023 = vmul.f32 %v2927, %v2983
      %3024 = vst.msk [vmem:[%s3] sm:$0xff] %vm671, %v2992
      %3025 = vst.msk [vmem:[%s3 + $0x8] sm:$0xff] %vm671, %v2993
      %3026 = vst.msk [vmem:[%s3 + $0x10] sm:$0xff] %vm671, %v2994
      %3027 = vst.msk [vmem:[%s3 + $0x18] sm:$0xff] %vm671, %v2995
      %3028 = vst.msk [vmem:[%s3 + $0x20] sm:$0xff] %vm671, %v2996
      %3029 = vst.msk [vmem:[%s3 + $0x28] sm:$0xff] %vm671, %v2997
      %3030 = vst.msk [vmem:[%s3 + $0x30] sm:$0xff] %vm671, %v2998
      %3031 = vst.msk [vmem:[%s3 + $0x38] sm:$0xff] %vm671, %v2999
      %3032 = vst.msk [vmem:[%s3 + $0x40] sm:$0xff] %vm671, %v3000
      %3033 = vst.msk [vmem:[%s3 + $0x48] sm:$0xff] %vm671, %v3001
      %3034 = vst.msk [vmem:[%s3 + $0x50] sm:$0xff] %vm671, %v3002
      %3035 = vst.msk [vmem:[%s3 + $0x58] sm:$0xff] %vm671, %v3003
      %3036 = vst.msk [vmem:[%s3 + $0x60] sm:$0xff] %vm671, %v3004
      %3037 = vst.msk [vmem:[%s3 + $0x68] sm:$0xff] %vm671, %v3005
      %3038 = vst.msk [vmem:[%s3 + $0x70] sm:$0xff] %vm671, %v3006
      %3039 = vst.msk [vmem:[%s3 + $0x78] sm:$0xff] %vm671, %v3007
      %3040 = vst.msk [vmem:[%s3 + $0x80] sm:$0xff] %vm671, %v3008
      %3041 = vst.msk [vmem:[%s3 + $0x88] sm:$0xff] %vm671, %v3009
      %3042 = vst.msk [vmem:[%s3 + $0x90] sm:$0xff] %vm671, %v3010
      %3043 = vst.msk [vmem:[%s3 + $0x98] sm:$0xff] %vm671, %v3011
      %3044 = vst.msk [vmem:[%s3 + $0xa0] sm:$0xff] %vm671, %v3012
      %3045 = vst.msk [vmem:[%s3 + $0xa8] sm:$0xff] %vm671, %v3013
      %3046 = vst.msk [vmem:[%s3 + $0xb0] sm:$0xff] %vm671, %v3014
      %3047 = vst.msk [vmem:[%s3 + $0xb8] sm:$0xff] %vm671, %v3015
      %3048 = vst.msk [vmem:[%s3 + $0xc0] sm:$0xff] %vm671, %v3016
      %3049 = vst.msk [vmem:[%s3 + $0xc8] sm:$0xff] %vm671, %v3017
      %3050 = vst.msk [vmem:[%s3 + $0xd0] sm:$0xff] %vm671, %v3018
      %3051 = vst.msk [vmem:[%s3 + $0xd8] sm:$0xff] %vm671, %v3019
      %3052 = vst.msk [vmem:[%s3 + $0xe0] sm:$0xff] %vm671, %v3020
      %3053 = vst.msk [vmem:[%s3 + $0xe8] sm:$0xff] %vm671, %v3021
      %3054 = vst.msk [vmem:[%s3 + $0xf0] sm:$0xff] %vm671, %v3022
      %3055 = vst.msk [vmem:[%s3 + $0xf8] sm:$0xff] %vm671, %v3023
    $region135: #{tpu_custom_call.1} parent=1 // pred_fallthru
      _
    // Predicated region
    $region136: #{tpu_custom_call.1} parent=1 // pred_check
      _
    $region137: #{tpu_custom_call.1} parent=1 // pred_check_branch
      %3057 = sbr.rel (0) target = $region139
    $region138: #{tpu_custom_call.1} parent=1 // pred_region
      _
    $region139: #{tpu_custom_call.1} parent=1 // pred_fallthru
      _
    // Predicated region
    $region140: #{tpu_custom_call.1} parent=1 // pred_check
      _
    $region141: #{tpu_custom_call.1} parent=1 // pred_check_branch
      %3059 = sbr.rel (0) target = $region143
    $region142: #{tpu_custom_call.1} parent=1 // pred_region
      _
    $region143: #{tpu_custom_call.1} parent=1 // pred_fallthru
      _

</llo_original>
